<compile_context>
chip_gen: v6e
topology: v6e:2x2x1
jax: 0.10.0
libtpu: 0.0.40
codegen_flags: <defaults>
</compile_context>

<pallas_src>
import math

import jax
import jax.numpy as jnp
from jax.experimental import pallas as pl
from jax.experimental.pallas import tpu as pltpu

EPS = 1e-5  # nn.InstanceNorm2d default eps


def _round_up(x, m):
    return (x + m - 1) // m * m


def _zero_border(pad_ref):
    # Zero only the 1-pixel border ring; the interior is overwritten every step.
    Hp, Wp, C = pad_ref.shape
    zr = jnp.zeros((1, Wp, C), pad_ref.dtype)
    pad_ref[0:1, :, :] = zr
    pad_ref[Hp - 1:Hp, :, :] = zr
    zc = jnp.zeros((Hp, 1, C), pad_ref.dtype)
    pad_ref[:, 0:1, :] = zc
    pad_ref[:, Wp - 1:Wp, :] = zc


def _conv3x3(pad_ref, w_ref, H, W):
    """3x3 'same' conv as 9 shifted matmuls accumulated into one f32 accumulator.

    pad_ref: VMEM (H+2, W+2, Ci) zero-border-padded activations, bf16.
    w_ref:   (9, Ci, Co) bf16 weights, tap index t = ky*3 + kx.
    Returns (H*W, Co) float32 (f32 MXU accumulation).
    """
    Ci = pad_ref.shape[-1]
    Co = w_ref.shape[-1]
    acc = jnp.zeros((H * W, Co), jnp.float32)
    for dy in range(3):
        for dx in range(3):
            patch = pad_ref[dy:dy + H, dx:dx + W, :].reshape(H * W, Ci)
            acc = acc + jnp.dot(patch, w_ref[dy * 3 + dx],
                                preferred_element_type=jnp.float32)
    return acc


def _inorm_stats(y):
    """One-sweep InstanceNorm stats over axis 0 of a (H*W, C) f32 tensor.

    Biased variance via E[y^2] - mean^2 (stats kept in f32; clamped at 0 to guard
    against cancellation). Returns (mean, inv_std), each (1, C) f32.
    """
    n = y.shape[0]
    s1 = jnp.sum(y, axis=0, keepdims=True)
    s2 = jnp.sum(y * y, axis=0, keepdims=True)
    mean = s1 * (1.0 / n)
    var = jnp.maximum(s2 * (1.0 / n) - mean * mean, 0.0)
    return mean, jax.lax.rsqrt(var + EPS)


def _down_block_kernel(x_ref, w1_ref, w2_ref, o_ref, pad1, pad2):
    # x_ref : (1, H, s, W, s*Cin) bf16 NHWC input with pooling windows exposed by a
    #         free (contiguous) reshape in the wrapper
    # w1_ref: (9, Cin, Cmid_p) bf16 ; w2_ref: (9, Cmid_p, Cout_p) bf16
    # o_ref : (1, H*W, Cout_p) f32 (lane-dense: Cout_p is a multiple of 128)
    # pad1  : VMEM (H+2, W+2, Cin)    bf16
    # pad2  : VMEM (H+2, W+2, Cmid_p) bf16
    H = pad1.shape[0] - 2
    W = pad1.shape[1] - 2
    Cin = pad1.shape[-1]
    Cmid_p = pad2.shape[-1]

    # ---- MaxPool2d(kernel_size=scale, stride=scale), done in-kernel (bf16) ------
    xr = x_ref[0]                                   # (H, s, W, s*Cin) bf16
    s = xr.shape[1]
    xh = xr[:, 0]
    for dy in range(1, s):
        xh = jnp.maximum(xh, xr[:, dy])             # (H, W, s*Cin): max over window rows
    pooled = xh[:, :, 0:Cin]
    for dx in range(1, s):
        pooled = jnp.maximum(pooled, xh[:, :, dx * Cin:(dx + 1) * Cin])
    # pooled: (H, W, Cin) bf16

    # ---- Conv1 (3x3, padding=1, no bias) + InstanceNorm + ReLU -------------------
    _zero_border(pad1)
    pad1[1:H + 1, 1:W + 1, :] = pooled.astype(pad1.dtype)
    y = _conv3x3(pad1, w1_ref, H, W)                # (H*W, Cmid_p) f32
    m1, inv1 = _inorm_stats(y)
    # Zero-padded channels of Cmid_p yield y == 0 -> normalized/ReLU'd value 0, and
    # the corresponding w2 input rows are zero, so padding never leaks into conv2.
    _zero_border(pad2)
    pad2[1:H + 1, 1:W + 1, :] = (
        jnp.maximum((y - m1) * inv1, 0.0).astype(pad2.dtype).reshape(H, W, Cmid_p))

    # ---- Conv2 (3x3, padding=1, no bias) + InstanceNorm + ReLU -------------------
    z = _conv3x3(pad2, w2_ref, H, W)                # (H*W, Cout_p) f32
    m2, inv2 = _inorm_stats(z)
    o_ref[0] = jnp.maximum((z - m2) * inv2, 0.0).astype(o_ref.dtype)


def _prep_weight(w, ci_pad, co_pad):
    """OIHW (Co, Ci, 3, 3) -> (9, ci_pad, co_pad) bf16, zero padded, tap-major."""
    co, ci = w.shape[0], w.shape[1]
    wk = jnp.transpose(w, (2, 3, 1, 0)).reshape(9, ci, co)      # (9, Ci, Co)
    wk = jnp.pad(wk, ((0, 0), (0, ci_pad - ci), (0, co_pad - co)))
    return wk.astype(jnp.bfloat16)


def unet_down_block(x_nchw, w1, w2, scale=2):
    """Forward of Unet_downBlock.

    x_nchw: (N, Cin, Hin, Win) float32 (PyTorch NCHW)
    w1:     (Cmid, Cin, 3, 3)  (PyTorch OIHW, conv1 weight)
    w2:     (Cout, Cmid, 3, 3) (PyTorch OIHW, conv2 weight)
    returns (N, Cout, Hin//scale, Win//scale) NCHW
    """
    N, Cin, Hin, Win = x_nchw.shape
    assert Hin % scale == 0 and Win % scale == 0
    H, W = Hin // scale, Win // scale
    Cmid, Cout = w1.shape[0], w2.shape[0]
    assert w1.shape == (Cmid, Cin, 3, 3) and w2.shape == (Cout, Cmid, 3, 3)

    # Lane-dense channel padding for all matmul N dims / intermediates / output.
    Cmid_p = _round_up(Cmid, 128)
    Cout_p = _round_up(Cout, 128)

    # Layout plumbing: the only real HBM shuffle is the NCHW->NHWC transpose (the
    # bf16 cast is fused into it); the pooling-window split is a contiguous reshape.
    x_nhwc = jnp.transpose(x_nchw, (0, 2, 3, 1)).astype(jnp.bfloat16)
    xk = x_nhwc.reshape(N, H, scale, W, scale * Cin)

    w1k = _prep_weight(w1, Cin, Cmid_p)       # (9, Cin,    Cmid_p) bf16
    w2k = _prep_weight(w2, Cmid_p, Cout_p)    # (9, Cmid_p, Cout_p) bf16

    out_dtype = x_nchw.dtype

    # VMEM budget: double-buffered in/out blocks + weights + pad scratch + conv
    # accumulators / normalized slabs, with headroom, capped by device capacity.
    def nbytes(shape, dtype):
        return math.prod(shape) * jnp.dtype(dtype).itemsize

    needed = (
        2 * nbytes((1, H, scale, W, scale * Cin), jnp.bfloat16)        # input blocks
        + 2 * (nbytes(w1k.shape, jnp.bfloat16) + nbytes(w2k.shape, jnp.bfloat16))
        + 2 * nbytes((1, H * W, Cout_p), out_dtype)                    # output blocks
        + nbytes((H + 2, W + 2, Cin), jnp.bfloat16)                    # pad1
        + nbytes((H + 2, W + 2, Cmid_p), jnp.bfloat16)                 # pad2
        + 2 * (nbytes((H * W, Cmid_p), jnp.float32)                    # conv1 acc
               + nbytes((H * W, Cout_p), jnp.float32)                  # conv2 acc
               + nbytes((H * W, Cmid_p), jnp.bfloat16)                 # normalized y
               + nbytes((H * W, max(Cin, Cmid_p)), jnp.bfloat16))      # shifted patch
    )
    try:
        vmem_cap = int(pltpu.get_tpu_info().vmem_capacity_bytes)
    except Exception:
        vmem_cap = 64 << 20        # conservative (v7x per-TensorCore capacity)
    vmem_limit = int(min(max(2 * needed + (8 << 20), 32 << 20), vmem_cap - (8 << 20)))

    out_flat = pl.pallas_call(
        _down_block_kernel,
        out_shape=jax.ShapeDtypeStruct((N, H * W, Cout_p), out_dtype),
        grid=(N,),
        in_specs=[
            pl.BlockSpec((1, H, scale, W, scale * Cin),
                         lambda n: (n, 0, 0, 0, 0)),
            pl.BlockSpec((9, Cin, Cmid_p), lambda n: (0, 0, 0)),
            pl.BlockSpec((9, Cmid_p, Cout_p), lambda n: (0, 0, 0)),
        ],
        out_specs=pl.BlockSpec((1, H * W, Cout_p), lambda n: (n, 0, 0)),
        scratch_shapes=[
            pltpu.VMEM((H + 2, W + 2, Cin), jnp.bfloat16),
            pltpu.VMEM((H + 2, W + 2, Cmid_p), jnp.bfloat16),
        ],
        compiler_params=pltpu.CompilerParams(
            dimension_semantics=("parallel",),
            vmem_limit_bytes=vmem_limit),
    )(xk, w1k, w2k)

    # Free contiguous reshape + slice off the lane padding, then back to NCHW.
    out = out_flat.reshape(N, H, W, Cout_p)[..., :Cout]
    return jnp.transpose(out, (0, 3, 1, 2))


def _reference(x, w1, w2, scale=2):
    """Pure-JAX f32 reference matching the PyTorch module semantics (NCHW)."""
    N, C, Hin, Win = x.shape
    xp = x.reshape(N, C, Hin // scale, scale, Win // scale, scale).max(axis=(3, 5))

    def conv(a, w):
        return jax.lax.conv_general_dilated(
            a, w, window_strides=(1, 1), padding="SAME",
            dimension_numbers=("NCHW", "OIHW", "NCHW"),
            precision=jax.lax.Precision.HIGHEST)

    def inr(y):
        m = y.mean(axis=(2, 3), keepdims=True)
        v = ((y - m) ** 2).mean(axis=(2, 3), keepdims=True)
        return jnp.maximum((y - m) / jnp.sqrt(v + EPS), 0.0)

    return inr(conv(inr(conv(xp, w1)), w2))


if __name__ == "__main__":
    key = jax.random.PRNGKey(0)
    kx, k1, k2 = jax.random.split(key, 3)

    N, Cin, Cout, Hin, Win, scale = 2, 4, 8, 16, 16, 2
    # Deterministic synthetic params (Conv2d weights; use_bias=False so no biases).
    x = jax.random.normal(kx, (N, Cin, Hin, Win), jnp.float32)
    w1 = jax.random.normal(k1, (Cout, Cin, 3, 3), jnp.float32) * 0.1
    w2 = jax.random.normal(k2, (Cout, Cout, 3, 3), jnp.float32) * 0.1

    out = jax.block_until_ready(unet_down_block(x, w1, w2, scale=scale))
    ref = jax.block_until_ready(_reference(x, w1, w2, scale=scale))

    assert out.shape == (N, Cout, Hin // scale, Win // scale), out.shape
    # bf16 matmul operands (f32 accumulation) vs. an f32 HIGHEST-precision reference;
    # post-InstanceNorm outputs are O(1), so a 3e-2 absolute bound is a meaningful check.
    err = float(jnp.max(jnp.abs(out - ref)))
    assert err < 3e-2, err
    print("KERNEL_OK")
</pallas_src>

<mosaic_0001>
module attributes {stable_mosaic.version = 11 : i64} {
  func.func @_down_block_kernel(%arg0: i32, %arg1: memref<1x8x2x8x8xbf16, #tpu.memory_space<vmem>>, %arg2: memref<9x4x128xbf16, #tpu.memory_space<vmem>>, %arg3: memref<9x128x128xbf16, #tpu.memory_space<vmem>>, %arg4: memref<1x64x128xf32, #tpu.memory_space<vmem>>, %arg5: memref<10x10x4xbf16, #tpu.memory_space<vmem>>, %arg6: memref<10x10x128xbf16, #tpu.memory_space<vmem>>) attributes {dimension_semantics = [#tpu.dimension_semantics<parallel>], iteration_bounds = array<i64: 2>, scalar_prefetch = 0 : i64, scratch_operands = 2 : i64, tpu.core_type = #tpu.core_type<tc>, window_params = [{transform_indices = @transform_0, window_bounds = array<i64: 1, 8, 2, 8, 8>}, {pipeline_mode = #tpu.pipeline_mode<synchronous>, transform_indices = @transform_1, window_bounds = array<i64: 9, 4, 128>}, {pipeline_mode = #tpu.pipeline_mode<synchronous>, transform_indices = @transform_2, window_bounds = array<i64: 9, 128, 128>}, {transform_indices = @transform_3, window_bounds = array<i64: 1, 64, 128>}]} {
    %c0 = arith.constant 0 : index
    %c0_0 = arith.constant 0 : index
    %c0_1 = arith.constant 0 : index
    %c0_2 = arith.constant 0 : index
    %c0_3 = arith.constant 0 : index
    %0 = vector.load %arg1[%c0, %c0_0, %c0_1, %c0_2, %c0_3] : memref<1x8x2x8x8xbf16, #tpu.memory_space<vmem>>, vector<1x8x2x8x8xbf16>
    %1 = vector.shape_cast %0 : vector<1x8x2x8x8xbf16> to vector<8x2x8x8xbf16>
    %2 = vector.extract_strided_slice %1 {offsets = [0, 0, 0, 0], sizes = [8, 1, 8, 8], strides = [1, 1, 1, 1]} : vector<8x2x8x8xbf16> to vector<8x1x8x8xbf16>
    %3 = vector.shape_cast %2 : vector<8x1x8x8xbf16> to vector<8x8x8xbf16>
    %4 = vector.extract_strided_slice %1 {offsets = [0, 1, 0, 0], sizes = [8, 1, 8, 8], strides = [1, 1, 1, 1]} : vector<8x2x8x8xbf16> to vector<8x1x8x8xbf16>
    %5 = vector.shape_cast %4 : vector<8x1x8x8xbf16> to vector<8x8x8xbf16>
    %6 = arith.maximumf %3, %5 : vector<8x8x8xbf16>
    %7 = vector.extract_strided_slice %6 {offsets = [0, 0, 0], sizes = [8, 8, 4], strides = [1, 1, 1]} : vector<8x8x8xbf16> to vector<8x8x4xbf16>
    %8 = vector.extract_strided_slice %6 {offsets = [0, 0, 4], sizes = [8, 8, 4], strides = [1, 1, 1]} : vector<8x8x8xbf16> to vector<8x8x4xbf16>
    %9 = arith.maximumf %7, %8 : vector<8x8x4xbf16>
    %cst = arith.constant 0.000000e+00 : bf16
    %10 = vector.broadcast %cst : bf16 to vector<1x10x4xbf16>
    %c0_4 = arith.constant 0 : index
    %c0_5 = arith.constant 0 : index
    %c0_6 = arith.constant 0 : index
    %11 = vector.load %arg5[%c0_4, %c0_5, %c0_6] : memref<10x10x4xbf16, #tpu.memory_space<vmem>>, vector<1x10x4xbf16>
    tpu.vector_store %arg5[%c0_4, %c0_5, %c0_6], %10 {strides = array<i32>} : memref<10x10x4xbf16, #tpu.memory_space<vmem>>, vector<1x10x4xbf16>,
    %c9 = arith.constant 9 : index
    %c0_7 = arith.constant 0 : index
    %c0_8 = arith.constant 0 : index
    %12 = vector.load %arg5[%c9, %c0_7, %c0_8] : memref<10x10x4xbf16, #tpu.memory_space<vmem>>, vector<1x10x4xbf16>
    tpu.vector_store %arg5[%c9, %c0_7, %c0_8], %10 {strides = array<i32>} : memref<10x10x4xbf16, #tpu.memory_space<vmem>>, vector<1x10x4xbf16>,
    %cst_9 = arith.constant 0.000000e+00 : bf16
    %13 = vector.broadcast %cst_9 : bf16 to vector<10x1x4xbf16>
    %c0_10 = arith.constant 0 : index
    %c0_11 = arith.constant 0 : index
    %c0_12 = arith.constant 0 : index
    %14 = vector.load %arg5[%c0_10, %c0_11, %c0_12] : memref<10x10x4xbf16, #tpu.memory_space<vmem>>, vector<10x1x4xbf16>
    tpu.vector_store %arg5[%c0_10, %c0_11, %c0_12], %13 {strides = array<i32>} : memref<10x10x4xbf16, #tpu.memory_space<vmem>>, vector<10x1x4xbf16>,
    %c0_13 = arith.constant 0 : index
    %c9_14 = arith.constant 9 : index
    %c0_15 = arith.constant 0 : index
    %15 = vector.load %arg5[%c0_13, %c9_14, %c0_15] : memref<10x10x4xbf16, #tpu.memory_space<vmem>>, vector<10x1x4xbf16>
    tpu.vector_store %arg5[%c0_13, %c9_14, %c0_15], %13 {strides = array<i32>} : memref<10x10x4xbf16, #tpu.memory_space<vmem>>, vector<10x1x4xbf16>,
    %c1 = arith.constant 1 : index
    %c1_16 = arith.constant 1 : index
    %c0_17 = arith.constant 0 : index
    %16 = vector.load %arg5[%c1, %c1_16, %c0_17] : memref<10x10x4xbf16, #tpu.memory_space<vmem>>, vector<8x8x4xbf16>
    tpu.vector_store %arg5[%c1, %c1_16, %c0_17], %9 {strides = array<i32>} : memref<10x10x4xbf16, #tpu.memory_space<vmem>>, vector<8x8x4xbf16>,
    %cst_18 = arith.constant 0.000000e+00 : f32
    %17 = vector.broadcast %cst_18 : f32 to vector<64x128xf32>
    %c0_19 = arith.constant 0 : index
    %c0_20 = arith.constant 0 : index
    %c0_21 = arith.constant 0 : index
    %18 = vector.load %arg5[%c0_19, %c0_20, %c0_21] : memref<10x10x4xbf16, #tpu.memory_space<vmem>>, vector<8x8x4xbf16>
    %19 = vector.shape_cast %18 : vector<8x8x4xbf16> to vector<64x4xbf16>
    %c0_22 = arith.constant 0 : index
    %c0_23 = arith.constant 0 : index
    %c0_24 = arith.constant 0 : index
    %20 = vector.load %arg2[%c0_22, %c0_23, %c0_24] : memref<9x4x128xbf16, #tpu.memory_space<vmem>>, vector<1x4x128xbf16>
    %21 = vector.shape_cast %20 : vector<1x4x128xbf16> to vector<4x128xbf16>
    %cst_25 = arith.constant dense<0.000000e+00> : vector<64x128xf32>
    %22 = tpu.matmul %19, %21, %cst_25 {dimension_numbers = #tpu.dot_dimension_numbers<[1], [0], [0], [1], [0, 0, 1, 1], [], []>} : vector<64x4xbf16>, vector<4x128xbf16>, vector<64x128xf32> -> vector<64x128xf32>
    %23 = arith.addf %17, %22 : vector<64x128xf32>
    %c0_26 = arith.constant 0 : index
    %c1_27 = arith.constant 1 : index
    %c0_28 = arith.constant 0 : index
    %24 = vector.load %arg5[%c0_26, %c1_27, %c0_28] : memref<10x10x4xbf16, #tpu.memory_space<vmem>>, vector<8x8x4xbf16>
    %25 = vector.shape_cast %24 : vector<8x8x4xbf16> to vector<64x4xbf16>
    %c1_29 = arith.constant 1 : index
    %c0_30 = arith.constant 0 : index
    %c0_31 = arith.constant 0 : index
    %26 = vector.load %arg2[%c1_29, %c0_30, %c0_31] : memref<9x4x128xbf16, #tpu.memory_space<vmem>>, vector<1x4x128xbf16>
    %27 = vector.shape_cast %26 : vector<1x4x128xbf16> to vector<4x128xbf16>
    %cst_32 = arith.constant dense<0.000000e+00> : vector<64x128xf32>
    %28 = tpu.matmul %25, %27, %cst_32 {dimension_numbers = #tpu.dot_dimension_numbers<[1], [0], [0], [1], [0, 0, 1, 1], [], []>} : vector<64x4xbf16>, vector<4x128xbf16>, vector<64x128xf32> -> vector<64x128xf32>
    %29 = arith.addf %23, %28 : vector<64x128xf32>
    %c0_33 = arith.constant 0 : index
    %c2 = arith.constant 2 : index
    %c0_34 = arith.constant 0 : index
    %30 = vector.load %arg5[%c0_33, %c2, %c0_34] : memref<10x10x4xbf16, #tpu.memory_space<vmem>>, vector<8x8x4xbf16>
    %31 = vector.shape_cast %30 : vector<8x8x4xbf16> to vector<64x4xbf16>
    %c2_35 = arith.constant 2 : index
    %c0_36 = arith.constant 0 : index
    %c0_37 = arith.constant 0 : index
    %32 = vector.load %arg2[%c2_35, %c0_36, %c0_37] : memref<9x4x128xbf16, #tpu.memory_space<vmem>>, vector<1x4x128xbf16>
    %33 = vector.shape_cast %32 : vector<1x4x128xbf16> to vector<4x128xbf16>
    %cst_38 = arith.constant dense<0.000000e+00> : vector<64x128xf32>
    %34 = tpu.matmul %31, %33, %cst_38 {dimension_numbers = #tpu.dot_dimension_numbers<[1], [0], [0], [1], [0, 0, 1, 1], [], []>} : vector<64x4xbf16>, vector<4x128xbf16>, vector<64x128xf32> -> vector<64x128xf32>
    %35 = arith.addf %29, %34 : vector<64x128xf32>
    %c1_39 = arith.constant 1 : index
    %c0_40 = arith.constant 0 : index
    %c0_41 = arith.constant 0 : index
    %36 = vector.load %arg5[%c1_39, %c0_40, %c0_41] : memref<10x10x4xbf16, #tpu.memory_space<vmem>>, vector<8x8x4xbf16>
    %37 = vector.shape_cast %36 : vector<8x8x4xbf16> to vector<64x4xbf16>
    %c3 = arith.constant 3 : index
    %c0_42 = arith.constant 0 : index
    %c0_43 = arith.constant 0 : index
    %38 = vector.load %arg2[%c3, %c0_42, %c0_43] : memref<9x4x128xbf16, #tpu.memory_space<vmem>>, vector<1x4x128xbf16>
    %39 = vector.shape_cast %38 : vector<1x4x128xbf16> to vector<4x128xbf16>
    %cst_44 = arith.constant dense<0.000000e+00> : vector<64x128xf32>
    %40 = tpu.matmul %37, %39, %cst_44 {dimension_numbers = #tpu.dot_dimension_numbers<[1], [0], [0], [1], [0, 0, 1, 1], [], []>} : vector<64x4xbf16>, vector<4x128xbf16>, vector<64x128xf32> -> vector<64x128xf32>
    %41 = arith.addf %35, %40 : vector<64x128xf32>
    %c1_45 = arith.constant 1 : index
    %c1_46 = arith.constant 1 : index
    %c0_47 = arith.constant 0 : index
    %42 = vector.load %arg5[%c1_45, %c1_46, %c0_47] : memref<10x10x4xbf16, #tpu.memory_space<vmem>>, vector<8x8x4xbf16>
    %43 = vector.shape_cast %42 : vector<8x8x4xbf16> to vector<64x4xbf16>
    %c4 = arith.constant 4 : index
    %c0_48 = arith.constant 0 : index
    %c0_49 = arith.constant 0 : index
    %44 = vector.load %arg2[%c4, %c0_48, %c0_49] : memref<9x4x128xbf16, #tpu.memory_space<vmem>>, vector<1x4x128xbf16>
    %45 = vector.shape_cast %44 : vector<1x4x128xbf16> to vector<4x128xbf16>
    %cst_50 = arith.constant dense<0.000000e+00> : vector<64x128xf32>
    %46 = tpu.matmul %43, %45, %cst_50 {dimension_numbers = #tpu.dot_dimension_numbers<[1], [0], [0], [1], [0, 0, 1, 1], [], []>} : vector<64x4xbf16>, vector<4x128xbf16>, vector<64x128xf32> -> vector<64x128xf32>
    %47 = arith.addf %41, %46 : vector<64x128xf32>
    %c1_51 = arith.constant 1 : index
    %c2_52 = arith.constant 2 : index
    %c0_53 = arith.constant 0 : index
    %48 = vector.load %arg5[%c1_51, %c2_52, %c0_53] : memref<10x10x4xbf16, #tpu.memory_space<vmem>>, vector<8x8x4xbf16>
    %49 = vector.shape_cast %48 : vector<8x8x4xbf16> to vector<64x4xbf16>
    %c5 = arith.constant 5 : index
    %c0_54 = arith.constant 0 : index
    %c0_55 = arith.constant 0 : index
    %50 = vector.load %arg2[%c5, %c0_54, %c0_55] : memref<9x4x128xbf16, #tpu.memory_space<vmem>>, vector<1x4x128xbf16>
    %51 = vector.shape_cast %50 : vector<1x4x128xbf16> to vector<4x128xbf16>
    %cst_56 = arith.constant dense<0.000000e+00> : vector<64x128xf32>
    %52 = tpu.matmul %49, %51, %cst_56 {dimension_numbers = #tpu.dot_dimension_numbers<[1], [0], [0], [1], [0, 0, 1, 1], [], []>} : vector<64x4xbf16>, vector<4x128xbf16>, vector<64x128xf32> -> vector<64x128xf32>
    %53 = arith.addf %47, %52 : vector<64x128xf32>
    %c2_57 = arith.constant 2 : index
    %c0_58 = arith.constant 0 : index
    %c0_59 = arith.constant 0 : index
    %54 = vector.load %arg5[%c2_57, %c0_58, %c0_59] : memref<10x10x4xbf16, #tpu.memory_space<vmem>>, vector<8x8x4xbf16>
    %55 = vector.shape_cast %54 : vector<8x8x4xbf16> to vector<64x4xbf16>
    %c6 = arith.constant 6 : index
    %c0_60 = arith.constant 0 : index
    %c0_61 = arith.constant 0 : index
    %56 = vector.load %arg2[%c6, %c0_60, %c0_61] : memref<9x4x128xbf16, #tpu.memory_space<vmem>>, vector<1x4x128xbf16>
    %57 = vector.shape_cast %56 : vector<1x4x128xbf16> to vector<4x128xbf16>
    %cst_62 = arith.constant dense<0.000000e+00> : vector<64x128xf32>
    %58 = tpu.matmul %55, %57, %cst_62 {dimension_numbers = #tpu.dot_dimension_numbers<[1], [0], [0], [1], [0, 0, 1, 1], [], []>} : vector<64x4xbf16>, vector<4x128xbf16>, vector<64x128xf32> -> vector<64x128xf32>
    %59 = arith.addf %53, %58 : vector<64x128xf32>
    %c2_63 = arith.constant 2 : index
    %c1_64 = arith.constant 1 : index
    %c0_65 = arith.constant 0 : index
    %60 = vector.load %arg5[%c2_63, %c1_64, %c0_65] : memref<10x10x4xbf16, #tpu.memory_space<vmem>>, vector<8x8x4xbf16>
    %61 = vector.shape_cast %60 : vector<8x8x4xbf16> to vector<64x4xbf16>
    %c7 = arith.constant 7 : index
    %c0_66 = arith.constant 0 : index
    %c0_67 = arith.constant 0 : index
    %62 = vector.load %arg2[%c7, %c0_66, %c0_67] : memref<9x4x128xbf16, #tpu.memory_space<vmem>>, vector<1x4x128xbf16>
    %63 = vector.shape_cast %62 : vector<1x4x128xbf16> to vector<4x128xbf16>
    %cst_68 = arith.constant dense<0.000000e+00> : vector<64x128xf32>
    %64 = tpu.matmul %61, %63, %cst_68 {dimension_numbers = #tpu.dot_dimension_numbers<[1], [0], [0], [1], [0, 0, 1, 1], [], []>} : vector<64x4xbf16>, vector<4x128xbf16>, vector<64x128xf32> -> vector<64x128xf32>
    %65 = arith.addf %59, %64 : vector<64x128xf32>
    %c2_69 = arith.constant 2 : index
    %c2_70 = arith.constant 2 : index
    %c0_71 = arith.constant 0 : index
    %66 = vector.load %arg5[%c2_69, %c2_70, %c0_71] : memref<10x10x4xbf16, #tpu.memory_space<vmem>>, vector<8x8x4xbf16>
    %67 = vector.shape_cast %66 : vector<8x8x4xbf16> to vector<64x4xbf16>
    %c8 = arith.constant 8 : index
    %c0_72 = arith.constant 0 : index
    %c0_73 = arith.constant 0 : index
    %68 = vector.load %arg2[%c8, %c0_72, %c0_73] : memref<9x4x128xbf16, #tpu.memory_space<vmem>>, vector<1x4x128xbf16>
    %69 = vector.shape_cast %68 : vector<1x4x128xbf16> to vector<4x128xbf16>
    %cst_74 = arith.constant dense<0.000000e+00> : vector<64x128xf32>
    %70 = tpu.matmul %67, %69, %cst_74 {dimension_numbers = #tpu.dot_dimension_numbers<[1], [0], [0], [1], [0, 0, 1, 1], [], []>} : vector<64x4xbf16>, vector<4x128xbf16>, vector<64x128xf32> -> vector<64x128xf32>
    %71 = arith.addf %65, %70 : vector<64x128xf32>
    %cst_75 = arith.constant dense<0.000000e+00> : vector<128xf32>
    %72 = vector.multi_reduction <add>, %71, %cst_75 [0] : vector<64x128xf32> to vector<128xf32>
    %73 = vector.shape_cast %72 : vector<128xf32> to vector<1x128xf32>
    %74 = arith.mulf %71, %71 : vector<64x128xf32>
    %cst_76 = arith.constant dense<0.000000e+00> : vector<128xf32>
    %75 = vector.multi_reduction <add>, %74, %cst_76 [0] : vector<64x128xf32> to vector<128xf32>
    %76 = vector.shape_cast %75 : vector<128xf32> to vector<1x128xf32>
    %cst_77 = arith.constant 1.562500e-02 : f32
    %77 = vector.broadcast %cst_77 : f32 to vector<1x128xf32>
    %78 = arith.mulf %73, %77 : vector<1x128xf32>
    %cst_78 = arith.constant 1.562500e-02 : f32
    %79 = vector.broadcast %cst_78 : f32 to vector<1x128xf32>
    %80 = arith.mulf %76, %79 : vector<1x128xf32>
    %81 = arith.mulf %78, %78 : vector<1x128xf32>
    %82 = arith.subf %80, %81 : vector<1x128xf32>
    %cst_79 = arith.constant 0.000000e+00 : f32
    %83 = vector.broadcast %cst_79 : f32 to vector<1x128xf32>
    %84 = arith.maximumf %82, %83 : vector<1x128xf32>
    %cst_80 = arith.constant 9.99999974E-6 : f32
    %85 = vector.broadcast %cst_80 : f32 to vector<1x128xf32>
    %86 = arith.addf %84, %85 : vector<1x128xf32>
    %87 = math.rsqrt %86 : vector<1x128xf32>
    %cst_81 = arith.constant 0.000000e+00 : bf16
    %88 = vector.broadcast %cst_81 : bf16 to vector<1x10x128xbf16>
    %c0_82 = arith.constant 0 : index
    %c0_83 = arith.constant 0 : index
    %c0_84 = arith.constant 0 : index
    %89 = vector.load %arg6[%c0_82, %c0_83, %c0_84] : memref<10x10x128xbf16, #tpu.memory_space<vmem>>, vector<1x10x128xbf16>
    tpu.vector_store %arg6[%c0_82, %c0_83, %c0_84], %88 {strides = array<i32>} : memref<10x10x128xbf16, #tpu.memory_space<vmem>>, vector<1x10x128xbf16>,
    %c9_85 = arith.constant 9 : index
    %c0_86 = arith.constant 0 : index
    %c0_87 = arith.constant 0 : index
    %90 = vector.load %arg6[%c9_85, %c0_86, %c0_87] : memref<10x10x128xbf16, #tpu.memory_space<vmem>>, vector<1x10x128xbf16>
    tpu.vector_store %arg6[%c9_85, %c0_86, %c0_87], %88 {strides = array<i32>} : memref<10x10x128xbf16, #tpu.memory_space<vmem>>, vector<1x10x128xbf16>,
    %cst_88 = arith.constant 0.000000e+00 : bf16
    %91 = vector.broadcast %cst_88 : bf16 to vector<10x1x128xbf16>
    %c0_89 = arith.constant 0 : index
    %c0_90 = arith.constant 0 : index
    %c0_91 = arith.constant 0 : index
    %92 = vector.load %arg6[%c0_89, %c0_90, %c0_91] : memref<10x10x128xbf16, #tpu.memory_space<vmem>>, vector<10x1x128xbf16>
    tpu.vector_store %arg6[%c0_89, %c0_90, %c0_91], %91 {strides = array<i32>} : memref<10x10x128xbf16, #tpu.memory_space<vmem>>, vector<10x1x128xbf16>,
    %c0_92 = arith.constant 0 : index
    %c9_93 = arith.constant 9 : index
    %c0_94 = arith.constant 0 : index
    %93 = vector.load %arg6[%c0_92, %c9_93, %c0_94] : memref<10x10x128xbf16, #tpu.memory_space<vmem>>, vector<10x1x128xbf16>
    tpu.vector_store %arg6[%c0_92, %c9_93, %c0_94], %91 {strides = array<i32>} : memref<10x10x128xbf16, #tpu.memory_space<vmem>>, vector<10x1x128xbf16>,
    %94 = vector.broadcast %78 : vector<1x128xf32> to vector<64x128xf32>
    %95 = arith.subf %71, %94 : vector<64x128xf32>
    %96 = vector.broadcast %87 : vector<1x128xf32> to vector<64x128xf32>
    %97 = arith.mulf %95, %96 : vector<64x128xf32>
    %cst_95 = arith.constant 0.000000e+00 : f32
    %98 = vector.broadcast %cst_95 : f32 to vector<64x128xf32>
    %99 = arith.maximumf %97, %98 : vector<64x128xf32>
    %100 = arith.truncf %99 : vector<64x128xf32> to vector<64x128xbf16>
    %101 = vector.shape_cast %100 : vector<64x128xbf16> to vector<8x8x128xbf16>
    %c1_96 = arith.constant 1 : index
    %c1_97 = arith.constant 1 : index
    %c0_98 = arith.constant 0 : index
    %102 = vector.load %arg6[%c1_96, %c1_97, %c0_98] : memref<10x10x128xbf16, #tpu.memory_space<vmem>>, vector<8x8x128xbf16>
    tpu.vector_store %arg6[%c1_96, %c1_97, %c0_98], %101 {strides = array<i32>} : memref<10x10x128xbf16, #tpu.memory_space<vmem>>, vector<8x8x128xbf16>,
    %cst_99 = arith.constant 0.000000e+00 : f32
    %103 = vector.broadcast %cst_99 : f32 to vector<64x128xf32>
    %c0_100 = arith.constant 0 : index
    %c0_101 = arith.constant 0 : index
    %c0_102 = arith.constant 0 : index
    %104 = vector.load %arg6[%c0_100, %c0_101, %c0_102] : memref<10x10x128xbf16, #tpu.memory_space<vmem>>, vector<8x8x128xbf16>
    %105 = vector.shape_cast %104 : vector<8x8x128xbf16> to vector<64x128xbf16>
    %c0_103 = arith.constant 0 : index
    %c0_104 = arith.constant 0 : index
    %c0_105 = arith.constant 0 : index
    %106 = vector.load %arg3[%c0_103, %c0_104, %c0_105] : memref<9x128x128xbf16, #tpu.memory_space<vmem>>, vector<1x128x128xbf16>
    %107 = vector.shape_cast %106 : vector<1x128x128xbf16> to vector<128x128xbf16>
    %cst_106 = arith.constant dense<0.000000e+00> : vector<64x128xf32>
    %108 = tpu.matmul %105, %107, %cst_106 {dimension_numbers = #tpu.dot_dimension_numbers<[1], [0], [0], [1], [0, 0, 1, 1], [], []>} : vector<64x128xbf16>, vector<128x128xbf16>, vector<64x128xf32> -> vector<64x128xf32>
    %109 = arith.addf %103, %108 : vector<64x128xf32>
    %c0_107 = arith.constant 0 : index
    %c1_108 = arith.constant 1 : index
    %c0_109 = arith.constant 0 : index
    %110 = vector.load %arg6[%c0_107, %c1_108, %c0_109] : memref<10x10x128xbf16, #tpu.memory_space<vmem>>, vector<8x8x128xbf16>
    %111 = vector.shape_cast %110 : vector<8x8x128xbf16> to vector<64x128xbf16>
    %c1_110 = arith.constant 1 : index
    %c0_111 = arith.constant 0 : index
    %c0_112 = arith.constant 0 : index
    %112 = vector.load %arg3[%c1_110, %c0_111, %c0_112] : memref<9x128x128xbf16, #tpu.memory_space<vmem>>, vector<1x128x128xbf16>
    %113 = vector.shape_cast %112 : vector<1x128x128xbf16> to vector<128x128xbf16>
    %cst_113 = arith.constant dense<0.000000e+00> : vector<64x128xf32>
    %114 = tpu.matmul %111, %113, %cst_113 {dimension_numbers = #tpu.dot_dimension_numbers<[1], [0], [0], [1], [0, 0, 1, 1], [], []>} : vector<64x128xbf16>, vector<128x128xbf16>, vector<64x128xf32> -> vector<64x128xf32>
    %115 = arith.addf %109, %114 : vector<64x128xf32>
    %c0_114 = arith.constant 0 : index
    %c2_115 = arith.constant 2 : index
    %c0_116 = arith.constant 0 : index
    %116 = vector.load %arg6[%c0_114, %c2_115, %c0_116] : memref<10x10x128xbf16, #tpu.memory_space<vmem>>, vector<8x8x128xbf16>
    %117 = vector.shape_cast %116 : vector<8x8x128xbf16> to vector<64x128xbf16>
    %c2_117 = arith.constant 2 : index
    %c0_118 = arith.constant 0 : index
    %c0_119 = arith.constant 0 : index
    %118 = vector.load %arg3[%c2_117, %c0_118, %c0_119] : memref<9x128x128xbf16, #tpu.memory_space<vmem>>, vector<1x128x128xbf16>
    %119 = vector.shape_cast %118 : vector<1x128x128xbf16> to vector<128x128xbf16>
    %cst_120 = arith.constant dense<0.000000e+00> : vector<64x128xf32>
    %120 = tpu.matmul %117, %119, %cst_120 {dimension_numbers = #tpu.dot_dimension_numbers<[1], [0], [0], [1], [0, 0, 1, 1], [], []>} : vector<64x128xbf16>, vector<128x128xbf16>, vector<64x128xf32> -> vector<64x128xf32>
    %121 = arith.addf %115, %120 : vector<64x128xf32>
    %c1_121 = arith.constant 1 : index
    %c0_122 = arith.constant 0 : index
    %c0_123 = arith.constant 0 : index
    %122 = vector.load %arg6[%c1_121, %c0_122, %c0_123] : memref<10x10x128xbf16, #tpu.memory_space<vmem>>, vector<8x8x128xbf16>
    %123 = vector.shape_cast %122 : vector<8x8x128xbf16> to vector<64x128xbf16>
    %c3_124 = arith.constant 3 : index
    %c0_125 = arith.constant 0 : index
    %c0_126 = arith.constant 0 : index
    %124 = vector.load %arg3[%c3_124, %c0_125, %c0_126] : memref<9x128x128xbf16, #tpu.memory_space<vmem>>, vector<1x128x128xbf16>
    %125 = vector.shape_cast %124 : vector<1x128x128xbf16> to vector<128x128xbf16>
    %cst_127 = arith.constant dense<0.000000e+00> : vector<64x128xf32>
    %126 = tpu.matmul %123, %125, %cst_127 {dimension_numbers = #tpu.dot_dimension_numbers<[1], [0], [0], [1], [0, 0, 1, 1], [], []>} : vector<64x128xbf16>, vector<128x128xbf16>, vector<64x128xf32> -> vector<64x128xf32>
    %127 = arith.addf %121, %126 : vector<64x128xf32>
    %c1_128 = arith.constant 1 : index
    %c1_129 = arith.constant 1 : index
    %c0_130 = arith.constant 0 : index
    %128 = vector.load %arg6[%c1_128, %c1_129, %c0_130] : memref<10x10x128xbf16, #tpu.memory_space<vmem>>, vector<8x8x128xbf16>
    %129 = vector.shape_cast %128 : vector<8x8x128xbf16> to vector<64x128xbf16>
    %c4_131 = arith.constant 4 : index
    %c0_132 = arith.constant 0 : index
    %c0_133 = arith.constant 0 : index
    %130 = vector.load %arg3[%c4_131, %c0_132, %c0_133] : memref<9x128x128xbf16, #tpu.memory_space<vmem>>, vector<1x128x128xbf16>
    %131 = vector.shape_cast %130 : vector<1x128x128xbf16> to vector<128x128xbf16>
    %cst_134 = arith.constant dense<0.000000e+00> : vector<64x128xf32>
    %132 = tpu.matmul %129, %131, %cst_134 {dimension_numbers = #tpu.dot_dimension_numbers<[1], [0], [0], [1], [0, 0, 1, 1], [], []>} : vector<64x128xbf16>, vector<128x128xbf16>, vector<64x128xf32> -> vector<64x128xf32>
    %133 = arith.addf %127, %132 : vector<64x128xf32>
    %c1_135 = arith.constant 1 : index
    %c2_136 = arith.constant 2 : index
    %c0_137 = arith.constant 0 : index
    %134 = vector.load %arg6[%c1_135, %c2_136, %c0_137] : memref<10x10x128xbf16, #tpu.memory_space<vmem>>, vector<8x8x128xbf16>
    %135 = vector.shape_cast %134 : vector<8x8x128xbf16> to vector<64x128xbf16>
    %c5_138 = arith.constant 5 : index
    %c0_139 = arith.constant 0 : index
    %c0_140 = arith.constant 0 : index
    %136 = vector.load %arg3[%c5_138, %c0_139, %c0_140] : memref<9x128x128xbf16, #tpu.memory_space<vmem>>, vector<1x128x128xbf16>
    %137 = vector.shape_cast %136 : vector<1x128x128xbf16> to vector<128x128xbf16>
    %cst_141 = arith.constant dense<0.000000e+00> : vector<64x128xf32>
    %138 = tpu.matmul %135, %137, %cst_141 {dimension_numbers = #tpu.dot_dimension_numbers<[1], [0], [0], [1], [0, 0, 1, 1], [], []>} : vector<64x128xbf16>, vector<128x128xbf16>, vector<64x128xf32> -> vector<64x128xf32>
    %139 = arith.addf %133, %138 : vector<64x128xf32>
    %c2_142 = arith.constant 2 : index
    %c0_143 = arith.constant 0 : index
    %c0_144 = arith.constant 0 : index
    %140 = vector.load %arg6[%c2_142, %c0_143, %c0_144] : memref<10x10x128xbf16, #tpu.memory_space<vmem>>, vector<8x8x128xbf16>
    %141 = vector.shape_cast %140 : vector<8x8x128xbf16> to vector<64x128xbf16>
    %c6_145 = arith.constant 6 : index
    %c0_146 = arith.constant 0 : index
    %c0_147 = arith.constant 0 : index
    %142 = vector.load %arg3[%c6_145, %c0_146, %c0_147] : memref<9x128x128xbf16, #tpu.memory_space<vmem>>, vector<1x128x128xbf16>
    %143 = vector.shape_cast %142 : vector<1x128x128xbf16> to vector<128x128xbf16>
    %cst_148 = arith.constant dense<0.000000e+00> : vector<64x128xf32>
    %144 = tpu.matmul %141, %143, %cst_148 {dimension_numbers = #tpu.dot_dimension_numbers<[1], [0], [0], [1], [0, 0, 1, 1], [], []>} : vector<64x128xbf16>, vector<128x128xbf16>, vector<64x128xf32> -> vector<64x128xf32>
    %145 = arith.addf %139, %144 : vector<64x128xf32>
    %c2_149 = arith.constant 2 : index
    %c1_150 = arith.constant 1 : index
    %c0_151 = arith.constant 0 : index
    %146 = vector.load %arg6[%c2_149, %c1_150, %c0_151] : memref<10x10x128xbf16, #tpu.memory_space<vmem>>, vector<8x8x128xbf16>
    %147 = vector.shape_cast %146 : vector<8x8x128xbf16> to vector<64x128xbf16>
    %c7_152 = arith.constant 7 : index
    %c0_153 = arith.constant 0 : index
    %c0_154 = arith.constant 0 : index
    %148 = vector.load %arg3[%c7_152, %c0_153, %c0_154] : memref<9x128x128xbf16, #tpu.memory_space<vmem>>, vector<1x128x128xbf16>
    %149 = vector.shape_cast %148 : vector<1x128x128xbf16> to vector<128x128xbf16>
    %cst_155 = arith.constant dense<0.000000e+00> : vector<64x128xf32>
    %150 = tpu.matmul %147, %149, %cst_155 {dimension_numbers = #tpu.dot_dimension_numbers<[1], [0], [0], [1], [0, 0, 1, 1], [], []>} : vector<64x128xbf16>, vector<128x128xbf16>, vector<64x128xf32> -> vector<64x128xf32>
    %151 = arith.addf %145, %150 : vector<64x128xf32>
    %c2_156 = arith.constant 2 : index
    %c2_157 = arith.constant 2 : index
    %c0_158 = arith.constant 0 : index
    %152 = vector.load %arg6[%c2_156, %c2_157, %c0_158] : memref<10x10x128xbf16, #tpu.memory_space<vmem>>, vector<8x8x128xbf16>
    %153 = vector.shape_cast %152 : vector<8x8x128xbf16> to vector<64x128xbf16>
    %c8_159 = arith.constant 8 : index
    %c0_160 = arith.constant 0 : index
    %c0_161 = arith.constant 0 : index
    %154 = vector.load %arg3[%c8_159, %c0_160, %c0_161] : memref<9x128x128xbf16, #tpu.memory_space<vmem>>, vector<1x128x128xbf16>
    %155 = vector.shape_cast %154 : vector<1x128x128xbf16> to vector<128x128xbf16>
    %cst_162 = arith.constant dense<0.000000e+00> : vector<64x128xf32>
    %156 = tpu.matmul %153, %155, %cst_162 {dimension_numbers = #tpu.dot_dimension_numbers<[1], [0], [0], [1], [0, 0, 1, 1], [], []>} : vector<64x128xbf16>, vector<128x128xbf16>, vector<64x128xf32> -> vector<64x128xf32>
    %157 = arith.addf %151, %156 : vector<64x128xf32>
    %cst_163 = arith.constant dense<0.000000e+00> : vector<128xf32>
    %158 = vector.multi_reduction <add>, %157, %cst_163 [0] : vector<64x128xf32> to vector<128xf32>
    %159 = vector.shape_cast %158 : vector<128xf32> to vector<1x128xf32>
    %160 = arith.mulf %157, %157 : vector<64x128xf32>
    %cst_164 = arith.constant dense<0.000000e+00> : vector<128xf32>
    %161 = vector.multi_reduction <add>, %160, %cst_164 [0] : vector<64x128xf32> to vector<128xf32>
    %162 = vector.shape_cast %161 : vector<128xf32> to vector<1x128xf32>
    %cst_165 = arith.constant 1.562500e-02 : f32
    %163 = vector.broadcast %cst_165 : f32 to vector<1x128xf32>
    %164 = arith.mulf %159, %163 : vector<1x128xf32>
    %cst_166 = arith.constant 1.562500e-02 : f32
    %165 = vector.broadcast %cst_166 : f32 to vector<1x128xf32>
    %166 = arith.mulf %162, %165 : vector<1x128xf32>
    %167 = arith.mulf %164, %164 : vector<1x128xf32>
    %168 = arith.subf %166, %167 : vector<1x128xf32>
    %cst_167 = arith.constant 0.000000e+00 : f32
    %169 = vector.broadcast %cst_167 : f32 to vector<1x128xf32>
    %170 = arith.maximumf %168, %169 : vector<1x128xf32>
    %cst_168 = arith.constant 9.99999974E-6 : f32
    %171 = vector.broadcast %cst_168 : f32 to vector<1x128xf32>
    %172 = arith.addf %170, %171 : vector<1x128xf32>
    %173 = math.rsqrt %172 : vector<1x128xf32>
    %174 = vector.broadcast %164 : vector<1x128xf32> to vector<64x128xf32>
    %175 = arith.subf %157, %174 : vector<64x128xf32>
    %176 = vector.broadcast %173 : vector<1x128xf32> to vector<64x128xf32>
    %177 = arith.mulf %175, %176 : vector<64x128xf32>
    %cst_169 = arith.constant 0.000000e+00 : f32
    %178 = vector.broadcast %cst_169 : f32 to vector<64x128xf32>
    %179 = arith.maximumf %177, %178 : vector<64x128xf32>
    %c0_170 = arith.constant 0 : index
    %c0_171 = arith.constant 0 : index
    %c0_172 = arith.constant 0 : index
    %180 = vector.load %arg4[%c0_170, %c0_171, %c0_172] : memref<1x64x128xf32, #tpu.memory_space<vmem>>, vector<1x64x128xf32>
    %181 = vector.shape_cast %180 : vector<1x64x128xf32> to vector<64x128xf32>
    %182 = vector.shape_cast %179 : vector<64x128xf32> to vector<1x64x128xf32>
    tpu.vector_store %arg4[%c0_170, %c0_171, %c0_172], %182 {strides = array<i32>} : memref<1x64x128xf32, #tpu.memory_space<vmem>>, vector<1x64x128xf32>,
    return
  }
  func.func @transform_0(%arg0: i32) -> (i32, i32, i32, i32, i32) {
    %c0_i32 = arith.constant 0 : i32
    %c0_i32_0 = arith.constant 0 : i32
    %c0_i32_1 = arith.constant 0 : i32
    %c0_i32_2 = arith.constant 0 : i32
    %c0_i32_3 = arith.constant 0 : i32
    return %arg0, %c0_i32, %c0_i32_0, %c0_i32_1, %c0_i32_2 : i32, i32, i32, i32, i32
  }
  func.func @transform_1(%arg0: i32) -> (i32, i32, i32) {
    %c0_i32 = arith.constant 0 : i32
    %c0_i32_0 = arith.constant 0 : i32
    %c0_i32_1 = arith.constant 0 : i32
    %c0_i32_2 = arith.constant 0 : i32
    return %c0_i32, %c0_i32_0, %c0_i32_1 : i32, i32, i32
  }
  func.func @transform_2(%arg0: i32) -> (i32, i32, i32) {
    %c0_i32 = arith.constant 0 : i32
    %c0_i32_0 = arith.constant 0 : i32
    %c0_i32_1 = arith.constant 0 : i32
    %c0_i32_2 = arith.constant 0 : i32
    return %c0_i32, %c0_i32_0, %c0_i32_1 : i32, i32, i32
  }
  func.func @transform_3(%arg0: i32) -> (i32, i32, i32) {
    %c0_i32 = arith.constant 0 : i32
    %c0_i32_0 = arith.constant 0 : i32
    %c0_i32_1 = arith.constant 0 : i32
    return %arg0, %c0_i32, %c0_i32_0 : i32, i32, i32
  }
}

</mosaic_0001>

<llo_original>
// kernel: tpu_custom_call.1
$region0: #{tpu_custom_call.1}
  #allocation0 [shape = 'u32[]', space=smem, size = 0x4, offset = 0x4, fixed_abs, tag = 'smem constant byte address 0x4 - core index']
  #allocation1 [shape = 'u32[144,128]{1,0:T(1,128)}', space=vmem, size = 0x12000, scoped, tag = 'internal scratch']
  #allocation2 [shape = 'bf16[10,10,4]{2,1,0:T(8,128)(2,1)}', space=vmem, size = 0xa000, scoped, tag = 'scratch operand']
  #allocation3 [shape = 'bf16[10,10,128]{2,1,0:T(8,128)(2,1)}', space=vmem, size = 0xa000, scoped, tag = 'scratch operand']
  %s0 = inlined_call_operand.hbm [shape: bf16[2,8,2,8,8], index: 0, kind: input, shape index: {}]
  %s1 = inlined_call_operand.hbm [shape: bf16[9,4,128], index: 1, kind: input, shape index: {}]
  %s2 = inlined_call_operand.hbm [shape: bf16[9,128,128], index: 2, kind: input, shape index: {}]
  %s3 = inlined_call_operand.hbm [shape: f32[2,64,128], index: 3, kind: output, shape index: {}]
  %s4 = sld [smem:[#allocation0]]
  $region57: #{tpu_custom_call.1} parent=0
    _
  %s6 = ssub.s32 1, %s4
  %s7 = scalar_select 0, %s6, %s4
  $region1: #{tpu_custom_call.1} parent=0
    #allocation4 [shape = 'u8[65536]{0}', space=vmem, size = 0x10000, scoped, tag = 'input window, operand 0']
    #allocation5 [shape = 's32[2]{0}', space=sflag, size = 0x8, scoped, tag = 'scoped memory for tpu_custom_call.1']
    #allocation6 [shape = 's32[2]{0}', space=sflag, size = 0x8, scoped, tag = 'scoped memory for tpu_custom_call.1']
    #allocation7 [shape = 'u8[9216]{0}', space=vmem, size = 0x2400, scoped, tag = 'input window, operand 1, single buffered']
    #allocation8 [shape = 's32[1]{0}', space=sflag, size = 0x4, scoped, tag = 'scoped memory for tpu_custom_call.1']
    #allocation9 [shape = 'u8[294912]{0}', space=vmem, size = 0x48000, scoped, tag = 'input window, operand 2, single buffered']
    #allocation10 [shape = 'u8[65536]{0}', space=vmem, size = 0x10000, scoped, tag = 'output window, operand 0']
    %8 = vsyncpa [#allocation5], 0
    %s9 = scalar_lea.sflag [#allocation5], 1
    %10 = vsyncpa %s9, 0
    %11 = vsyncpa [#allocation8], 0
    %12 = vsyncpa [#allocation6], 0
    %s13 = scalar_lea.sflag [#allocation6], 1
    %14 = vsyncpa %s13, 0
    loop: start=0, step=1, limit=4
    $region2: #{tpu_custom_call.1} parent=1 // loop_pre_header
      _
    $region3: #{tpu_custom_call.1} parent=1 // loop_header
      %s16 = sphi 0, %s20
      %p17 = scmp.ge.s32.totalorder %s16, 4
      %s26 = sphi 0, %s28
      %s29 = sphi 0, %s26
      %s30 = sphi 0, %s29
      %s46 = sphi 0, %s30
      %s50 = sphi 0, %s50
      %s52 = sphi 0, %s50
      %s53 = sphi 0, %s52
      %s67 = sphi 0, %s53
      %s71 = sphi 0, %s71
      %s73 = sphi 0, %s71
      %s74 = sphi 0, %s73
      %s88 = sphi 0, %s74
      %s94 = sphi 0, %s96
      %s97 = sphi 0, %s94
      %s98 = sphi 0, %s97
      %s114 = sphi 0, %s98
    $region4: #{tpu_custom_call.1} parent=1 // loop_header_branch
      %19 = sbr.rel (%p17) target = $region8
    $region5: #{tpu_custom_call.1} parent=1 // loop_body
      %s21 = ssub.s32 %s16, 1
      %s22 = ssub.s32 %s16, 2
      %s23 = sadd.s32 %s16, 1
      %s24 = ssub.s32 %s16, %s23
      %p25 = scmp.eq.s32.totalorder %s24, 0
      %s27 = sadd.s32 %s26, 1
      %s28 = scalar_select %p25, %s26, %s27
      %p31 = pneg %p25
      %p32 = scmp.eq.s32.totalorder %s16, 1
      %p33 = por %p31, %p32
      %p34 = scmp.ne.s32.totalorder %s26, %s29
      %p35 = scmp.eq.s32.totalorder %s16, 0
      %p36 = por %p34, %p35
      %p37 = scmp.ne.s32.totalorder %s26, %s29
      %p38 = scmp.eq.s32.totalorder %s21, 1
      %p39 = por %p37, %p38
      %p40 = scmp.ne.s32.totalorder %s29, %s30
      %p41 = scmp.eq.s32.totalorder %s21, 0
      %p42 = por %p40, %p41
      %p43 = scmp.ne.s32.totalorder %s29, %s30
      %p44 = scmp.eq.s32.totalorder %s22, 1
      %p45 = por %p43, %p44
      %p47 = scmp.ne.s32.totalorder %s30, %s46
      %p48 = scmp.eq.s32.totalorder %s22, 0
      %p49 = por %p47, %p48
      %s51 = sadd.s32 %s50, 1
      %p54 = scmp.eq.s32.totalorder %s16, 1
      %p55 = scmp.ne.s32.totalorder %s50, %s52
      %p56 = scmp.eq.s32.totalorder %s16, 0
      %p57 = por %p55, %p56
      %p58 = scmp.ne.s32.totalorder %s50, %s52
      %p59 = scmp.eq.s32.totalorder %s21, 1
      %p60 = por %p58, %p59
      %p61 = scmp.ne.s32.totalorder %s52, %s53
      %p62 = scmp.eq.s32.totalorder %s21, 0
      %p63 = por %p61, %p62
      %p64 = scmp.ne.s32.totalorder %s52, %s53
      %p65 = scmp.eq.s32.totalorder %s22, 1
      %p66 = por %p64, %p65
      %p68 = scmp.ne.s32.totalorder %s53, %s67
      %p69 = scmp.eq.s32.totalorder %s22, 0
      %p70 = por %p68, %p69
      %s72 = sadd.s32 %s71, 1
      %p75 = scmp.eq.s32.totalorder %s16, 1
      %p76 = scmp.ne.s32.totalorder %s71, %s73
      %p77 = scmp.eq.s32.totalorder %s16, 0
      %p78 = por %p76, %p77
      %p79 = scmp.ne.s32.totalorder %s71, %s73
      %p80 = scmp.eq.s32.totalorder %s21, 1
      %p81 = por %p79, %p80
      %p82 = scmp.ne.s32.totalorder %s73, %s74
      %p83 = scmp.eq.s32.totalorder %s21, 0
      %p84 = por %p82, %p83
      %p85 = scmp.ne.s32.totalorder %s73, %s74
      %p86 = scmp.eq.s32.totalorder %s22, 1
      %p87 = por %p85, %p86
      %p89 = scmp.ne.s32.totalorder %s74, %s88
      %p90 = scmp.eq.s32.totalorder %s22, 0
      %p91 = por %p89, %p90
      %s92 = ssub.s32 %s16, %s23
      %p93 = scmp.eq.s32.totalorder %s92, 0
      %s95 = sadd.s32 %s94, 1
      %s96 = scalar_select %p93, %s94, %s95
      %p99 = pneg %p93
      %p100 = scmp.eq.s32.totalorder %s16, 1
      %p101 = por %p99, %p100
      %p102 = scmp.ne.s32.totalorder %s94, %s97
      %p103 = scmp.eq.s32.totalorder %s16, 0
      %p104 = por %p102, %p103
      %p105 = scmp.ne.s32.totalorder %s94, %s97
      %p106 = scmp.eq.s32.totalorder %s21, 1
      %p107 = por %p105, %p106
      %p108 = scmp.ne.s32.totalorder %s97, %s98
      %p109 = scmp.eq.s32.totalorder %s21, 0
      %p110 = por %p108, %p109
      %p111 = scmp.ne.s32.totalorder %s97, %s98
      %p112 = scmp.eq.s32.totalorder %s22, 1
      %p113 = por %p111, %p112
      %p115 = scmp.ne.s32.totalorder %s98, %s114
      %p116 = scmp.eq.s32.totalorder %s22, 0
      %p117 = por %p115, %p116
      %p118 = scmp.le.s32.totalorder 1, %s16
      %p119 = scmp.lt.s32.totalorder %s16, 3
      %p120 = pnand %p118, %p119
      %p121 = pneg %p120
      // Predicated region
      $region9: #{tpu_custom_call.1} parent=5 // pred_check
        _
      $region10: #{tpu_custom_call.1} parent=5 // pred_check_branch
        %123 = sbr.rel (%p120) target = $region12
      $region11: #{tpu_custom_call.1} parent=5 // pred_region
        %s124 = ssub.s32 %s16, 1
        // Predicated region
        $region13: #{tpu_custom_call.1} parent=11 // pred_check
          %p125 = pneg %p63
        $region14: #{tpu_custom_call.1} parent=11 // pred_check_branch
          %127 = sbr.rel (%p125) target = $region16
        $region15: #{tpu_custom_call.1} parent=11 // pred_region
          %s129 = ssub.s32 288, 288
          %130 = vsyncadd [#allocation8], %s129
          %s131 = sshll.u32 [#allocation7], 4
          %s132 = int_to_ptr.vmem [resolvable:$true] %s131
          %137 = dma.hbm_to_vmem [thread:$0]  %s1, 288, %s132, [#allocation8], 32, 32, 2
        $region16: #{tpu_custom_call.1} parent=11 // pred_fallthru
          _
        // Predicated region
        $region17: #{tpu_custom_call.1} parent=11 // pred_check
          %p138 = pneg %p84
        $region18: #{tpu_custom_call.1} parent=11 // pred_check_branch
          %140 = sbr.rel (%p138) target = $region20
        $region19: #{tpu_custom_call.1} parent=11 // pred_region
          %s142 = ssub.s32 9216, 9216
          %143 = vsyncadd [#allocation8], %s142
          %s144 = sshll.u32 [#allocation9], 4
          %s145 = int_to_ptr.vmem [resolvable:$true] %s144
          %150 = dma.hbm_to_vmem [thread:$0]  %s2, 9216, %s145, [#allocation8], 64, 64, 4
        $region20: #{tpu_custom_call.1} parent=11 // pred_fallthru
          _
      $region12: #{tpu_custom_call.1} parent=5 // pred_fallthru
        _
      %p151 = scmp.lt.s32.totalorder %s16, 2
      // Predicated region
      $region21: #{tpu_custom_call.1} parent=5 // pred_check
        %p152 = pneg %p151
      $region22: #{tpu_custom_call.1} parent=5 // pred_check_branch
        %154 = sbr.rel (%p152) target = $region24
      $region23: #{tpu_custom_call.1} parent=5 // pred_region
        // Predicated region
        $region25: #{tpu_custom_call.1} parent=23 // pred_check
          %p155 = pneg %p36
        $region26: #{tpu_custom_call.1} parent=23 // pred_check_branch
          %157 = sbr.rel (%p155) target = $region28
        $region27: #{tpu_custom_call.1} parent=23 // pred_region
          %s158 = sand.u32 %s26, 1
          %s159 = scalar_lea.sflag [#allocation5], %s158
          %s160 = sand.u32 %s26, 1
          %s161 = smul.addr %s160, 64
          %s162 = scalar_lea.vmem [#allocation4], %s161
          %s164 = ssub.s32 1024, 1024
          %165 = vsyncadd %s159, %s164
          %s166 = smul.addr %s16, 16
          %s167 = smul.addr %s166, 64
          %s168 = scalar_lea.hbm %s0, %s167
          %s169 = sshll.u32 %s162, 4
          %s170 = int_to_ptr.vmem [resolvable:$true] %s169
          %175 = dma.hbm_to_vmem [thread:$0]  %s168, 1024, %s170, %s159, 64, 64, 4
        $region28: #{tpu_custom_call.1} parent=23 // pred_fallthru
          _
      $region24: #{tpu_custom_call.1} parent=5 // pred_fallthru
        _
      %p176 = scmp.le.s32.totalorder 1, %s16
      %p177 = scmp.lt.s32.totalorder %s16, 3
      %p178 = pnand %p176, %p177
      %p179 = pneg %p178
      // Predicated region
      $region29: #{tpu_custom_call.1} parent=5 // pred_check
        _
      $region30: #{tpu_custom_call.1} parent=5 // pred_check_branch
        %181 = sbr.rel (%p178) target = $region32
      $region31: #{tpu_custom_call.1} parent=5 // pred_region
        %s182 = ssub.s32 %s16, 1
        %s183 = sand.u32 %s29, 1
        %s184 = scalar_lea.sflag [#allocation5], %s183
        %s185 = sand.u32 %s29, 1
        %s186 = smul.addr %s185, 64
        %s187 = scalar_lea.vmem [#allocation4], %s186
        // Predicated region
        $region33: #{tpu_custom_call.1} parent=31 // pred_check
          %p188 = pneg %p42
        $region34: #{tpu_custom_call.1} parent=31 // pred_check_branch
          %190 = sbr.rel (%p188) target = $region36
        $region35: #{tpu_custom_call.1} parent=31 // pred_region
          %191 = dma.done %s184, 1024
        $region36: #{tpu_custom_call.1} parent=31 // pred_fallthru
          _
        // Predicated region
        $region37: #{tpu_custom_call.1} parent=31 // pred_check
          %p192 = pneg %p63
        $region38: #{tpu_custom_call.1} parent=31 // pred_check_branch
          %194 = sbr.rel (%p192) target = $region40
        $region39: #{tpu_custom_call.1} parent=31 // pred_region
          %195 = dma.done [#allocation8], 288
        $region40: #{tpu_custom_call.1} parent=31 // pred_fallthru
          _
        // Predicated region
        $region41: #{tpu_custom_call.1} parent=31 // pred_check
          %p196 = pneg %p84
        $region42: #{tpu_custom_call.1} parent=31 // pred_check_branch
          %198 = sbr.rel (%p196) target = $region44
        $region43: #{tpu_custom_call.1} parent=31 // pred_region
          %199 = dma.done [#allocation8], 9216
        $region44: #{tpu_custom_call.1} parent=31 // pred_fallthru
          _
        %s200 = sand.u32 %s29, 1
        %s201 = scalar_lea.sflag [#allocation5], %s200
        %s202 = sand.u32 %s29, 1
        %s203 = smul.addr %s202, 64
        %s204 = scalar_lea.vmem [#allocation4], %s203
        %p205 = pneg %p42
        %p206 = pneg %p39
        %p207 = pneg %p63
        %p208 = pneg %p60
        %p209 = pneg %p84
        %p210 = pneg %p81
        %p211 = pneg %p110
        %p212 = pneg %p107
        %s213 = sand.u32 %s97, 1
        %s214 = scalar_lea.sflag [#allocation6], %s213
        %s215 = sand.u32 %s97, 1
        %s216 = smul.addr %s215, 64
        %s217 = scalar_lea.vmem [#allocation10], %s216
        %v219 = vld [vmem:[%s187] sm:$0xf]
        %v220 = vld [vmem:[%s187 + $0x4] sm:$0xf]
        %v221 = vld [vmem:[%s187 + $0x8] sm:$0xf]
        %v222 = vld [vmem:[%s187 + $0xc] sm:$0xf]
        %v223 = vld [vmem:[%s187 + $0x10] sm:$0xf]
        %v224 = vld [vmem:[%s187 + $0x14] sm:$0xf]
        %v225 = vld [vmem:[%s187 + $0x18] sm:$0xf]
        %v226 = vld [vmem:[%s187 + $0x1c] sm:$0xf]
        %v227 = vld [vmem:[%s187 + $0x20] sm:$0xf]
        %v228 = vld [vmem:[%s187 + $0x24] sm:$0xf]
        %v229 = vld [vmem:[%s187 + $0x28] sm:$0xf]
        %v230 = vld [vmem:[%s187 + $0x2c] sm:$0xf]
        %v231 = vld [vmem:[%s187 + $0x30] sm:$0xf]
        %v232 = vld [vmem:[%s187 + $0x34] sm:$0xf]
        %v233 = vld [vmem:[%s187 + $0x38] sm:$0xf]
        %v234 = vld [vmem:[%s187 + $0x3c] sm:$0xf]
        %v235 = vmax.bf16 %v219, %v220
        %v236 = vmax.bf16 %v221, %v222
        %v237 = vmax.bf16 %v223, %v224
        %v238 = vmax.bf16 %v225, %v226
        %v239 = vmax.bf16 %v227, %v228
        %v240 = vmax.bf16 %v229, %v230
        %v241 = vmax.bf16 %v231, %v232
        %v242 = vmax.bf16 %v233, %v234
        %251 = vrot.lane.b32.xlu0 %v235, 124
        %v252 = vpop.permute.xlu0 %251
        %253 = vrot.lane.b32.xlu0 %v236, 124
        %v254 = vpop.permute.xlu0 %253
        %255 = vrot.lane.b32.xlu0 %v237, 124
        %v256 = vpop.permute.xlu0 %255
        %257 = vrot.lane.b32.xlu0 %v238, 124
        %v258 = vpop.permute.xlu0 %257
        %259 = vrot.lane.b32.xlu0 %v239, 124
        %v260 = vpop.permute.xlu0 %259
        %261 = vrot.lane.b32.xlu0 %v240, 124
        %v262 = vpop.permute.xlu0 %261
        %263 = vrot.lane.b32.xlu0 %v241, 124
        %v264 = vpop.permute.xlu0 %263
        %265 = vrot.lane.b32.xlu0 %v242, 124
        %v266 = vpop.permute.xlu0 %265
        %v275 = vmax.bf16 %v235, %v252
        %v276 = vmax.bf16 %v236, %v254
        %v277 = vmax.bf16 %v237, %v256
        %v278 = vmax.bf16 %v238, %v258
        %v279 = vmax.bf16 %v239, %v260
        %v280 = vmax.bf16 %v240, %v262
        %v281 = vmax.bf16 %v241, %v264
        %v282 = vmax.bf16 %v242, %v266
        %vm283 = vcmask 27648
        %284 = vst.msk [vmem:[#allocation2] sm:$0xf] %vm283, 0
        %vm285 = vcmask 24576
        %286 = vst.msk [vmem:[#allocation2 + $0x4] sm:$0x1] %vm285, 0
        %s287 = scalar_lea.vmem [#allocation2], 72
        %288 = vst.msk [vmem:[%s287] sm:$0xf] %vm283, 0
        %289 = vst.msk [vmem:[%s287 + $0x4] sm:$0x1] %vm285, 0
        %vm290 = vcmask 24576
        %vm291 = vsmask.f32 256
        %vm292 = vmand %vm290, %vm291
        %v293 = vld [vmem:[#allocation2] sm:$0x1]
        %v294 = vsel %vm292, 0, %v293
        %295 = vst [vmem:[#allocation2] sm:$0x1] %v294
        %v296 = vld [vmem:[#allocation2 + $0x8] sm:$0x1]
        %v297 = vsel %vm292, 0, %v296
        %298 = vst [vmem:[#allocation2 + $0x8] sm:$0x1] %v297
        %v299 = vld [vmem:[#allocation2 + $0x10] sm:$0x1]
        %v300 = vsel %vm292, 0, %v299
        %301 = vst [vmem:[#allocation2 + $0x10] sm:$0x1] %v300
        %v302 = vld [vmem:[#allocation2 + $0x18] sm:$0x1]
        %v303 = vsel %vm292, 0, %v302
        %304 = vst [vmem:[#allocation2 + $0x18] sm:$0x1] %v303
        %v305 = vld [vmem:[#allocation2 + $0x20] sm:$0x1]
        %v306 = vsel %vm292, 0, %v305
        %307 = vst [vmem:[#allocation2 + $0x20] sm:$0x1] %v306
        %v308 = vld [vmem:[#allocation2 + $0x28] sm:$0x1]
        %v309 = vsel %vm292, 0, %v308
        %310 = vst [vmem:[#allocation2 + $0x28] sm:$0x1] %v309
        %v311 = vld [vmem:[#allocation2 + $0x30] sm:$0x1]
        %v312 = vsel %vm292, 0, %v311
        %313 = vst [vmem:[#allocation2 + $0x30] sm:$0x1] %v312
        %v314 = vld [vmem:[#allocation2 + $0x38] sm:$0x1]
        %v315 = vsel %vm292, 0, %v314
        %316 = vst [vmem:[#allocation2 + $0x38] sm:$0x1] %v315
        %v317 = vld [vmem:[#allocation2 + $0x40] sm:$0x1]
        %v318 = vsel %vm292, 0, %v317
        %319 = vst [vmem:[#allocation2 + $0x40] sm:$0x1] %v318
        %v320 = vld [vmem:[#allocation2 + $0x48] sm:$0x1]
        %v321 = vsel %vm292, 0, %v320
        %322 = vst [vmem:[#allocation2 + $0x48] sm:$0x1] %v321
        %vm323 = vsmask.f32 7938
        %vm324 = vmand %vm290, %vm323
        %v325 = vld [vmem:[#allocation2 + $0x4] sm:$0x1]
        %v326 = vsel %vm324, 0, %v325
        %327 = vst [vmem:[#allocation2 + $0x4] sm:$0x1] %v326
        %v328 = vld [vmem:[#allocation2 + $0xc] sm:$0x1]
        %v329 = vsel %vm324, 0, %v328
        %330 = vst [vmem:[#allocation2 + $0xc] sm:$0x1] %v329
        %v331 = vld [vmem:[#allocation2 + $0x14] sm:$0x1]
        %v332 = vsel %vm324, 0, %v331
        %333 = vst [vmem:[#allocation2 + $0x14] sm:$0x1] %v332
        %v334 = vld [vmem:[#allocation2 + $0x1c] sm:$0x1]
        %v335 = vsel %vm324, 0, %v334
        %336 = vst [vmem:[#allocation2 + $0x1c] sm:$0x1] %v335
        %v337 = vld [vmem:[#allocation2 + $0x24] sm:$0x1]
        %v338 = vsel %vm324, 0, %v337
        %339 = vst [vmem:[#allocation2 + $0x24] sm:$0x1] %v338
        %v340 = vld [vmem:[#allocation2 + $0x2c] sm:$0x1]
        %v341 = vsel %vm324, 0, %v340
        %342 = vst [vmem:[#allocation2 + $0x2c] sm:$0x1] %v341
        %v343 = vld [vmem:[#allocation2 + $0x34] sm:$0x1]
        %v344 = vsel %vm324, 0, %v343
        %345 = vst [vmem:[#allocation2 + $0x34] sm:$0x1] %v344
        %v346 = vld [vmem:[#allocation2 + $0x3c] sm:$0x1]
        %v347 = vsel %vm324, 0, %v346
        %348 = vst [vmem:[#allocation2 + $0x3c] sm:$0x1] %v347
        %v349 = vld [vmem:[#allocation2 + $0x44] sm:$0x1]
        %v350 = vsel %vm324, 0, %v349
        %351 = vst [vmem:[#allocation2 + $0x44] sm:$0x1] %v350
        %v352 = vld [vmem:[#allocation2 + $0x4c] sm:$0x1]
        %v353 = vsel %vm324, 0, %v352
        %354 = vst [vmem:[#allocation2 + $0x4c] sm:$0x1] %v353
        %v356 = vshrl.u32 %v275, 16
        %v358 = vrot.slane %v356, 7
        %v359 = vshll.u32 %v275, 16
        %v361 = vor.u32 %v358, %v359
        %v362 = vrot.slane %v358, 4
        %v364 = vshrl.u32 %v276, 16
        %v366 = vrot.slane %v364, 7
        %v367 = vshll.u32 %v276, 16
        %v369 = vor.u32 %v366, %v367
        %v370 = vrot.slane %v366, 4
        %v372 = vshrl.u32 %v277, 16
        %v374 = vrot.slane %v372, 7
        %v375 = vshll.u32 %v277, 16
        %v377 = vor.u32 %v374, %v375
        %v378 = vrot.slane %v374, 4
        %v380 = vshrl.u32 %v278, 16
        %v382 = vrot.slane %v380, 7
        %v383 = vshll.u32 %v278, 16
        %v385 = vor.u32 %v382, %v383
        %v386 = vrot.slane %v382, 4
        %v388 = vshrl.u32 %v279, 16
        %v390 = vrot.slane %v388, 7
        %v391 = vshll.u32 %v279, 16
        %v393 = vor.u32 %v390, %v391
        %v394 = vrot.slane %v390, 4
        %v396 = vshrl.u32 %v280, 16
        %v398 = vrot.slane %v396, 7
        %v399 = vshll.u32 %v280, 16
        %v401 = vor.u32 %v398, %v399
        %v402 = vrot.slane %v398, 4
        %v404 = vshrl.u32 %v281, 16
        %v406 = vrot.slane %v404, 7
        %v407 = vshll.u32 %v281, 16
        %v409 = vor.u32 %v406, %v407
        %v410 = vrot.slane %v406, 4
        %v412 = vshrl.u32 %v282, 16
        %v414 = vrot.slane %v412, 7
        %v415 = vshll.u32 %v282, 16
        %v417 = vor.u32 %v414, %v415
        %v418 = vrot.slane %v414, 4
        %s435 = scalar_lea.vmem [#allocation2], 8
        %vm436 = vcmask 27648
        %vm437 = vmand %vm436, %vm323
        %v438 = vld [vmem:[%s435] sm:$0xf]
        %v439 = vsel %vm437, %v361, %v438
        %440 = vst [vmem:[%s435] sm:$0xf] %v439
        %v441 = vld [vmem:[%s435 + $0x4] sm:$0x1]
        %v442 = vsel %vm292, %v362, %v441
        %443 = vst [vmem:[%s435 + $0x4] sm:$0x1] %v442
        %v444 = vld [vmem:[%s435 + $0x8] sm:$0xf]
        %v445 = vsel %vm437, %v369, %v444
        %446 = vst [vmem:[%s435 + $0x8] sm:$0xf] %v445
        %v447 = vld [vmem:[%s435 + $0xc] sm:$0x1]
        %v448 = vsel %vm292, %v370, %v447
        %449 = vst [vmem:[%s435 + $0xc] sm:$0x1] %v448
        %v450 = vld [vmem:[%s435 + $0x10] sm:$0xf]
        %v451 = vsel %vm437, %v377, %v450
        %452 = vst [vmem:[%s435 + $0x10] sm:$0xf] %v451
        %v453 = vld [vmem:[%s435 + $0x14] sm:$0x1]
        %v454 = vsel %vm292, %v378, %v453
        %455 = vst [vmem:[%s435 + $0x14] sm:$0x1] %v454
        %v456 = vld [vmem:[%s435 + $0x18] sm:$0xf]
        %v457 = vsel %vm437, %v385, %v456
        %458 = vst [vmem:[%s435 + $0x18] sm:$0xf] %v457
        %v459 = vld [vmem:[%s435 + $0x1c] sm:$0x1]
        %v460 = vsel %vm292, %v386, %v459
        %461 = vst [vmem:[%s435 + $0x1c] sm:$0x1] %v460
        %v462 = vld [vmem:[%s435 + $0x20] sm:$0xf]
        %v463 = vsel %vm437, %v393, %v462
        %464 = vst [vmem:[%s435 + $0x20] sm:$0xf] %v463
        %v465 = vld [vmem:[%s435 + $0x24] sm:$0x1]
        %v466 = vsel %vm292, %v394, %v465
        %467 = vst [vmem:[%s435 + $0x24] sm:$0x1] %v466
        %v468 = vld [vmem:[%s435 + $0x28] sm:$0xf]
        %v469 = vsel %vm437, %v401, %v468
        %470 = vst [vmem:[%s435 + $0x28] sm:$0xf] %v469
        %v471 = vld [vmem:[%s435 + $0x2c] sm:$0x1]
        %v472 = vsel %vm292, %v402, %v471
        %473 = vst [vmem:[%s435 + $0x2c] sm:$0x1] %v472
        %v474 = vld [vmem:[%s435 + $0x30] sm:$0xf]
        %v475 = vsel %vm437, %v409, %v474
        %476 = vst [vmem:[%s435 + $0x30] sm:$0xf] %v475
        %v477 = vld [vmem:[%s435 + $0x34] sm:$0x1]
        %v478 = vsel %vm292, %v410, %v477
        %479 = vst [vmem:[%s435 + $0x34] sm:$0x1] %v478
        %v480 = vld [vmem:[%s435 + $0x38] sm:$0xf]
        %v481 = vsel %vm437, %v417, %v480
        %482 = vst [vmem:[%s435 + $0x38] sm:$0xf] %v481
        %v483 = vld [vmem:[%s435 + $0x3c] sm:$0x1]
        %v484 = vsel %vm292, %v418, %v483
        %485 = vst [vmem:[%s435 + $0x3c] sm:$0x1] %v484
        %v486 = vld [vmem:[#allocation2] sm:$0xf]
        %v487 = vld [vmem:[#allocation2 + $0x8] sm:$0xf]
        %v488 = vld [vmem:[#allocation2 + $0x10] sm:$0xf]
        %v489 = vld [vmem:[#allocation2 + $0x18] sm:$0xf]
        %v490 = vld [vmem:[#allocation2 + $0x20] sm:$0xf]
        %v491 = vld [vmem:[#allocation2 + $0x28] sm:$0xf]
        %v492 = vld [vmem:[#allocation2 + $0x30] sm:$0xf]
        %v493 = vld [vmem:[#allocation2 + $0x38] sm:$0xf]
        %v494 = vld [vmem:[#allocation7] sm:$0x3]
        %v495 = vld [vmem:[#allocation2 + $0x4] sm:$0x1]
        %v496 = vld [vmem:[#allocation2 + $0xc] sm:$0x1]
        %v497 = vld [vmem:[#allocation2 + $0x14] sm:$0x1]
        %v498 = vld [vmem:[#allocation2 + $0x1c] sm:$0x1]
        %v499 = vld [vmem:[#allocation2 + $0x24] sm:$0x1]
        %v500 = vld [vmem:[#allocation2 + $0x2c] sm:$0x1]
        %v501 = vld [vmem:[#allocation2 + $0x34] sm:$0x1]
        %v502 = vld [vmem:[#allocation2 + $0x3c] sm:$0x1]
        %vm503 = vsmask.f32 3328
        %vm504 = vsmask.f32 7440
        %vm505 = vmor %vm503, %vm504
        %v507 = vshrl.u32 %v486, 16
        %v509 = vrot.slane %v507, 4
        %v510 = vshll.u32 %v486, 16
        %v512 = vrot.slane %v510, 5
        %v513 = vor.u32 %v509, %v512
        %v514 = vrot.slane %v513, 4
        %v516 = vshll.u32 %v495, 16
        %v518 = vrot.slane %v516, 5
        %v519 = vsel %vm505, %v514, %v518
        %v521 = vshrl.u32 %v487, 16
        %v523 = vrot.slane %v521, 4
        %v524 = vshll.u32 %v487, 16
        %v526 = vrot.slane %v524, 5
        %v527 = vor.u32 %v523, %v526
        %v528 = vrot.slane %v527, 4
        %v530 = vshll.u32 %v496, 16
        %v532 = vrot.slane %v530, 5
        %v533 = vsel %vm505, %v528, %v532
        %v535 = vshrl.u32 %v488, 16
        %v537 = vrot.slane %v535, 4
        %v538 = vshll.u32 %v488, 16
        %v540 = vrot.slane %v538, 5
        %v541 = vor.u32 %v537, %v540
        %v542 = vrot.slane %v541, 4
        %v544 = vshll.u32 %v497, 16
        %v546 = vrot.slane %v544, 5
        %v547 = vsel %vm505, %v542, %v546
        %v549 = vshrl.u32 %v489, 16
        %v551 = vrot.slane %v549, 4
        %v552 = vshll.u32 %v489, 16
        %v554 = vrot.slane %v552, 5
        %v555 = vor.u32 %v551, %v554
        %v556 = vrot.slane %v555, 4
        %v558 = vshll.u32 %v498, 16
        %v560 = vrot.slane %v558, 5
        %v561 = vsel %vm505, %v556, %v560
        %v563 = vshrl.u32 %v490, 16
        %v565 = vrot.slane %v563, 4
        %v566 = vshll.u32 %v490, 16
        %v568 = vrot.slane %v566, 5
        %v569 = vor.u32 %v565, %v568
        %v570 = vrot.slane %v569, 4
        %v572 = vshll.u32 %v499, 16
        %v574 = vrot.slane %v572, 5
        %v575 = vsel %vm505, %v570, %v574
        %v577 = vshrl.u32 %v491, 16
        %v579 = vrot.slane %v577, 4
        %v580 = vshll.u32 %v491, 16
        %v582 = vrot.slane %v580, 5
        %v583 = vor.u32 %v579, %v582
        %v584 = vrot.slane %v583, 4
        %v586 = vshll.u32 %v500, 16
        %v588 = vrot.slane %v586, 5
        %v589 = vsel %vm505, %v584, %v588
        %v591 = vshrl.u32 %v492, 16
        %v593 = vrot.slane %v591, 4
        %v594 = vshll.u32 %v492, 16
        %v596 = vrot.slane %v594, 5
        %v597 = vor.u32 %v593, %v596
        %v598 = vrot.slane %v597, 4
        %v600 = vshll.u32 %v501, 16
        %v602 = vrot.slane %v600, 5
        %v603 = vsel %vm505, %v598, %v602
        %v605 = vshrl.u32 %v493, 16
        %v607 = vrot.slane %v605, 4
        %v608 = vshll.u32 %v493, 16
        %v610 = vrot.slane %v608, 5
        %v611 = vor.u32 %v607, %v610
        %v612 = vrot.slane %v611, 4
        %v614 = vshll.u32 %v502, 16
        %v616 = vrot.slane %v614, 5
        %v617 = vsel %vm505, %v612, %v616
        %s618 = scalar_lea.vmem [#allocation7], 2
        %v619 = vld [vmem:[%s618] sm:$0x3]
        %v620 = vunpack.c.l.b16 %v519
        %v621 = vunpack.c.l.b16 %v533
        %v622 = vunpack.c.l.b16 %v547
        %v623 = vunpack.c.l.b16 %v561
        %v624 = vunpack.c.l.b16 %v575
        %v625 = vunpack.c.l.b16 %v589
        %v626 = vunpack.c.l.b16 %v603
        %v627 = vunpack.c.l.b16 %v617
        %v628 = vpack.c.b16 %v621, %v620
        %v629 = vpack.c.b16 %v623, %v622
        %v630 = vpack.c.b16 %v625, %v624
        %v631 = vpack.c.b16 %v627, %v626
        %vm632 = vcmask 31744
        %v634 = vsel %vm632, %v628, 0
        %v637 = vsel %vm632, %v629, 0
        %v640 = vsel %vm632, %v630, 0
        %v643 = vsel %vm632, %v631, 0
        %vm645 = vcmask 1041408
        %v647 = vsel %vm645, %v619, 0
        %649 = vmatprep.subr.bf16.mxu0 0
        %650 = vmatpush1.bf16.msra.mxu0 0
        %651 = vmatprep.subr.bf16.mxu0 0
        %652 = vmatpush1.bf16.msra.mxu0 0
        %653 = vmatprep.subr.bf16.mxu0 0
        %654 = vmatpush1.bf16.msra.mxu0 0
        %655 = vmatprep.subr.bf16.mxu0 0
        %656 = vmatpush1.bf16.msra.mxu0 0
        %657 = vmatprep.subr.bf16.mxu0 0
        %658 = vmatpush1.bf16.msra.mxu0 0
        %659 = vmatprep.subr.bf16.mxu0 0
        %660 = vmatpush1.bf16.msra.mxu0 0
        %661 = vmatprep.subr.bf16.mxu0 0
        %662 = vmatpush1.bf16.msra.mxu0 0
        %663 = vmatprep.subr.bf16.mxu0 0
        %664 = vmatpush1.bf16.msra.mxu0 %v647
        %665 = vmatprep.subr.bf16.mxu0 0
        %666 = vmatpush2.bf16.msra.mxu0 0
        %667 = vmatprep.subr.bf16.mxu0 0
        %668 = vmatpush2.bf16.msra.mxu0 0
        %669 = vmatprep.subr.bf16.mxu0 0
        %670 = vmatpush2.bf16.msra.mxu0 0
        %671 = vmatprep.subr.bf16.mxu0 0
        %672 = vmatpush2.bf16.msra.mxu0 0
        %673 = vmatprep.subr.bf16.mxu0 0
        %674 = vmatpush2.bf16.msra.mxu0 0
        %675 = vmatprep.subr.bf16.mxu0 0
        %676 = vmatpush2.bf16.msra.mxu0 0
        %677 = vmatprep.subr.bf16.mxu0 0
        %678 = vmatpush2.bf16.msra.mxu0 0
        %679 = vmatprep.subr.bf16.mxu0 0
        %680 = vmatpush2.bf16.msra.mxu0 0
        %681 = vmatprep.mubr.bf16.mxu0 0
        %682 = vmatmul.mubr.bf16.gmra.mxu0 %v634
        %v683 = vpop.f32.mrf.mxu0
        %v684 = vadd.f32 0.0, %v683
        %v685 = vpop.f32.mrf.mxu0
        %v686 = vpop.f32.mrf.mxu0
        %v687 = vadd.f32 0.0, %v686
        %v688 = vpop.f32.mrf.mxu0
        %689 = vmatprep.mubr.bf16.mxu0 0
        %690 = vmatmul.mubr.bf16.gmra.mxu0 %v637
        %v691 = vpop.f32.mrf.mxu0
        %v692 = vadd.f32 0.0, %v691
        %v693 = vpop.f32.mrf.mxu0
        %v694 = vpop.f32.mrf.mxu0
        %v695 = vadd.f32 0.0, %v694
        %v696 = vpop.f32.mrf.mxu0
        %697 = vmatprep.mubr.bf16.mxu0 0
        %698 = vmatmul.mubr.bf16.gmra.mxu0 %v640
        %v699 = vpop.f32.mrf.mxu0
        %v700 = vadd.f32 0.0, %v699
        %v701 = vpop.f32.mrf.mxu0
        %v702 = vpop.f32.mrf.mxu0
        %v703 = vadd.f32 0.0, %v702
        %v704 = vpop.f32.mrf.mxu0
        %705 = vmatprep.mubr.bf16.mxu0 0
        %706 = vmatmul.mubr.bf16.gmra.mxu0 %v643
        %v707 = vpop.f32.mrf.mxu0
        %v708 = vadd.f32 0.0, %v707
        %v709 = vpop.f32.mrf.mxu0
        %v710 = vpop.f32.mrf.mxu0
        %v711 = vadd.f32 0.0, %v710
        %v712 = vpop.f32.mrf.mxu0
        %713 = vdwg.mxu0
        %v722 = vunpack.c.l.b16 %v486
        %v723 = vunpack.c.l.b16 %v487
        %v724 = vunpack.c.l.b16 %v488
        %v725 = vunpack.c.l.b16 %v489
        %v726 = vunpack.c.l.b16 %v490
        %v727 = vunpack.c.l.b16 %v491
        %v728 = vunpack.c.l.b16 %v492
        %v729 = vunpack.c.l.b16 %v493
        %v730 = vpack.c.b16 %v723, %v722
        %v731 = vpack.c.b16 %v725, %v724
        %v732 = vpack.c.b16 %v727, %v726
        %v733 = vpack.c.b16 %v729, %v728
        %v735 = vsel %vm632, %v730, 0
        %v738 = vsel %vm632, %v731, 0
        %v741 = vsel %vm632, %v732, 0
        %v744 = vsel %vm632, %v733, 0
        %v747 = vsel %vm645, %v494, 0
        %749 = vmatprep.subr.bf16.mxu0 0
        %750 = vmatpush1.bf16.msra.mxu0 0
        %751 = vmatprep.subr.bf16.mxu0 0
        %752 = vmatpush1.bf16.msra.mxu0 0
        %753 = vmatprep.subr.bf16.mxu0 0
        %754 = vmatpush1.bf16.msra.mxu0 0
        %755 = vmatprep.subr.bf16.mxu0 0
        %756 = vmatpush1.bf16.msra.mxu0 0
        %757 = vmatprep.subr.bf16.mxu0 0
        %758 = vmatpush1.bf16.msra.mxu0 0
        %759 = vmatprep.subr.bf16.mxu0 0
        %760 = vmatpush1.bf16.msra.mxu0 0
        %761 = vmatprep.subr.bf16.mxu0 0
        %762 = vmatpush1.bf16.msra.mxu0 0
        %763 = vmatprep.subr.bf16.mxu0 0
        %764 = vmatpush1.bf16.msra.mxu0 %v747
        %765 = vmatprep.subr.bf16.mxu0 0
        %766 = vmatpush2.bf16.msra.mxu0 0
        %767 = vmatprep.subr.bf16.mxu0 0
        %768 = vmatpush2.bf16.msra.mxu0 0
        %769 = vmatprep.subr.bf16.mxu0 0
        %770 = vmatpush2.bf16.msra.mxu0 0
        %771 = vmatprep.subr.bf16.mxu0 0
        %772 = vmatpush2.bf16.msra.mxu0 0
        %773 = vmatprep.subr.bf16.mxu0 0
        %774 = vmatpush2.bf16.msra.mxu0 0
        %775 = vmatprep.subr.bf16.mxu0 0
        %776 = vmatpush2.bf16.msra.mxu0 0
        %777 = vmatprep.subr.bf16.mxu0 0
        %778 = vmatpush2.bf16.msra.mxu0 0
        %779 = vmatprep.subr.bf16.mxu0 0
        %780 = vmatpush2.bf16.msra.mxu0 0
        %781 = vmatprep.mubr.bf16.mxu0 0
        %782 = vmatmul.mubr.bf16.gmra.mxu0 %v735
        %v783 = vpop.f32.mrf.mxu0
        %v784 = vadd.f32 %v684, %v783
        %v785 = vpop.f32.mrf.mxu0
        %v786 = vpop.f32.mrf.mxu0
        %v787 = vadd.f32 %v687, %v786
        %v788 = vpop.f32.mrf.mxu0
        %789 = vmatprep.mubr.bf16.mxu0 0
        %790 = vmatmul.mubr.bf16.gmra.mxu0 %v738
        %v791 = vpop.f32.mrf.mxu0
        %v792 = vadd.f32 %v692, %v791
        %v793 = vpop.f32.mrf.mxu0
        %v794 = vpop.f32.mrf.mxu0
        %v795 = vadd.f32 %v695, %v794
        %v796 = vpop.f32.mrf.mxu0
        %797 = vmatprep.mubr.bf16.mxu0 0
        %798 = vmatmul.mubr.bf16.gmra.mxu0 %v741
        %v799 = vpop.f32.mrf.mxu0
        %v800 = vadd.f32 %v700, %v799
        %v801 = vpop.f32.mrf.mxu0
        %v802 = vpop.f32.mrf.mxu0
        %v803 = vadd.f32 %v703, %v802
        %v804 = vpop.f32.mrf.mxu0
        %805 = vmatprep.mubr.bf16.mxu0 0
        %806 = vmatmul.mubr.bf16.gmra.mxu0 %v744
        %v807 = vpop.f32.mrf.mxu0
        %v808 = vadd.f32 %v708, %v807
        %v809 = vpop.f32.mrf.mxu0
        %v810 = vpop.f32.mrf.mxu0
        %v811 = vadd.f32 %v711, %v810
        %v812 = vpop.f32.mrf.mxu0
        %813 = vdwg.mxu0
        %v814 = vld [vmem:[#allocation2] sm:$0xe]
        %v815 = vld [vmem:[#allocation2 + $0x8] sm:$0xe]
        %v816 = vld [vmem:[#allocation2 + $0x10] sm:$0xe]
        %v817 = vld [vmem:[#allocation2 + $0x18] sm:$0xe]
        %v818 = vld [vmem:[#allocation2 + $0x20] sm:$0xe]
        %v819 = vld [vmem:[#allocation2 + $0x28] sm:$0xe]
        %v820 = vld [vmem:[#allocation2 + $0x30] sm:$0xe]
        %v821 = vld [vmem:[#allocation2 + $0x38] sm:$0xe]
        %vm838 = vcmask 1042432
        %vm839 = vcmask 1046532
        %vm840 = vmor %vm838, %vm839
        %v841 = vrot.slane %v814, 5
        %v842 = vrot.slane %v841, 4
        %v843 = vrot.slane %v495, 5
        %v844 = vsel %vm840, %v842, %v843
        %v845 = vrot.slane %v815, 5
        %v846 = vrot.slane %v845, 4
        %v847 = vrot.slane %v496, 5
        %v848 = vsel %vm840, %v846, %v847
        %v849 = vrot.slane %v816, 5
        %v850 = vrot.slane %v849, 4
        %v851 = vrot.slane %v497, 5
        %v852 = vsel %vm840, %v850, %v851
        %v853 = vrot.slane %v817, 5
        %v854 = vrot.slane %v853, 4
        %v855 = vrot.slane %v498, 5
        %v856 = vsel %vm840, %v854, %v855
        %v857 = vrot.slane %v818, 5
        %v858 = vrot.slane %v857, 4
        %v859 = vrot.slane %v499, 5
        %v860 = vsel %vm840, %v858, %v859
        %v861 = vrot.slane %v819, 5
        %v862 = vrot.slane %v861, 4
        %v863 = vrot.slane %v500, 5
        %v864 = vsel %vm840, %v862, %v863
        %v865 = vrot.slane %v820, 5
        %v866 = vrot.slane %v865, 4
        %v867 = vrot.slane %v501, 5
        %v868 = vsel %vm840, %v866, %v867
        %v869 = vrot.slane %v821, 5
        %v870 = vrot.slane %v869, 4
        %v871 = vrot.slane %v502, 5
        %v872 = vsel %vm840, %v870, %v871
        %s873 = scalar_lea.vmem [#allocation7], 4
        %v874 = vld [vmem:[%s873] sm:$0x3]
        %v875 = vunpack.c.l.b16 %v844
        %v876 = vunpack.c.l.b16 %v848
        %v877 = vunpack.c.l.b16 %v852
        %v878 = vunpack.c.l.b16 %v856
        %v879 = vunpack.c.l.b16 %v860
        %v880 = vunpack.c.l.b16 %v864
        %v881 = vunpack.c.l.b16 %v868
        %v882 = vunpack.c.l.b16 %v872
        %v883 = vpack.c.b16 %v876, %v875
        %v884 = vpack.c.b16 %v878, %v877
        %v885 = vpack.c.b16 %v880, %v879
        %v886 = vpack.c.b16 %v882, %v881
        %v888 = vsel %vm632, %v883, 0
        %v891 = vsel %vm632, %v884, 0
        %v894 = vsel %vm632, %v885, 0
        %v897 = vsel %vm632, %v886, 0
        %v900 = vsel %vm645, %v874, 0
        %902 = vmatprep.subr.bf16.mxu0 0
        %903 = vmatpush1.bf16.msra.mxu0 0
        %904 = vmatprep.subr.bf16.mxu0 0
        %905 = vmatpush1.bf16.msra.mxu0 0
        %906 = vmatprep.subr.bf16.mxu0 0
        %907 = vmatpush1.bf16.msra.mxu0 0
        %908 = vmatprep.subr.bf16.mxu0 0
        %909 = vmatpush1.bf16.msra.mxu0 0
        %910 = vmatprep.subr.bf16.mxu0 0
        %911 = vmatpush1.bf16.msra.mxu0 0
        %912 = vmatprep.subr.bf16.mxu0 0
        %913 = vmatpush1.bf16.msra.mxu0 0
        %914 = vmatprep.subr.bf16.mxu0 0
        %915 = vmatpush1.bf16.msra.mxu0 0
        %916 = vmatprep.subr.bf16.mxu0 0
        %917 = vmatpush1.bf16.msra.mxu0 %v900
        %918 = vmatprep.subr.bf16.mxu0 0
        %919 = vmatpush2.bf16.msra.mxu0 0
        %920 = vmatprep.subr.bf16.mxu0 0
        %921 = vmatpush2.bf16.msra.mxu0 0
        %922 = vmatprep.subr.bf16.mxu0 0
        %923 = vmatpush2.bf16.msra.mxu0 0
        %924 = vmatprep.subr.bf16.mxu0 0
        %925 = vmatpush2.bf16.msra.mxu0 0
        %926 = vmatprep.subr.bf16.mxu0 0
        %927 = vmatpush2.bf16.msra.mxu0 0
        %928 = vmatprep.subr.bf16.mxu0 0
        %929 = vmatpush2.bf16.msra.mxu0 0
        %930 = vmatprep.subr.bf16.mxu0 0
        %931 = vmatpush2.bf16.msra.mxu0 0
        %932 = vmatprep.subr.bf16.mxu0 0
        %933 = vmatpush2.bf16.msra.mxu0 0
        %934 = vmatprep.mubr.bf16.mxu0 0
        %935 = vmatmul.mubr.bf16.gmra.mxu0 %v888
        %v936 = vpop.f32.mrf.mxu0
        %v937 = vadd.f32 0.0, %v936
        %v938 = vpop.f32.mrf.mxu0
        %v939 = vpop.f32.mrf.mxu0
        %v940 = vadd.f32 0.0, %v939
        %v941 = vpop.f32.mrf.mxu0
        %942 = vmatprep.mubr.bf16.mxu0 0
        %943 = vmatmul.mubr.bf16.gmra.mxu0 %v891
        %v944 = vpop.f32.mrf.mxu0
        %v945 = vadd.f32 0.0, %v944
        %v946 = vpop.f32.mrf.mxu0
        %v947 = vpop.f32.mrf.mxu0
        %v948 = vadd.f32 0.0, %v947
        %v949 = vpop.f32.mrf.mxu0
        %950 = vmatprep.mubr.bf16.mxu0 0
        %951 = vmatmul.mubr.bf16.gmra.mxu0 %v894
        %v952 = vpop.f32.mrf.mxu0
        %v953 = vadd.f32 0.0, %v952
        %v954 = vpop.f32.mrf.mxu0
        %v955 = vpop.f32.mrf.mxu0
        %v956 = vadd.f32 0.0, %v955
        %v957 = vpop.f32.mrf.mxu0
        %958 = vmatprep.mubr.bf16.mxu0 0
        %959 = vmatmul.mubr.bf16.gmra.mxu0 %v897
        %v960 = vpop.f32.mrf.mxu0
        %v961 = vadd.f32 0.0, %v960
        %v962 = vpop.f32.mrf.mxu0
        %v963 = vpop.f32.mrf.mxu0
        %v964 = vadd.f32 0.0, %v963
        %v965 = vpop.f32.mrf.mxu0
        %966 = vdwg.mxu0
        %v967 = vadd.f32 %v784, %v937
        %v968 = vadd.f32 %v787, %v940
        %v969 = vadd.f32 %v792, %v945
        %v970 = vadd.f32 %v795, %v948
        %v971 = vadd.f32 %v800, %v953
        %v972 = vadd.f32 %v803, %v956
        %v973 = vadd.f32 %v808, %v961
        %v974 = vadd.f32 %v811, %v964
        %v975 = vld [vmem:[%s435] sm:$0xf]
        %v976 = vld [vmem:[%s435 + $0x8] sm:$0xf]
        %v977 = vld [vmem:[%s435 + $0x10] sm:$0xf]
        %v978 = vld [vmem:[%s435 + $0x18] sm:$0xf]
        %v979 = vld [vmem:[%s435 + $0x20] sm:$0xf]
        %v980 = vld [vmem:[%s435 + $0x28] sm:$0xf]
        %v981 = vld [vmem:[%s435 + $0x30] sm:$0xf]
        %v982 = vld [vmem:[%s435 + $0x38] sm:$0xf]
        %s983 = scalar_lea.vmem [#allocation7], 6
        %v984 = vld [vmem:[%s983] sm:$0x3]
        %v993 = vunpack.c.l.b16 %v975
        %v994 = vunpack.c.l.b16 %v976
        %v995 = vunpack.c.l.b16 %v977
        %v996 = vunpack.c.l.b16 %v978
        %v997 = vunpack.c.l.b16 %v979
        %v998 = vunpack.c.l.b16 %v980
        %v999 = vunpack.c.l.b16 %v981
        %v1000 = vunpack.c.l.b16 %v982
        %v1001 = vpack.c.b16 %v994, %v993
        %v1002 = vpack.c.b16 %v996, %v995
        %v1003 = vpack.c.b16 %v998, %v997
        %v1004 = vpack.c.b16 %v1000, %v999
        %v1006 = vsel %vm632, %v1001, 0
        %v1009 = vsel %vm632, %v1002, 0
        %v1012 = vsel %vm632, %v1003, 0
        %v1015 = vsel %vm632, %v1004, 0
        %v1018 = vsel %vm645, %v984, 0
        %1020 = vmatprep.subr.bf16.mxu0 0
        %1021 = vmatpush1.bf16.msra.mxu0 0
        %1022 = vmatprep.subr.bf16.mxu0 0
        %1023 = vmatpush1.bf16.msra.mxu0 0
        %1024 = vmatprep.subr.bf16.mxu0 0
        %1025 = vmatpush1.bf16.msra.mxu0 0
        %1026 = vmatprep.subr.bf16.mxu0 0
        %1027 = vmatpush1.bf16.msra.mxu0 0
        %1028 = vmatprep.subr.bf16.mxu0 0
        %1029 = vmatpush1.bf16.msra.mxu0 0
        %1030 = vmatprep.subr.bf16.mxu0 0
        %1031 = vmatpush1.bf16.msra.mxu0 0
        %1032 = vmatprep.subr.bf16.mxu0 0
        %1033 = vmatpush1.bf16.msra.mxu0 0
        %1034 = vmatprep.subr.bf16.mxu0 0
        %1035 = vmatpush1.bf16.msra.mxu0 %v1018
        %1036 = vmatprep.subr.bf16.mxu0 0
        %1037 = vmatpush2.bf16.msra.mxu0 0
        %1038 = vmatprep.subr.bf16.mxu0 0
        %1039 = vmatpush2.bf16.msra.mxu0 0
        %1040 = vmatprep.subr.bf16.mxu0 0
        %1041 = vmatpush2.bf16.msra.mxu0 0
        %1042 = vmatprep.subr.bf16.mxu0 0
        %1043 = vmatpush2.bf16.msra.mxu0 0
        %1044 = vmatprep.subr.bf16.mxu0 0
        %1045 = vmatpush2.bf16.msra.mxu0 0
        %1046 = vmatprep.subr.bf16.mxu0 0
        %1047 = vmatpush2.bf16.msra.mxu0 0
        %1048 = vmatprep.subr.bf16.mxu0 0
        %1049 = vmatpush2.bf16.msra.mxu0 0
        %1050 = vmatprep.subr.bf16.mxu0 0
        %1051 = vmatpush2.bf16.msra.mxu0 0
        %1052 = vmatprep.mubr.bf16.mxu0 0
        %1053 = vmatmul.mubr.bf16.gmra.mxu0 %v1006
        %v1054 = vpop.f32.mrf.mxu0
        %v1055 = vadd.f32 0.0, %v1054
        %v1056 = vpop.f32.mrf.mxu0
        %v1057 = vpop.f32.mrf.mxu0
        %v1058 = vadd.f32 0.0, %v1057
        %v1059 = vpop.f32.mrf.mxu0
        %1060 = vmatprep.mubr.bf16.mxu0 0
        %1061 = vmatmul.mubr.bf16.gmra.mxu0 %v1009
        %v1062 = vpop.f32.mrf.mxu0
        %v1063 = vadd.f32 0.0, %v1062
        %v1064 = vpop.f32.mrf.mxu0
        %v1065 = vpop.f32.mrf.mxu0
        %v1066 = vadd.f32 0.0, %v1065
        %v1067 = vpop.f32.mrf.mxu0
        %1068 = vmatprep.mubr.bf16.mxu0 0
        %1069 = vmatmul.mubr.bf16.gmra.mxu0 %v1012
        %v1070 = vpop.f32.mrf.mxu0
        %v1071 = vadd.f32 0.0, %v1070
        %v1072 = vpop.f32.mrf.mxu0
        %v1073 = vpop.f32.mrf.mxu0
        %v1074 = vadd.f32 0.0, %v1073
        %v1075 = vpop.f32.mrf.mxu0
        %1076 = vmatprep.mubr.bf16.mxu0 0
        %1077 = vmatmul.mubr.bf16.gmra.mxu0 %v1015
        %v1078 = vpop.f32.mrf.mxu0
        %v1079 = vadd.f32 0.0, %v1078
        %v1080 = vpop.f32.mrf.mxu0
        %v1081 = vpop.f32.mrf.mxu0
        %v1082 = vadd.f32 0.0, %v1081
        %v1083 = vpop.f32.mrf.mxu0
        %1084 = vdwg.mxu0
        %v1085 = vadd.f32 %v967, %v1055
        %v1086 = vadd.f32 %v968, %v1058
        %v1087 = vadd.f32 %v969, %v1063
        %v1088 = vadd.f32 %v970, %v1066
        %v1089 = vadd.f32 %v971, %v1071
        %v1090 = vadd.f32 %v972, %v1074
        %v1091 = vadd.f32 %v973, %v1079
        %v1092 = vadd.f32 %v974, %v1082
        %v1093 = vld [vmem:[%s435] sm:$0xf]
        %v1094 = vld [vmem:[%s435 + $0x4] sm:$0x1]
        %v1095 = vld [vmem:[%s435 + $0x8] sm:$0xf]
        %v1096 = vld [vmem:[%s435 + $0xc] sm:$0x1]
        %v1097 = vld [vmem:[%s435 + $0x10] sm:$0xf]
        %v1098 = vld [vmem:[%s435 + $0x14] sm:$0x1]
        %v1099 = vld [vmem:[%s435 + $0x18] sm:$0xf]
        %v1100 = vld [vmem:[%s435 + $0x1c] sm:$0x1]
        %v1101 = vld [vmem:[%s435 + $0x20] sm:$0xf]
        %v1102 = vld [vmem:[%s435 + $0x24] sm:$0x1]
        %v1103 = vld [vmem:[%s435 + $0x28] sm:$0xf]
        %v1104 = vld [vmem:[%s435 + $0x2c] sm:$0x1]
        %v1105 = vld [vmem:[%s435 + $0x30] sm:$0xf]
        %v1106 = vld [vmem:[%s435 + $0x34] sm:$0x1]
        %v1107 = vld [vmem:[%s435 + $0x38] sm:$0xf]
        %v1108 = vld [vmem:[%s435 + $0x3c] sm:$0x1]
        %v1110 = vshrl.u32 %v1093, 16
        %v1112 = vrot.slane %v1110, 4
        %v1113 = vshll.u32 %v1093, 16
        %v1115 = vrot.slane %v1113, 5
        %v1116 = vor.u32 %v1112, %v1115
        %v1117 = vrot.slane %v1116, 4
        %v1119 = vshll.u32 %v1094, 16
        %v1121 = vrot.slane %v1119, 5
        %v1122 = vsel %vm505, %v1117, %v1121
        %v1124 = vshrl.u32 %v1095, 16
        %v1126 = vrot.slane %v1124, 4
        %v1127 = vshll.u32 %v1095, 16
        %v1129 = vrot.slane %v1127, 5
        %v1130 = vor.u32 %v1126, %v1129
        %v1131 = vrot.slane %v1130, 4
        %v1133 = vshll.u32 %v1096, 16
        %v1135 = vrot.slane %v1133, 5
        %v1136 = vsel %vm505, %v1131, %v1135
        %v1138 = vshrl.u32 %v1097, 16
        %v1140 = vrot.slane %v1138, 4
        %v1141 = vshll.u32 %v1097, 16
        %v1143 = vrot.slane %v1141, 5
        %v1144 = vor.u32 %v1140, %v1143
        %v1145 = vrot.slane %v1144, 4
        %v1147 = vshll.u32 %v1098, 16
        %v1149 = vrot.slane %v1147, 5
        %v1150 = vsel %vm505, %v1145, %v1149
        %v1152 = vshrl.u32 %v1099, 16
        %v1154 = vrot.slane %v1152, 4
        %v1155 = vshll.u32 %v1099, 16
        %v1157 = vrot.slane %v1155, 5
        %v1158 = vor.u32 %v1154, %v1157
        %v1159 = vrot.slane %v1158, 4
        %v1161 = vshll.u32 %v1100, 16
        %v1163 = vrot.slane %v1161, 5
        %v1164 = vsel %vm505, %v1159, %v1163
        %v1166 = vshrl.u32 %v1101, 16
        %v1168 = vrot.slane %v1166, 4
        %v1169 = vshll.u32 %v1101, 16
        %v1171 = vrot.slane %v1169, 5
        %v1172 = vor.u32 %v1168, %v1171
        %v1173 = vrot.slane %v1172, 4
        %v1175 = vshll.u32 %v1102, 16
        %v1177 = vrot.slane %v1175, 5
        %v1178 = vsel %vm505, %v1173, %v1177
        %v1180 = vshrl.u32 %v1103, 16
        %v1182 = vrot.slane %v1180, 4
        %v1183 = vshll.u32 %v1103, 16
        %v1185 = vrot.slane %v1183, 5
        %v1186 = vor.u32 %v1182, %v1185
        %v1187 = vrot.slane %v1186, 4
        %v1189 = vshll.u32 %v1104, 16
        %v1191 = vrot.slane %v1189, 5
        %v1192 = vsel %vm505, %v1187, %v1191
        %v1194 = vshrl.u32 %v1105, 16
        %v1196 = vrot.slane %v1194, 4
        %v1197 = vshll.u32 %v1105, 16
        %v1199 = vrot.slane %v1197, 5
        %v1200 = vor.u32 %v1196, %v1199
        %v1201 = vrot.slane %v1200, 4
        %v1203 = vshll.u32 %v1106, 16
        %v1205 = vrot.slane %v1203, 5
        %v1206 = vsel %vm505, %v1201, %v1205
        %v1208 = vshrl.u32 %v1107, 16
        %v1210 = vrot.slane %v1208, 4
        %v1211 = vshll.u32 %v1107, 16
        %v1213 = vrot.slane %v1211, 5
        %v1214 = vor.u32 %v1210, %v1213
        %v1215 = vrot.slane %v1214, 4
        %v1217 = vshll.u32 %v1108, 16
        %v1219 = vrot.slane %v1217, 5
        %v1220 = vsel %vm505, %v1215, %v1219
        %s1221 = scalar_lea.vmem [#allocation7], 8
        %v1222 = vld [vmem:[%s1221] sm:$0x3]
        %v1223 = vunpack.c.l.b16 %v1122
        %v1224 = vunpack.c.l.b16 %v1136
        %v1225 = vunpack.c.l.b16 %v1150
        %v1226 = vunpack.c.l.b16 %v1164
        %v1227 = vunpack.c.l.b16 %v1178
        %v1228 = vunpack.c.l.b16 %v1192
        %v1229 = vunpack.c.l.b16 %v1206
        %v1230 = vunpack.c.l.b16 %v1220
        %v1231 = vpack.c.b16 %v1224, %v1223
        %v1232 = vpack.c.b16 %v1226, %v1225
        %v1233 = vpack.c.b16 %v1228, %v1227
        %v1234 = vpack.c.b16 %v1230, %v1229
        %v1236 = vsel %vm632, %v1231, 0
        %v1239 = vsel %vm632, %v1232, 0
        %v1242 = vsel %vm632, %v1233, 0
        %v1245 = vsel %vm632, %v1234, 0
        %v1248 = vsel %vm645, %v1222, 0
        %1250 = vmatprep.subr.bf16.mxu0 0
        %1251 = vmatpush1.bf16.msra.mxu0 0
        %1252 = vmatprep.subr.bf16.mxu0 0
        %1253 = vmatpush1.bf16.msra.mxu0 0
        %1254 = vmatprep.subr.bf16.mxu0 0
        %1255 = vmatpush1.bf16.msra.mxu0 0
        %1256 = vmatprep.subr.bf16.mxu0 0
        %1257 = vmatpush1.bf16.msra.mxu0 0
        %1258 = vmatprep.subr.bf16.mxu0 0
        %1259 = vmatpush1.bf16.msra.mxu0 0
        %1260 = vmatprep.subr.bf16.mxu0 0
        %1261 = vmatpush1.bf16.msra.mxu0 0
        %1262 = vmatprep.subr.bf16.mxu0 0
        %1263 = vmatpush1.bf16.msra.mxu0 0
        %1264 = vmatprep.subr.bf16.mxu0 0
        %1265 = vmatpush1.bf16.msra.mxu0 %v1248
        %1266 = vmatprep.subr.bf16.mxu0 0
        %1267 = vmatpush2.bf16.msra.mxu0 0
        %1268 = vmatprep.subr.bf16.mxu0 0
        %1269 = vmatpush2.bf16.msra.mxu0 0
        %1270 = vmatprep.subr.bf16.mxu0 0
        %1271 = vmatpush2.bf16.msra.mxu0 0
        %1272 = vmatprep.subr.bf16.mxu0 0
        %1273 = vmatpush2.bf16.msra.mxu0 0
        %1274 = vmatprep.subr.bf16.mxu0 0
        %1275 = vmatpush2.bf16.msra.mxu0 0
        %1276 = vmatprep.subr.bf16.mxu0 0
        %1277 = vmatpush2.bf16.msra.mxu0 0
        %1278 = vmatprep.subr.bf16.mxu0 0
        %1279 = vmatpush2.bf16.msra.mxu0 0
        %1280 = vmatprep.subr.bf16.mxu0 0
        %1281 = vmatpush2.bf16.msra.mxu0 0
        %1282 = vmatprep.mubr.bf16.mxu0 0
        %1283 = vmatmul.mubr.bf16.gmra.mxu0 %v1236
        %v1284 = vpop.f32.mrf.mxu0
        %v1285 = vadd.f32 0.0, %v1284
        %v1286 = vpop.f32.mrf.mxu0
        %v1287 = vpop.f32.mrf.mxu0
        %v1288 = vadd.f32 0.0, %v1287
        %v1289 = vpop.f32.mrf.mxu0
        %1290 = vmatprep.mubr.bf16.mxu0 0
        %1291 = vmatmul.mubr.bf16.gmra.mxu0 %v1239
        %v1292 = vpop.f32.mrf.mxu0
        %v1293 = vadd.f32 0.0, %v1292
        %v1294 = vpop.f32.mrf.mxu0
        %v1295 = vpop.f32.mrf.mxu0
        %v1296 = vadd.f32 0.0, %v1295
        %v1297 = vpop.f32.mrf.mxu0
        %1298 = vmatprep.mubr.bf16.mxu0 0
        %1299 = vmatmul.mubr.bf16.gmra.mxu0 %v1242
        %v1300 = vpop.f32.mrf.mxu0
        %v1301 = vadd.f32 0.0, %v1300
        %v1302 = vpop.f32.mrf.mxu0
        %v1303 = vpop.f32.mrf.mxu0
        %v1304 = vadd.f32 0.0, %v1303
        %v1305 = vpop.f32.mrf.mxu0
        %1306 = vmatprep.mubr.bf16.mxu0 0
        %1307 = vmatmul.mubr.bf16.gmra.mxu0 %v1245
        %v1308 = vpop.f32.mrf.mxu0
        %v1309 = vadd.f32 0.0, %v1308
        %v1310 = vpop.f32.mrf.mxu0
        %v1311 = vpop.f32.mrf.mxu0
        %v1312 = vadd.f32 0.0, %v1311
        %v1313 = vpop.f32.mrf.mxu0
        %1314 = vdwg.mxu0
        %v1315 = vadd.f32 %v1085, %v1285
        %v1316 = vadd.f32 %v1086, %v1288
        %v1317 = vadd.f32 %v1087, %v1293
        %v1318 = vadd.f32 %v1088, %v1296
        %v1319 = vadd.f32 %v1089, %v1301
        %v1320 = vadd.f32 %v1090, %v1304
        %v1321 = vadd.f32 %v1091, %v1309
        %v1322 = vadd.f32 %v1092, %v1312
        %v1323 = vld [vmem:[%s435] sm:$0xe]
        %v1324 = vld [vmem:[%s435 + $0x8] sm:$0xe]
        %v1325 = vld [vmem:[%s435 + $0x10] sm:$0xe]
        %v1326 = vld [vmem:[%s435 + $0x18] sm:$0xe]
        %v1327 = vld [vmem:[%s435 + $0x20] sm:$0xe]
        %v1328 = vld [vmem:[%s435 + $0x28] sm:$0xe]
        %v1329 = vld [vmem:[%s435 + $0x30] sm:$0xe]
        %v1330 = vld [vmem:[%s435 + $0x38] sm:$0xe]
        %v1347 = vrot.slane %v1323, 5
        %v1348 = vrot.slane %v1347, 4
        %v1349 = vrot.slane %v1094, 5
        %v1350 = vsel %vm840, %v1348, %v1349
        %v1351 = vrot.slane %v1324, 5
        %v1352 = vrot.slane %v1351, 4
        %v1353 = vrot.slane %v1096, 5
        %v1354 = vsel %vm840, %v1352, %v1353
        %v1355 = vrot.slane %v1325, 5
        %v1356 = vrot.slane %v1355, 4
        %v1357 = vrot.slane %v1098, 5
        %v1358 = vsel %vm840, %v1356, %v1357
        %v1359 = vrot.slane %v1326, 5
        %v1360 = vrot.slane %v1359, 4
        %v1361 = vrot.slane %v1100, 5
        %v1362 = vsel %vm840, %v1360, %v1361
        %v1363 = vrot.slane %v1327, 5
        %v1364 = vrot.slane %v1363, 4
        %v1365 = vrot.slane %v1102, 5
        %v1366 = vsel %vm840, %v1364, %v1365
        %v1367 = vrot.slane %v1328, 5
        %v1368 = vrot.slane %v1367, 4
        %v1369 = vrot.slane %v1104, 5
        %v1370 = vsel %vm840, %v1368, %v1369
        %v1371 = vrot.slane %v1329, 5
        %v1372 = vrot.slane %v1371, 4
        %v1373 = vrot.slane %v1106, 5
        %v1374 = vsel %vm840, %v1372, %v1373
        %v1375 = vrot.slane %v1330, 5
        %v1376 = vrot.slane %v1375, 4
        %v1377 = vrot.slane %v1108, 5
        %v1378 = vsel %vm840, %v1376, %v1377
        %s1379 = scalar_lea.vmem [#allocation7], 10
        %v1380 = vld [vmem:[%s1379] sm:$0x3]
        %v1381 = vunpack.c.l.b16 %v1350
        %v1382 = vunpack.c.l.b16 %v1354
        %v1383 = vunpack.c.l.b16 %v1358
        %v1384 = vunpack.c.l.b16 %v1362
        %v1385 = vunpack.c.l.b16 %v1366
        %v1386 = vunpack.c.l.b16 %v1370
        %v1387 = vunpack.c.l.b16 %v1374
        %v1388 = vunpack.c.l.b16 %v1378
        %v1389 = vpack.c.b16 %v1382, %v1381
        %v1390 = vpack.c.b16 %v1384, %v1383
        %v1391 = vpack.c.b16 %v1386, %v1385
        %v1392 = vpack.c.b16 %v1388, %v1387
        %v1394 = vsel %vm632, %v1389, 0
        %v1397 = vsel %vm632, %v1390, 0
        %v1400 = vsel %vm632, %v1391, 0
        %v1403 = vsel %vm632, %v1392, 0
        %v1406 = vsel %vm645, %v1380, 0
        %1408 = vmatprep.subr.bf16.mxu0 0
        %1409 = vmatpush1.bf16.msra.mxu0 0
        %1410 = vmatprep.subr.bf16.mxu0 0
        %1411 = vmatpush1.bf16.msra.mxu0 0
        %1412 = vmatprep.subr.bf16.mxu0 0
        %1413 = vmatpush1.bf16.msra.mxu0 0
        %1414 = vmatprep.subr.bf16.mxu0 0
        %1415 = vmatpush1.bf16.msra.mxu0 0
        %1416 = vmatprep.subr.bf16.mxu0 0
        %1417 = vmatpush1.bf16.msra.mxu0 0
        %1418 = vmatprep.subr.bf16.mxu0 0
        %1419 = vmatpush1.bf16.msra.mxu0 0
        %1420 = vmatprep.subr.bf16.mxu0 0
        %1421 = vmatpush1.bf16.msra.mxu0 0
        %1422 = vmatprep.subr.bf16.mxu0 0
        %1423 = vmatpush1.bf16.msra.mxu0 %v1406
        %1424 = vmatprep.subr.bf16.mxu0 0
        %1425 = vmatpush2.bf16.msra.mxu0 0
        %1426 = vmatprep.subr.bf16.mxu0 0
        %1427 = vmatpush2.bf16.msra.mxu0 0
        %1428 = vmatprep.subr.bf16.mxu0 0
        %1429 = vmatpush2.bf16.msra.mxu0 0
        %1430 = vmatprep.subr.bf16.mxu0 0
        %1431 = vmatpush2.bf16.msra.mxu0 0
        %1432 = vmatprep.subr.bf16.mxu0 0
        %1433 = vmatpush2.bf16.msra.mxu0 0
        %1434 = vmatprep.subr.bf16.mxu0 0
        %1435 = vmatpush2.bf16.msra.mxu0 0
        %1436 = vmatprep.subr.bf16.mxu0 0
        %1437 = vmatpush2.bf16.msra.mxu0 0
        %1438 = vmatprep.subr.bf16.mxu0 0
        %1439 = vmatpush2.bf16.msra.mxu0 0
        %1440 = vmatprep.mubr.bf16.mxu0 0
        %1441 = vmatmul.mubr.bf16.gmra.mxu0 %v1394
        %v1442 = vpop.f32.mrf.mxu0
        %v1443 = vadd.f32 0.0, %v1442
        %v1444 = vpop.f32.mrf.mxu0
        %v1445 = vpop.f32.mrf.mxu0
        %v1446 = vadd.f32 0.0, %v1445
        %v1447 = vpop.f32.mrf.mxu0
        %1448 = vmatprep.mubr.bf16.mxu0 0
        %1449 = vmatmul.mubr.bf16.gmra.mxu0 %v1397
        %v1450 = vpop.f32.mrf.mxu0
        %v1451 = vadd.f32 0.0, %v1450
        %v1452 = vpop.f32.mrf.mxu0
        %v1453 = vpop.f32.mrf.mxu0
        %v1454 = vadd.f32 0.0, %v1453
        %v1455 = vpop.f32.mrf.mxu0
        %1456 = vmatprep.mubr.bf16.mxu0 0
        %1457 = vmatmul.mubr.bf16.gmra.mxu0 %v1400
        %v1458 = vpop.f32.mrf.mxu0
        %v1459 = vadd.f32 0.0, %v1458
        %v1460 = vpop.f32.mrf.mxu0
        %v1461 = vpop.f32.mrf.mxu0
        %v1462 = vadd.f32 0.0, %v1461
        %v1463 = vpop.f32.mrf.mxu0
        %1464 = vmatprep.mubr.bf16.mxu0 0
        %1465 = vmatmul.mubr.bf16.gmra.mxu0 %v1403
        %v1466 = vpop.f32.mrf.mxu0
        %v1467 = vadd.f32 0.0, %v1466
        %v1468 = vpop.f32.mrf.mxu0
        %v1469 = vpop.f32.mrf.mxu0
        %v1470 = vadd.f32 0.0, %v1469
        %v1471 = vpop.f32.mrf.mxu0
        %1472 = vdwg.mxu0
        %v1473 = vadd.f32 %v1315, %v1443
        %v1474 = vadd.f32 %v1316, %v1446
        %v1475 = vadd.f32 %v1317, %v1451
        %v1476 = vadd.f32 %v1318, %v1454
        %v1477 = vadd.f32 %v1319, %v1459
        %v1478 = vadd.f32 %v1320, %v1462
        %v1479 = vadd.f32 %v1321, %v1467
        %v1480 = vadd.f32 %v1322, %v1470
        %s1481 = scalar_lea.vmem [#allocation2], 16
        %v1482 = vld [vmem:[%s1481] sm:$0xf]
        %v1483 = vld [vmem:[%s1481 + $0x8] sm:$0xf]
        %v1484 = vld [vmem:[%s1481 + $0x10] sm:$0xf]
        %v1485 = vld [vmem:[%s1481 + $0x18] sm:$0xf]
        %v1486 = vld [vmem:[%s1481 + $0x20] sm:$0xf]
        %v1487 = vld [vmem:[%s1481 + $0x28] sm:$0xf]
        %v1488 = vld [vmem:[%s1481 + $0x30] sm:$0xf]
        %v1489 = vld [vmem:[%s1481 + $0x38] sm:$0xf]
        %s1490 = scalar_lea.vmem [#allocation7], 12
        %v1491 = vld [vmem:[%s1490] sm:$0x3]
        %v1500 = vunpack.c.l.b16 %v1482
        %v1501 = vunpack.c.l.b16 %v1483
        %v1502 = vunpack.c.l.b16 %v1484
        %v1503 = vunpack.c.l.b16 %v1485
        %v1504 = vunpack.c.l.b16 %v1486
        %v1505 = vunpack.c.l.b16 %v1487
        %v1506 = vunpack.c.l.b16 %v1488
        %v1507 = vunpack.c.l.b16 %v1489
        %v1508 = vpack.c.b16 %v1501, %v1500
        %v1509 = vpack.c.b16 %v1503, %v1502
        %v1510 = vpack.c.b16 %v1505, %v1504
        %v1511 = vpack.c.b16 %v1507, %v1506
        %v1513 = vsel %vm632, %v1508, 0
        %v1516 = vsel %vm632, %v1509, 0
        %v1519 = vsel %vm632, %v1510, 0
        %v1522 = vsel %vm632, %v1511, 0
        %v1525 = vsel %vm645, %v1491, 0
        %1527 = vmatprep.subr.bf16.mxu0 0
        %1528 = vmatpush1.bf16.msra.mxu0 0
        %1529 = vmatprep.subr.bf16.mxu0 0
        %1530 = vmatpush1.bf16.msra.mxu0 0
        %1531 = vmatprep.subr.bf16.mxu0 0
        %1532 = vmatpush1.bf16.msra.mxu0 0
        %1533 = vmatprep.subr.bf16.mxu0 0
        %1534 = vmatpush1.bf16.msra.mxu0 0
        %1535 = vmatprep.subr.bf16.mxu0 0
        %1536 = vmatpush1.bf16.msra.mxu0 0
        %1537 = vmatprep.subr.bf16.mxu0 0
        %1538 = vmatpush1.bf16.msra.mxu0 0
        %1539 = vmatprep.subr.bf16.mxu0 0
        %1540 = vmatpush1.bf16.msra.mxu0 0
        %1541 = vmatprep.subr.bf16.mxu0 0
        %1542 = vmatpush1.bf16.msra.mxu0 %v1525
        %1543 = vmatprep.subr.bf16.mxu0 0
        %1544 = vmatpush2.bf16.msra.mxu0 0
        %1545 = vmatprep.subr.bf16.mxu0 0
        %1546 = vmatpush2.bf16.msra.mxu0 0
        %1547 = vmatprep.subr.bf16.mxu0 0
        %1548 = vmatpush2.bf16.msra.mxu0 0
        %1549 = vmatprep.subr.bf16.mxu0 0
        %1550 = vmatpush2.bf16.msra.mxu0 0
        %1551 = vmatprep.subr.bf16.mxu0 0
        %1552 = vmatpush2.bf16.msra.mxu0 0
        %1553 = vmatprep.subr.bf16.mxu0 0
        %1554 = vmatpush2.bf16.msra.mxu0 0
        %1555 = vmatprep.subr.bf16.mxu0 0
        %1556 = vmatpush2.bf16.msra.mxu0 0
        %1557 = vmatprep.subr.bf16.mxu0 0
        %1558 = vmatpush2.bf16.msra.mxu0 0
        %1559 = vmatprep.mubr.bf16.mxu0 0
        %1560 = vmatmul.mubr.bf16.gmra.mxu0 %v1513
        %v1561 = vpop.f32.mrf.mxu0
        %v1562 = vadd.f32 0.0, %v1561
        %v1563 = vpop.f32.mrf.mxu0
        %v1564 = vpop.f32.mrf.mxu0
        %v1565 = vadd.f32 0.0, %v1564
        %v1566 = vpop.f32.mrf.mxu0
        %1567 = vmatprep.mubr.bf16.mxu0 0
        %1568 = vmatmul.mubr.bf16.gmra.mxu0 %v1516
        %v1569 = vpop.f32.mrf.mxu0
        %v1570 = vadd.f32 0.0, %v1569
        %v1571 = vpop.f32.mrf.mxu0
        %v1572 = vpop.f32.mrf.mxu0
        %v1573 = vadd.f32 0.0, %v1572
        %v1574 = vpop.f32.mrf.mxu0
        %1575 = vmatprep.mubr.bf16.mxu0 0
        %1576 = vmatmul.mubr.bf16.gmra.mxu0 %v1519
        %v1577 = vpop.f32.mrf.mxu0
        %v1578 = vadd.f32 0.0, %v1577
        %v1579 = vpop.f32.mrf.mxu0
        %v1580 = vpop.f32.mrf.mxu0
        %v1581 = vadd.f32 0.0, %v1580
        %v1582 = vpop.f32.mrf.mxu0
        %1583 = vmatprep.mubr.bf16.mxu0 0
        %1584 = vmatmul.mubr.bf16.gmra.mxu0 %v1522
        %v1585 = vpop.f32.mrf.mxu0
        %v1586 = vadd.f32 0.0, %v1585
        %v1587 = vpop.f32.mrf.mxu0
        %v1588 = vpop.f32.mrf.mxu0
        %v1589 = vadd.f32 0.0, %v1588
        %v1590 = vpop.f32.mrf.mxu0
        %1591 = vdwg.mxu0
        %v1592 = vadd.f32 %v1473, %v1562
        %v1593 = vadd.f32 %v1474, %v1565
        %v1594 = vadd.f32 %v1475, %v1570
        %v1595 = vadd.f32 %v1476, %v1573
        %v1596 = vadd.f32 %v1477, %v1578
        %v1597 = vadd.f32 %v1478, %v1581
        %v1598 = vadd.f32 %v1479, %v1586
        %v1599 = vadd.f32 %v1480, %v1589
        %v1600 = vld [vmem:[%s1481] sm:$0xf]
        %v1601 = vld [vmem:[%s1481 + $0x4] sm:$0x1]
        %v1602 = vld [vmem:[%s1481 + $0x8] sm:$0xf]
        %v1603 = vld [vmem:[%s1481 + $0xc] sm:$0x1]
        %v1604 = vld [vmem:[%s1481 + $0x10] sm:$0xf]
        %v1605 = vld [vmem:[%s1481 + $0x14] sm:$0x1]
        %v1606 = vld [vmem:[%s1481 + $0x18] sm:$0xf]
        %v1607 = vld [vmem:[%s1481 + $0x1c] sm:$0x1]
        %v1608 = vld [vmem:[%s1481 + $0x20] sm:$0xf]
        %v1609 = vld [vmem:[%s1481 + $0x24] sm:$0x1]
        %v1610 = vld [vmem:[%s1481 + $0x28] sm:$0xf]
        %v1611 = vld [vmem:[%s1481 + $0x2c] sm:$0x1]
        %v1612 = vld [vmem:[%s1481 + $0x30] sm:$0xf]
        %v1613 = vld [vmem:[%s1481 + $0x34] sm:$0x1]
        %v1614 = vld [vmem:[%s1481 + $0x38] sm:$0xf]
        %v1615 = vld [vmem:[%s1481 + $0x3c] sm:$0x1]
        %v1617 = vshrl.u32 %v1600, 16
        %v1619 = vrot.slane %v1617, 4
        %v1620 = vshll.u32 %v1600, 16
        %v1622 = vrot.slane %v1620, 5
        %v1623 = vor.u32 %v1619, %v1622
        %v1624 = vrot.slane %v1623, 4
        %v1626 = vshll.u32 %v1601, 16
        %v1628 = vrot.slane %v1626, 5
        %v1629 = vsel %vm505, %v1624, %v1628
        %v1631 = vshrl.u32 %v1602, 16
        %v1633 = vrot.slane %v1631, 4
        %v1634 = vshll.u32 %v1602, 16
        %v1636 = vrot.slane %v1634, 5
        %v1637 = vor.u32 %v1633, %v1636
        %v1638 = vrot.slane %v1637, 4
        %v1640 = vshll.u32 %v1603, 16
        %v1642 = vrot.slane %v1640, 5
        %v1643 = vsel %vm505, %v1638, %v1642
        %v1645 = vshrl.u32 %v1604, 16
        %v1647 = vrot.slane %v1645, 4
        %v1648 = vshll.u32 %v1604, 16
        %v1650 = vrot.slane %v1648, 5
        %v1651 = vor.u32 %v1647, %v1650
        %v1652 = vrot.slane %v1651, 4
        %v1654 = vshll.u32 %v1605, 16
        %v1656 = vrot.slane %v1654, 5
        %v1657 = vsel %vm505, %v1652, %v1656
        %v1659 = vshrl.u32 %v1606, 16
        %v1661 = vrot.slane %v1659, 4
        %v1662 = vshll.u32 %v1606, 16
        %v1664 = vrot.slane %v1662, 5
        %v1665 = vor.u32 %v1661, %v1664
        %v1666 = vrot.slane %v1665, 4
        %v1668 = vshll.u32 %v1607, 16
        %v1670 = vrot.slane %v1668, 5
        %v1671 = vsel %vm505, %v1666, %v1670
        %v1673 = vshrl.u32 %v1608, 16
        %v1675 = vrot.slane %v1673, 4
        %v1676 = vshll.u32 %v1608, 16
        %v1678 = vrot.slane %v1676, 5
        %v1679 = vor.u32 %v1675, %v1678
        %v1680 = vrot.slane %v1679, 4
        %v1682 = vshll.u32 %v1609, 16
        %v1684 = vrot.slane %v1682, 5
        %v1685 = vsel %vm505, %v1680, %v1684
        %v1687 = vshrl.u32 %v1610, 16
        %v1689 = vrot.slane %v1687, 4
        %v1690 = vshll.u32 %v1610, 16
        %v1692 = vrot.slane %v1690, 5
        %v1693 = vor.u32 %v1689, %v1692
        %v1694 = vrot.slane %v1693, 4
        %v1696 = vshll.u32 %v1611, 16
        %v1698 = vrot.slane %v1696, 5
        %v1699 = vsel %vm505, %v1694, %v1698
        %v1701 = vshrl.u32 %v1612, 16
        %v1703 = vrot.slane %v1701, 4
        %v1704 = vshll.u32 %v1612, 16
        %v1706 = vrot.slane %v1704, 5
        %v1707 = vor.u32 %v1703, %v1706
        %v1708 = vrot.slane %v1707, 4
        %v1710 = vshll.u32 %v1613, 16
        %v1712 = vrot.slane %v1710, 5
        %v1713 = vsel %vm505, %v1708, %v1712
        %v1715 = vshrl.u32 %v1614, 16
        %v1717 = vrot.slane %v1715, 4
        %v1718 = vshll.u32 %v1614, 16
        %v1720 = vrot.slane %v1718, 5
        %v1721 = vor.u32 %v1717, %v1720
        %v1722 = vrot.slane %v1721, 4
        %v1724 = vshll.u32 %v1615, 16
        %v1726 = vrot.slane %v1724, 5
        %v1727 = vsel %vm505, %v1722, %v1726
        %s1728 = scalar_lea.vmem [#allocation7], 14
        %v1729 = vld [vmem:[%s1728] sm:$0x3]
        %v1730 = vunpack.c.l.b16 %v1629
        %v1731 = vunpack.c.l.b16 %v1643
        %v1732 = vunpack.c.l.b16 %v1657
        %v1733 = vunpack.c.l.b16 %v1671
        %v1734 = vunpack.c.l.b16 %v1685
        %v1735 = vunpack.c.l.b16 %v1699
        %v1736 = vunpack.c.l.b16 %v1713
        %v1737 = vunpack.c.l.b16 %v1727
        %v1738 = vpack.c.b16 %v1731, %v1730
        %v1739 = vpack.c.b16 %v1733, %v1732
        %v1740 = vpack.c.b16 %v1735, %v1734
        %v1741 = vpack.c.b16 %v1737, %v1736
        %v1743 = vsel %vm632, %v1738, 0
        %v1746 = vsel %vm632, %v1739, 0
        %v1749 = vsel %vm632, %v1740, 0
        %v1752 = vsel %vm632, %v1741, 0
        %v1755 = vsel %vm645, %v1729, 0
        %1757 = vmatprep.subr.bf16.mxu0 0
        %1758 = vmatpush1.bf16.msra.mxu0 0
        %1759 = vmatprep.subr.bf16.mxu0 0
        %1760 = vmatpush1.bf16.msra.mxu0 0
        %1761 = vmatprep.subr.bf16.mxu0 0
        %1762 = vmatpush1.bf16.msra.mxu0 0
        %1763 = vmatprep.subr.bf16.mxu0 0
        %1764 = vmatpush1.bf16.msra.mxu0 0
        %1765 = vmatprep.subr.bf16.mxu0 0
        %1766 = vmatpush1.bf16.msra.mxu0 0
        %1767 = vmatprep.subr.bf16.mxu0 0
        %1768 = vmatpush1.bf16.msra.mxu0 0
        %1769 = vmatprep.subr.bf16.mxu0 0
        %1770 = vmatpush1.bf16.msra.mxu0 0
        %1771 = vmatprep.subr.bf16.mxu0 0
        %1772 = vmatpush1.bf16.msra.mxu0 %v1755
        %1773 = vmatprep.subr.bf16.mxu0 0
        %1774 = vmatpush2.bf16.msra.mxu0 0
        %1775 = vmatprep.subr.bf16.mxu0 0
        %1776 = vmatpush2.bf16.msra.mxu0 0
        %1777 = vmatprep.subr.bf16.mxu0 0
        %1778 = vmatpush2.bf16.msra.mxu0 0
        %1779 = vmatprep.subr.bf16.mxu0 0
        %1780 = vmatpush2.bf16.msra.mxu0 0
        %1781 = vmatprep.subr.bf16.mxu0 0
        %1782 = vmatpush2.bf16.msra.mxu0 0
        %1783 = vmatprep.subr.bf16.mxu0 0
        %1784 = vmatpush2.bf16.msra.mxu0 0
        %1785 = vmatprep.subr.bf16.mxu0 0
        %1786 = vmatpush2.bf16.msra.mxu0 0
        %1787 = vmatprep.subr.bf16.mxu0 0
        %1788 = vmatpush2.bf16.msra.mxu0 0
        %1789 = vmatprep.mubr.bf16.mxu0 0
        %1790 = vmatmul.mubr.bf16.gmra.mxu0 %v1743
        %v1791 = vpop.f32.mrf.mxu0
        %v1792 = vadd.f32 0.0, %v1791
        %v1793 = vpop.f32.mrf.mxu0
        %v1794 = vpop.f32.mrf.mxu0
        %v1795 = vadd.f32 0.0, %v1794
        %v1796 = vpop.f32.mrf.mxu0
        %1797 = vmatprep.mubr.bf16.mxu0 0
        %1798 = vmatmul.mubr.bf16.gmra.mxu0 %v1746
        %v1799 = vpop.f32.mrf.mxu0
        %v1800 = vadd.f32 0.0, %v1799
        %v1801 = vpop.f32.mrf.mxu0
        %v1802 = vpop.f32.mrf.mxu0
        %v1803 = vadd.f32 0.0, %v1802
        %v1804 = vpop.f32.mrf.mxu0
        %1805 = vmatprep.mubr.bf16.mxu0 0
        %1806 = vmatmul.mubr.bf16.gmra.mxu0 %v1749
        %v1807 = vpop.f32.mrf.mxu0
        %v1808 = vadd.f32 0.0, %v1807
        %v1809 = vpop.f32.mrf.mxu0
        %v1810 = vpop.f32.mrf.mxu0
        %v1811 = vadd.f32 0.0, %v1810
        %v1812 = vpop.f32.mrf.mxu0
        %1813 = vmatprep.mubr.bf16.mxu0 0
        %1814 = vmatmul.mubr.bf16.gmra.mxu0 %v1752
        %v1815 = vpop.f32.mrf.mxu0
        %v1816 = vadd.f32 0.0, %v1815
        %v1817 = vpop.f32.mrf.mxu0
        %v1818 = vpop.f32.mrf.mxu0
        %v1819 = vadd.f32 0.0, %v1818
        %v1820 = vpop.f32.mrf.mxu0
        %1821 = vdwg.mxu0
        %v1822 = vadd.f32 %v1592, %v1792
        %v1823 = vadd.f32 %v1593, %v1795
        %v1824 = vadd.f32 %v1594, %v1800
        %v1825 = vadd.f32 %v1595, %v1803
        %v1826 = vadd.f32 %v1596, %v1808
        %v1827 = vadd.f32 %v1597, %v1811
        %v1828 = vadd.f32 %v1598, %v1816
        %v1829 = vadd.f32 %v1599, %v1819
        %v1830 = vld [vmem:[%s1481] sm:$0xe]
        %v1831 = vld [vmem:[%s1481 + $0x8] sm:$0xe]
        %v1832 = vld [vmem:[%s1481 + $0x10] sm:$0xe]
        %v1833 = vld [vmem:[%s1481 + $0x18] sm:$0xe]
        %v1834 = vld [vmem:[%s1481 + $0x20] sm:$0xe]
        %v1835 = vld [vmem:[%s1481 + $0x28] sm:$0xe]
        %v1836 = vld [vmem:[%s1481 + $0x30] sm:$0xe]
        %v1837 = vld [vmem:[%s1481 + $0x38] sm:$0xe]
        %v1854 = vrot.slane %v1830, 5
        %v1855 = vrot.slane %v1854, 4
        %v1856 = vrot.slane %v1601, 5
        %v1857 = vsel %vm840, %v1855, %v1856
        %v1858 = vrot.slane %v1831, 5
        %v1859 = vrot.slane %v1858, 4
        %v1860 = vrot.slane %v1603, 5
        %v1861 = vsel %vm840, %v1859, %v1860
        %v1862 = vrot.slane %v1832, 5
        %v1863 = vrot.slane %v1862, 4
        %v1864 = vrot.slane %v1605, 5
        %v1865 = vsel %vm840, %v1863, %v1864
        %v1866 = vrot.slane %v1833, 5
        %v1867 = vrot.slane %v1866, 4
        %v1868 = vrot.slane %v1607, 5
        %v1869 = vsel %vm840, %v1867, %v1868
        %v1870 = vrot.slane %v1834, 5
        %v1871 = vrot.slane %v1870, 4
        %v1872 = vrot.slane %v1609, 5
        %v1873 = vsel %vm840, %v1871, %v1872
        %v1874 = vrot.slane %v1835, 5
        %v1875 = vrot.slane %v1874, 4
        %v1876 = vrot.slane %v1611, 5
        %v1877 = vsel %vm840, %v1875, %v1876
        %v1878 = vrot.slane %v1836, 5
        %v1879 = vrot.slane %v1878, 4
        %v1880 = vrot.slane %v1613, 5
        %v1881 = vsel %vm840, %v1879, %v1880
        %v1882 = vrot.slane %v1837, 5
        %v1883 = vrot.slane %v1882, 4
        %v1884 = vrot.slane %v1615, 5
        %v1885 = vsel %vm840, %v1883, %v1884
        %s1886 = scalar_lea.vmem [#allocation7], 16
        %v1887 = vld [vmem:[%s1886] sm:$0x3]
        %v1888 = vunpack.c.l.b16 %v1857
        %v1889 = vunpack.c.l.b16 %v1861
        %v1890 = vunpack.c.l.b16 %v1865
        %v1891 = vunpack.c.l.b16 %v1869
        %v1892 = vunpack.c.l.b16 %v1873
        %v1893 = vunpack.c.l.b16 %v1877
        %v1894 = vunpack.c.l.b16 %v1881
        %v1895 = vunpack.c.l.b16 %v1885
        %v1896 = vpack.c.b16 %v1889, %v1888
        %v1897 = vpack.c.b16 %v1891, %v1890
        %v1898 = vpack.c.b16 %v1893, %v1892
        %v1899 = vpack.c.b16 %v1895, %v1894
        %v1901 = vsel %vm632, %v1896, 0
        %v1904 = vsel %vm632, %v1897, 0
        %v1907 = vsel %vm632, %v1898, 0
        %v1910 = vsel %vm632, %v1899, 0
        %v1913 = vsel %vm645, %v1887, 0
        %1915 = vmatprep.subr.bf16.mxu0 0
        %1916 = vmatpush1.bf16.msra.mxu0 0
        %1917 = vmatprep.subr.bf16.mxu0 0
        %1918 = vmatpush1.bf16.msra.mxu0 0
        %1919 = vmatprep.subr.bf16.mxu0 0
        %1920 = vmatpush1.bf16.msra.mxu0 0
        %1921 = vmatprep.subr.bf16.mxu0 0
        %1922 = vmatpush1.bf16.msra.mxu0 0
        %1923 = vmatprep.subr.bf16.mxu0 0
        %1924 = vmatpush1.bf16.msra.mxu0 0
        %1925 = vmatprep.subr.bf16.mxu0 0
        %1926 = vmatpush1.bf16.msra.mxu0 0
        %1927 = vmatprep.subr.bf16.mxu0 0
        %1928 = vmatpush1.bf16.msra.mxu0 0
        %1929 = vmatprep.subr.bf16.mxu0 0
        %1930 = vmatpush1.bf16.msra.mxu0 %v1913
        %1931 = vmatprep.subr.bf16.mxu0 0
        %1932 = vmatpush2.bf16.msra.mxu0 0
        %1933 = vmatprep.subr.bf16.mxu0 0
        %1934 = vmatpush2.bf16.msra.mxu0 0
        %1935 = vmatprep.subr.bf16.mxu0 0
        %1936 = vmatpush2.bf16.msra.mxu0 0
        %1937 = vmatprep.subr.bf16.mxu0 0
        %1938 = vmatpush2.bf16.msra.mxu0 0
        %1939 = vmatprep.subr.bf16.mxu0 0
        %1940 = vmatpush2.bf16.msra.mxu0 0
        %1941 = vmatprep.subr.bf16.mxu0 0
        %1942 = vmatpush2.bf16.msra.mxu0 0
        %1943 = vmatprep.subr.bf16.mxu0 0
        %1944 = vmatpush2.bf16.msra.mxu0 0
        %1945 = vmatprep.subr.bf16.mxu0 0
        %1946 = vmatpush2.bf16.msra.mxu0 0
        %1947 = vmatprep.mubr.bf16.mxu0 0
        %1948 = vmatmul.mubr.bf16.gmra.mxu0 %v1901
        %v1949 = vpop.f32.mrf.mxu0
        %v1950 = vadd.f32 0.0, %v1949
        %v1951 = vpop.f32.mrf.mxu0
        %v1952 = vpop.f32.mrf.mxu0
        %v1953 = vadd.f32 0.0, %v1952
        %v1954 = vpop.f32.mrf.mxu0
        %1955 = vmatprep.mubr.bf16.mxu0 0
        %1956 = vmatmul.mubr.bf16.gmra.mxu0 %v1904
        %v1957 = vpop.f32.mrf.mxu0
        %v1958 = vadd.f32 0.0, %v1957
        %v1959 = vpop.f32.mrf.mxu0
        %v1960 = vpop.f32.mrf.mxu0
        %v1961 = vadd.f32 0.0, %v1960
        %v1962 = vpop.f32.mrf.mxu0
        %1963 = vmatprep.mubr.bf16.mxu0 0
        %1964 = vmatmul.mubr.bf16.gmra.mxu0 %v1907
        %v1965 = vpop.f32.mrf.mxu0
        %v1966 = vadd.f32 0.0, %v1965
        %v1967 = vpop.f32.mrf.mxu0
        %v1968 = vpop.f32.mrf.mxu0
        %v1969 = vadd.f32 0.0, %v1968
        %v1970 = vpop.f32.mrf.mxu0
        %1971 = vmatprep.mubr.bf16.mxu0 0
        %1972 = vmatmul.mubr.bf16.gmra.mxu0 %v1910
        %v1973 = vpop.f32.mrf.mxu0
        %v1974 = vadd.f32 0.0, %v1973
        %v1975 = vpop.f32.mrf.mxu0
        %v1976 = vpop.f32.mrf.mxu0
        %v1977 = vadd.f32 0.0, %v1976
        %v1978 = vpop.f32.mrf.mxu0
        %1979 = vdwg.mxu0
        %v1980 = vadd.f32 %v1822, %v1950
        %v1981 = vadd.f32 %v1823, %v1953
        %v1982 = vadd.f32 %v1824, %v1958
        %v1983 = vadd.f32 %v1825, %v1961
        %v1984 = vadd.f32 %v1826, %v1966
        %v1985 = vadd.f32 %v1827, %v1969
        %v1986 = vadd.f32 %v1828, %v1974
        %v1987 = vadd.f32 %v1829, %v1977
        %v1988 = vadd.f32 %v1980, %v1981
        %v1989 = vadd.f32 %v1988, %v1982
        %v1990 = vadd.f32 %v1989, %v1983
        %v1991 = vadd.f32 %v1990, %v1984
        %v1992 = vadd.f32 %v1991, %v1985
        %v1993 = vadd.f32 %v1992, %v1986
        %v1994 = vadd.f32 %v1993, %v1987
        %v1995 = vrot.slane %v1994, 4
        %v1996 = vadd.f32 %v1994, %v1995
        %v1997 = vrot.slane %v1996, 2
        %v1998 = vadd.f32 %v1996, %v1997
        %v1999 = vrot.slane %v1998, 1
        %v2000 = vadd.f32 %v1998, %v1999
        %v2001 = vmul.f32 %v1980, %v1980
        %v2002 = vmul.f32 %v1981, %v1981
        %v2003 = vmul.f32 %v1982, %v1982
        %v2004 = vmul.f32 %v1983, %v1983
        %v2005 = vmul.f32 %v1984, %v1984
        %v2006 = vmul.f32 %v1985, %v1985
        %v2007 = vmul.f32 %v1986, %v1986
        %v2008 = vmul.f32 %v1987, %v1987
        %v2009 = vadd.f32 %v2001, %v2002
        %v2010 = vadd.f32 %v2009, %v2003
        %v2011 = vadd.f32 %v2010, %v2004
        %v2012 = vadd.f32 %v2011, %v2005
        %v2013 = vadd.f32 %v2012, %v2006
        %v2014 = vadd.f32 %v2013, %v2007
        %v2015 = vadd.f32 %v2014, %v2008
        %v2016 = vrot.slane %v2015, 4
        %v2017 = vadd.f32 %v2015, %v2016
        %v2018 = vrot.slane %v2017, 2
        %v2019 = vadd.f32 %v2017, %v2018
        %v2020 = vrot.slane %v2019, 1
        %v2021 = vadd.f32 %v2019, %v2020
        %v2022 = vmul.f32 %v2000, 0.015625
        %v2023 = vmul.f32 %v2021, 0.015625
        %v2024 = vmul.f32 %v2022, %v2022
        %v2025 = vsub.f32 %v2023, %v2024
        %v2026 = vmax.f32 %v2025, 0.0
        %v2027 = vadd.f32 %v2026, 1e-05
        %v2028 = vrsqrt.pop %v2027
        %2029 = vst [vmem:[#allocation3] sm:$0xf] 0
        %2030 = vst [vmem:[#allocation3 + $0x4] sm:$0x1] 0
        %s2031 = scalar_lea.vmem [#allocation3], 72
        %2032 = vst [vmem:[%s2031] sm:$0xf] 0
        %2033 = vst [vmem:[%s2031 + $0x4] sm:$0x1] 0
        %vm2034 = vcmask 1040384
        %vm2035 = vmand %vm2034, %vm291
        %v2036 = vld [vmem:[#allocation3] sm:$0x1]
        %v2037 = vsel %vm2035, 0, %v2036
        %2038 = vst [vmem:[#allocation3] sm:$0x1] %v2037
        %v2039 = vld [vmem:[#allocation3 + $0x8] sm:$0x1]
        %v2040 = vsel %vm2035, 0, %v2039
        %2041 = vst [vmem:[#allocation3 + $0x8] sm:$0x1] %v2040
        %v2042 = vld [vmem:[#allocation3 + $0x10] sm:$0x1]
        %v2043 = vsel %vm2035, 0, %v2042
        %2044 = vst [vmem:[#allocation3 + $0x10] sm:$0x1] %v2043
        %v2045 = vld [vmem:[#allocation3 + $0x18] sm:$0x1]
        %v2046 = vsel %vm2035, 0, %v2045
        %2047 = vst [vmem:[#allocation3 + $0x18] sm:$0x1] %v2046
        %v2048 = vld [vmem:[#allocation3 + $0x20] sm:$0x1]
        %v2049 = vsel %vm2035, 0, %v2048
        %2050 = vst [vmem:[#allocation3 + $0x20] sm:$0x1] %v2049
        %v2051 = vld [vmem:[#allocation3 + $0x28] sm:$0x1]
        %v2052 = vsel %vm2035, 0, %v2051
        %2053 = vst [vmem:[#allocation3 + $0x28] sm:$0x1] %v2052
        %v2054 = vld [vmem:[#allocation3 + $0x30] sm:$0x1]
        %v2055 = vsel %vm2035, 0, %v2054
        %2056 = vst [vmem:[#allocation3 + $0x30] sm:$0x1] %v2055
        %v2057 = vld [vmem:[#allocation3 + $0x38] sm:$0x1]
        %v2058 = vsel %vm2035, 0, %v2057
        %2059 = vst [vmem:[#allocation3 + $0x38] sm:$0x1] %v2058
        %v2060 = vld [vmem:[#allocation3 + $0x40] sm:$0x1]
        %v2061 = vsel %vm2035, 0, %v2060
        %2062 = vst [vmem:[#allocation3 + $0x40] sm:$0x1] %v2061
        %v2063 = vld [vmem:[#allocation3 + $0x48] sm:$0x1]
        %v2064 = vsel %vm2035, 0, %v2063
        %2065 = vst [vmem:[#allocation3 + $0x48] sm:$0x1] %v2064
        %vm2066 = vmand %vm2034, %vm323
        %v2067 = vld [vmem:[#allocation3 + $0x4] sm:$0x1]
        %v2068 = vsel %vm2066, 0, %v2067
        %2069 = vst [vmem:[#allocation3 + $0x4] sm:$0x1] %v2068
        %v2070 = vld [vmem:[#allocation3 + $0xc] sm:$0x1]
        %v2071 = vsel %vm2066, 0, %v2070
        %2072 = vst [vmem:[#allocation3 + $0xc] sm:$0x1] %v2071
        %v2073 = vld [vmem:[#allocation3 + $0x14] sm:$0x1]
        %v2074 = vsel %vm2066, 0, %v2073
        %2075 = vst [vmem:[#allocation3 + $0x14] sm:$0x1] %v2074
        %v2076 = vld [vmem:[#allocation3 + $0x1c] sm:$0x1]
        %v2077 = vsel %vm2066, 0, %v2076
        %2078 = vst [vmem:[#allocation3 + $0x1c] sm:$0x1] %v2077
        %v2079 = vld [vmem:[#allocation3 + $0x24] sm:$0x1]
        %v2080 = vsel %vm2066, 0, %v2079
        %2081 = vst [vmem:[#allocation3 + $0x24] sm:$0x1] %v2080
        %v2082 = vld [vmem:[#allocation3 + $0x2c] sm:$0x1]
        %v2083 = vsel %vm2066, 0, %v2082
        %2084 = vst [vmem:[#allocation3 + $0x2c] sm:$0x1] %v2083
        %v2085 = vld [vmem:[#allocation3 + $0x34] sm:$0x1]
        %v2086 = vsel %vm2066, 0, %v2085
        %2087 = vst [vmem:[#allocation3 + $0x34] sm:$0x1] %v2086
        %v2088 = vld [vmem:[#allocation3 + $0x3c] sm:$0x1]
        %v2089 = vsel %vm2066, 0, %v2088
        %2090 = vst [vmem:[#allocation3 + $0x3c] sm:$0x1] %v2089
        %v2091 = vld [vmem:[#allocation3 + $0x44] sm:$0x1]
        %v2092 = vsel %vm2066, 0, %v2091
        %2093 = vst [vmem:[#allocation3 + $0x44] sm:$0x1] %v2092
        %v2094 = vld [vmem:[#allocation3 + $0x4c] sm:$0x1]
        %v2095 = vsel %vm2066, 0, %v2094
        %2096 = vst [vmem:[#allocation3 + $0x4c] sm:$0x1] %v2095
        %v2097 = vsub.f32 %v1980, %v2022
        %v2098 = vsub.f32 %v1981, %v2022
        %v2099 = vsub.f32 %v1982, %v2022
        %v2100 = vsub.f32 %v1983, %v2022
        %v2101 = vsub.f32 %v1984, %v2022
        %v2102 = vsub.f32 %v1985, %v2022
        %v2103 = vsub.f32 %v1986, %v2022
        %v2104 = vsub.f32 %v1987, %v2022
        %v2105 = vmul.f32 %v2097, %v2028
        %v2106 = vmul.f32 %v2098, %v2028
        %v2107 = vmul.f32 %v2099, %v2028
        %v2108 = vmul.f32 %v2100, %v2028
        %v2109 = vmul.f32 %v2101, %v2028
        %v2110 = vmul.f32 %v2102, %v2028
        %v2111 = vmul.f32 %v2103, %v2028
        %v2112 = vmul.f32 %v2104, %v2028
        %v2113 = vmax.f32 %v2105, 0.0
        %v2114 = vmax.f32 %v2106, 0.0
        %v2115 = vmax.f32 %v2107, 0.0
        %v2116 = vmax.f32 %v2108, 0.0
        %v2117 = vmax.f32 %v2109, 0.0
        %v2118 = vmax.f32 %v2110, 0.0
        %v2119 = vmax.f32 %v2111, 0.0
        %v2120 = vmax.f32 %v2112, 0.0
        %v2121 = vpack.c.bf16 %v2114, %v2113
        %v2122 = vpack.c.bf16 %v2116, %v2115
        %v2123 = vpack.c.bf16 %v2118, %v2117
        %v2124 = vpack.c.bf16 %v2120, %v2119
        %v2129 = vunpack.c.l.b16 %v2121
        %v2130 = vunpack.c.h.b16 %v2121
        %v2131 = vunpack.c.l.b16 %v2122
        %v2132 = vunpack.c.h.b16 %v2122
        %v2133 = vunpack.c.l.b16 %v2123
        %v2134 = vunpack.c.h.b16 %v2123
        %v2135 = vunpack.c.l.b16 %v2124
        %v2136 = vunpack.c.h.b16 %v2124
        %v2137 = vpack.c.b16 %v2129, %v2129
        %v2138 = vpack.c.b16 %v2130, %v2130
        %v2139 = vpack.c.b16 %v2131, %v2131
        %v2140 = vpack.c.b16 %v2132, %v2132
        %v2141 = vpack.c.b16 %v2133, %v2133
        %v2142 = vpack.c.b16 %v2134, %v2134
        %v2143 = vpack.c.b16 %v2135, %v2135
        %v2144 = vpack.c.b16 %v2136, %v2136
        %v2146 = vshrl.u32 %v2137, 16
        %v2148 = vrot.slane %v2146, 7
        %v2149 = vshll.u32 %v2137, 16
        %v2151 = vor.u32 %v2148, %v2149
        %v2152 = vrot.slane %v2148, 4
        %v2154 = vshrl.u32 %v2138, 16
        %v2156 = vrot.slane %v2154, 7
        %v2157 = vshll.u32 %v2138, 16
        %v2159 = vor.u32 %v2156, %v2157
        %v2160 = vrot.slane %v2156, 4
        %v2162 = vshrl.u32 %v2139, 16
        %v2164 = vrot.slane %v2162, 7
        %v2165 = vshll.u32 %v2139, 16
        %v2167 = vor.u32 %v2164, %v2165
        %v2168 = vrot.slane %v2164, 4
        %v2170 = vshrl.u32 %v2140, 16
        %v2172 = vrot.slane %v2170, 7
        %v2173 = vshll.u32 %v2140, 16
        %v2175 = vor.u32 %v2172, %v2173
        %v2176 = vrot.slane %v2172, 4
        %v2178 = vshrl.u32 %v2141, 16
        %v2180 = vrot.slane %v2178, 7
        %v2181 = vshll.u32 %v2141, 16
        %v2183 = vor.u32 %v2180, %v2181
        %v2184 = vrot.slane %v2180, 4
        %v2186 = vshrl.u32 %v2142, 16
        %v2188 = vrot.slane %v2186, 7
        %v2189 = vshll.u32 %v2142, 16
        %v2191 = vor.u32 %v2188, %v2189
        %v2192 = vrot.slane %v2188, 4
        %v2194 = vshrl.u32 %v2143, 16
        %v2196 = vrot.slane %v2194, 7
        %v2197 = vshll.u32 %v2143, 16
        %v2199 = vor.u32 %v2196, %v2197
        %v2200 = vrot.slane %v2196, 4
        %v2202 = vshrl.u32 %v2144, 16
        %v2204 = vrot.slane %v2202, 7
        %v2205 = vshll.u32 %v2144, 16
        %v2207 = vor.u32 %v2204, %v2205
        %v2208 = vrot.slane %v2204, 4
        %s2225 = scalar_lea.vmem [#allocation3], 8
        %vm2226 = vcmask 1043456
        %vm2227 = vmand %vm2226, %vm323
        %v2228 = vld [vmem:[%s2225] sm:$0xf]
        %v2229 = vsel %vm2227, %v2151, %v2228
        %2230 = vst [vmem:[%s2225] sm:$0xf] %v2229
        %v2231 = vld [vmem:[%s2225 + $0x4] sm:$0x1]
        %v2232 = vsel %vm2035, %v2152, %v2231
        %2233 = vst [vmem:[%s2225 + $0x4] sm:$0x1] %v2232
        %v2234 = vld [vmem:[%s2225 + $0x8] sm:$0xf]
        %v2235 = vsel %vm2227, %v2159, %v2234
        %2236 = vst [vmem:[%s2225 + $0x8] sm:$0xf] %v2235
        %v2237 = vld [vmem:[%s2225 + $0xc] sm:$0x1]
        %v2238 = vsel %vm2035, %v2160, %v2237
        %2239 = vst [vmem:[%s2225 + $0xc] sm:$0x1] %v2238
        %v2240 = vld [vmem:[%s2225 + $0x10] sm:$0xf]
        %v2241 = vsel %vm2227, %v2167, %v2240
        %2242 = vst [vmem:[%s2225 + $0x10] sm:$0xf] %v2241
        %v2243 = vld [vmem:[%s2225 + $0x14] sm:$0x1]
        %v2244 = vsel %vm2035, %v2168, %v2243
        %2245 = vst [vmem:[%s2225 + $0x14] sm:$0x1] %v2244
        %v2246 = vld [vmem:[%s2225 + $0x18] sm:$0xf]
        %v2247 = vsel %vm2227, %v2175, %v2246
        %2248 = vst [vmem:[%s2225 + $0x18] sm:$0xf] %v2247
        %v2249 = vld [vmem:[%s2225 + $0x1c] sm:$0x1]
        %v2250 = vsel %vm2035, %v2176, %v2249
        %2251 = vst [vmem:[%s2225 + $0x1c] sm:$0x1] %v2250
        %v2252 = vld [vmem:[%s2225 + $0x20] sm:$0xf]
        %v2253 = vsel %vm2227, %v2183, %v2252
        %2254 = vst [vmem:[%s2225 + $0x20] sm:$0xf] %v2253
        %v2255 = vld [vmem:[%s2225 + $0x24] sm:$0x1]
        %v2256 = vsel %vm2035, %v2184, %v2255
        %2257 = vst [vmem:[%s2225 + $0x24] sm:$0x1] %v2256
        %v2258 = vld [vmem:[%s2225 + $0x28] sm:$0xf]
        %v2259 = vsel %vm2227, %v2191, %v2258
        %2260 = vst [vmem:[%s2225 + $0x28] sm:$0xf] %v2259
        %v2261 = vld [vmem:[%s2225 + $0x2c] sm:$0x1]
        %v2262 = vsel %vm2035, %v2192, %v2261
        %2263 = vst [vmem:[%s2225 + $0x2c] sm:$0x1] %v2262
        %v2264 = vld [vmem:[%s2225 + $0x30] sm:$0xf]
        %v2265 = vsel %vm2227, %v2199, %v2264
        %2266 = vst [vmem:[%s2225 + $0x30] sm:$0xf] %v2265
        %v2267 = vld [vmem:[%s2225 + $0x34] sm:$0x1]
        %v2268 = vsel %vm2035, %v2200, %v2267
        %2269 = vst [vmem:[%s2225 + $0x34] sm:$0x1] %v2268
        %v2270 = vld [vmem:[%s2225 + $0x38] sm:$0xf]
        %v2271 = vsel %vm2227, %v2207, %v2270
        %2272 = vst [vmem:[%s2225 + $0x38] sm:$0xf] %v2271
        %v2273 = vld [vmem:[%s2225 + $0x3c] sm:$0x1]
        %v2274 = vsel %vm2035, %v2208, %v2273
        %2275 = vst [vmem:[%s2225 + $0x3c] sm:$0x1] %v2274
        %v2276 = vld [vmem:[#allocation3] sm:$0xf]
        %v2277 = vld [vmem:[#allocation3 + $0x8] sm:$0xf]
        %v2278 = vld [vmem:[#allocation3 + $0x10] sm:$0xf]
        %v2279 = vld [vmem:[#allocation3 + $0x18] sm:$0xf]
        %v2280 = vld [vmem:[#allocation3 + $0x20] sm:$0xf]
        %v2281 = vld [vmem:[#allocation3 + $0x28] sm:$0xf]
        %v2282 = vld [vmem:[#allocation3 + $0x30] sm:$0xf]
        %v2283 = vld [vmem:[#allocation3 + $0x38] sm:$0xf]
        %v2284 = vld [vmem:[#allocation9] sm:$0xf]
        %v2285 = vld [vmem:[#allocation9 + $0x4] sm:$0xf]
        %v2286 = vld [vmem:[#allocation9 + $0x8] sm:$0xf]
        %v2287 = vld [vmem:[#allocation9 + $0xc] sm:$0xf]
        %v2288 = vld [vmem:[#allocation9 + $0x10] sm:$0xf]
        %v2289 = vld [vmem:[#allocation9 + $0x14] sm:$0xf]
        %v2290 = vld [vmem:[#allocation9 + $0x18] sm:$0xf]
        %v2291 = vld [vmem:[#allocation9 + $0x1c] sm:$0xf]
        %v2292 = vld [vmem:[#allocation9 + $0x20] sm:$0xf]
        %v2293 = vld [vmem:[#allocation9 + $0x24] sm:$0xf]
        %v2294 = vld [vmem:[#allocation9 + $0x28] sm:$0xf]
        %v2295 = vld [vmem:[#allocation9 + $0x2c] sm:$0xf]
        %v2296 = vld [vmem:[#allocation9 + $0x30] sm:$0xf]
        %v2297 = vld [vmem:[#allocation9 + $0x34] sm:$0xf]
        %v2298 = vld [vmem:[#allocation9 + $0x38] sm:$0xf]
        %v2299 = vld [vmem:[#allocation9 + $0x3c] sm:$0xf]
        %v2300 = vld [vmem:[#allocation3 + $0x4] sm:$0x1]
        %v2301 = vld [vmem:[#allocation3 + $0xc] sm:$0x1]
        %v2302 = vld [vmem:[#allocation3 + $0x14] sm:$0x1]
        %v2303 = vld [vmem:[#allocation3 + $0x1c] sm:$0x1]
        %v2304 = vld [vmem:[#allocation3 + $0x24] sm:$0x1]
        %v2305 = vld [vmem:[#allocation3 + $0x2c] sm:$0x1]
        %v2306 = vld [vmem:[#allocation3 + $0x34] sm:$0x1]
        %v2307 = vld [vmem:[#allocation3 + $0x3c] sm:$0x1]
        %v2309 = vshrl.u32 %v2276, 16
        %v2311 = vrot.slane %v2309, 4
        %v2312 = vshll.u32 %v2276, 16
        %v2314 = vrot.slane %v2312, 5
        %v2315 = vor.u32 %v2311, %v2314
        %v2316 = vrot.slane %v2315, 4
        %v2318 = vshll.u32 %v2300, 16
        %v2320 = vrot.slane %v2318, 5
        %v2321 = vsel %vm505, %v2316, %v2320
        %v2323 = vshrl.u32 %v2277, 16
        %v2325 = vrot.slane %v2323, 4
        %v2326 = vshll.u32 %v2277, 16
        %v2328 = vrot.slane %v2326, 5
        %v2329 = vor.u32 %v2325, %v2328
        %v2330 = vrot.slane %v2329, 4
        %v2332 = vshll.u32 %v2301, 16
        %v2334 = vrot.slane %v2332, 5
        %v2335 = vsel %vm505, %v2330, %v2334
        %v2337 = vshrl.u32 %v2278, 16
        %v2339 = vrot.slane %v2337, 4
        %v2340 = vshll.u32 %v2278, 16
        %v2342 = vrot.slane %v2340, 5
        %v2343 = vor.u32 %v2339, %v2342
        %v2344 = vrot.slane %v2343, 4
        %v2346 = vshll.u32 %v2302, 16
        %v2348 = vrot.slane %v2346, 5
        %v2349 = vsel %vm505, %v2344, %v2348
        %v2351 = vshrl.u32 %v2279, 16
        %v2353 = vrot.slane %v2351, 4
        %v2354 = vshll.u32 %v2279, 16
        %v2356 = vrot.slane %v2354, 5
        %v2357 = vor.u32 %v2353, %v2356
        %v2358 = vrot.slane %v2357, 4
        %v2360 = vshll.u32 %v2303, 16
        %v2362 = vrot.slane %v2360, 5
        %v2363 = vsel %vm505, %v2358, %v2362
        %v2365 = vshrl.u32 %v2280, 16
        %v2367 = vrot.slane %v2365, 4
        %v2368 = vshll.u32 %v2280, 16
        %v2370 = vrot.slane %v2368, 5
        %v2371 = vor.u32 %v2367, %v2370
        %v2372 = vrot.slane %v2371, 4
        %v2374 = vshll.u32 %v2304, 16
        %v2376 = vrot.slane %v2374, 5
        %v2377 = vsel %vm505, %v2372, %v2376
        %v2379 = vshrl.u32 %v2281, 16
        %v2381 = vrot.slane %v2379, 4
        %v2382 = vshll.u32 %v2281, 16
        %v2384 = vrot.slane %v2382, 5
        %v2385 = vor.u32 %v2381, %v2384
        %v2386 = vrot.slane %v2385, 4
        %v2388 = vshll.u32 %v2305, 16
        %v2390 = vrot.slane %v2388, 5
        %v2391 = vsel %vm505, %v2386, %v2390
        %v2393 = vshrl.u32 %v2282, 16
        %v2395 = vrot.slane %v2393, 4
        %v2396 = vshll.u32 %v2282, 16
        %v2398 = vrot.slane %v2396, 5
        %v2399 = vor.u32 %v2395, %v2398
        %v2400 = vrot.slane %v2399, 4
        %v2402 = vshll.u32 %v2306, 16
        %v2404 = vrot.slane %v2402, 5
        %v2405 = vsel %vm505, %v2400, %v2404
        %v2407 = vshrl.u32 %v2283, 16
        %v2409 = vrot.slane %v2407, 4
        %v2410 = vshll.u32 %v2283, 16
        %v2412 = vrot.slane %v2410, 5
        %v2413 = vor.u32 %v2409, %v2412
        %v2414 = vrot.slane %v2413, 4
        %v2416 = vshll.u32 %v2307, 16
        %v2418 = vrot.slane %v2416, 5
        %v2419 = vsel %vm505, %v2414, %v2418
        %s2420 = scalar_lea.vmem [#allocation9], 64
        %v2421 = vld [vmem:[%s2420] sm:$0xf]
        %v2422 = vld [vmem:[%s2420 + $0x4] sm:$0xf]
        %v2423 = vld [vmem:[%s2420 + $0x8] sm:$0xf]
        %v2424 = vld [vmem:[%s2420 + $0xc] sm:$0xf]
        %v2425 = vld [vmem:[%s2420 + $0x10] sm:$0xf]
        %v2426 = vld [vmem:[%s2420 + $0x14] sm:$0xf]
        %v2427 = vld [vmem:[%s2420 + $0x18] sm:$0xf]
        %v2428 = vld [vmem:[%s2420 + $0x1c] sm:$0xf]
        %v2429 = vld [vmem:[%s2420 + $0x20] sm:$0xf]
        %v2430 = vld [vmem:[%s2420 + $0x24] sm:$0xf]
        %v2431 = vld [vmem:[%s2420 + $0x28] sm:$0xf]
        %v2432 = vld [vmem:[%s2420 + $0x2c] sm:$0xf]
        %v2433 = vld [vmem:[%s2420 + $0x30] sm:$0xf]
        %v2434 = vld [vmem:[%s2420 + $0x34] sm:$0xf]
        %v2435 = vld [vmem:[%s2420 + $0x38] sm:$0xf]
        %v2436 = vld [vmem:[%s2420 + $0x3c] sm:$0xf]
        %v2437 = vunpack.c.l.b16 %v2321
        %v2438 = vunpack.c.l.b16 %v2335
        %v2439 = vunpack.c.l.b16 %v2349
        %v2440 = vunpack.c.l.b16 %v2363
        %v2441 = vunpack.c.l.b16 %v2377
        %v2442 = vunpack.c.l.b16 %v2391
        %v2443 = vunpack.c.l.b16 %v2405
        %v2444 = vunpack.c.l.b16 %v2419
        %v2445 = vpack.c.b16 %v2438, %v2437
        %v2446 = vpack.c.b16 %v2440, %v2439
        %v2447 = vpack.c.b16 %v2442, %v2441
        %v2448 = vpack.c.b16 %v2444, %v2443
        %v2469 = vunpack.c.l.b16 %v2421
        %v2470 = vunpack.c.l.b16 %v2422
        %v2471 = vunpack.c.l.b16 %v2423
        %v2472 = vunpack.c.l.b16 %v2424
        %v2473 = vunpack.c.l.b16 %v2425
        %v2474 = vunpack.c.l.b16 %v2426
        %v2475 = vunpack.c.l.b16 %v2427
        %v2476 = vunpack.c.l.b16 %v2428
        %v2477 = vunpack.c.l.b16 %v2429
        %v2478 = vunpack.c.l.b16 %v2430
        %v2479 = vunpack.c.l.b16 %v2431
        %v2480 = vunpack.c.l.b16 %v2432
        %v2481 = vunpack.c.l.b16 %v2433
        %v2482 = vunpack.c.l.b16 %v2434
        %v2483 = vunpack.c.l.b16 %v2435
        %v2484 = vunpack.c.l.b16 %v2436
        %v2485 = vpack.c.b16 %v2470, %v2469
        %v2486 = vpack.c.b16 %v2472, %v2471
        %v2487 = vpack.c.b16 %v2474, %v2473
        %v2488 = vpack.c.b16 %v2476, %v2475
        %v2489 = vpack.c.b16 %v2478, %v2477
        %v2490 = vpack.c.b16 %v2480, %v2479
        %v2491 = vpack.c.b16 %v2482, %v2481
        %v2492 = vpack.c.b16 %v2484, %v2483
        %2501 = vmatprep.subr.bf16.mxu0 0
        %2502 = vmatpush1.bf16.msra.mxu0 %v2492
        %2503 = vmatprep.subr.bf16.mxu0 0
        %2504 = vmatpush1.bf16.msra.mxu0 %v2491
        %2505 = vmatprep.subr.bf16.mxu0 0
        %2506 = vmatpush1.bf16.msra.mxu0 %v2490
        %2507 = vmatprep.subr.bf16.mxu0 0
        %2508 = vmatpush1.bf16.msra.mxu0 %v2489
        %2509 = vmatprep.subr.bf16.mxu0 0
        %2510 = vmatpush1.bf16.msra.mxu0 %v2488
        %2511 = vmatprep.subr.bf16.mxu0 0
        %2512 = vmatpush1.bf16.msra.mxu0 %v2487
        %2513 = vmatprep.subr.bf16.mxu0 0
        %2514 = vmatpush1.bf16.msra.mxu0 %v2486
        %2515 = vmatprep.subr.bf16.mxu0 0
        %2516 = vmatpush1.bf16.msra.mxu0 %v2485
        %2517 = vmatprep.subr.bf16.mxu0 0
        %2518 = vmatpush2.bf16.msra.mxu0 0
        %2519 = vmatprep.subr.bf16.mxu0 0
        %2520 = vmatpush2.bf16.msra.mxu0 0
        %2521 = vmatprep.subr.bf16.mxu0 0
        %2522 = vmatpush2.bf16.msra.mxu0 0
        %2523 = vmatprep.subr.bf16.mxu0 0
        %2524 = vmatpush2.bf16.msra.mxu0 0
        %2525 = vmatprep.subr.bf16.mxu0 0
        %2526 = vmatpush2.bf16.msra.mxu0 0
        %2527 = vmatprep.subr.bf16.mxu0 0
        %2528 = vmatpush2.bf16.msra.mxu0 0
        %2529 = vmatprep.subr.bf16.mxu0 0
        %2530 = vmatpush2.bf16.msra.mxu0 0
        %2531 = vmatprep.subr.bf16.mxu0 0
        %2532 = vmatpush2.bf16.msra.mxu0 0
        %2533 = vmatprep.mubr.bf16.mxu0 0
        %2534 = vmatmul.mubr.bf16.gmra.mxu0 %v2445
        %v2535 = vpop.f32.mrf.mxu0
        %v2536 = vadd.f32 0.0, %v2535
        %v2537 = vpop.f32.mrf.mxu0
        %v2538 = vpop.f32.mrf.mxu0
        %v2539 = vadd.f32 0.0, %v2538
        %v2540 = vpop.f32.mrf.mxu0
        %2541 = vmatprep.mubr.bf16.mxu0 0
        %2542 = vmatmul.mubr.bf16.gmra.mxu0 %v2446
        %v2543 = vpop.f32.mrf.mxu0
        %v2544 = vadd.f32 0.0, %v2543
        %v2545 = vpop.f32.mrf.mxu0
        %v2546 = vpop.f32.mrf.mxu0
        %v2547 = vadd.f32 0.0, %v2546
        %v2548 = vpop.f32.mrf.mxu0
        %2549 = vmatprep.mubr.bf16.mxu0 0
        %2550 = vmatmul.mubr.bf16.gmra.mxu0 %v2447
        %v2551 = vpop.f32.mrf.mxu0
        %v2552 = vadd.f32 0.0, %v2551
        %v2553 = vpop.f32.mrf.mxu0
        %v2554 = vpop.f32.mrf.mxu0
        %v2555 = vadd.f32 0.0, %v2554
        %v2556 = vpop.f32.mrf.mxu0
        %2557 = vmatprep.mubr.bf16.mxu0 0
        %2558 = vmatmul.mubr.bf16.gmra.mxu0 %v2448
        %v2559 = vpop.f32.mrf.mxu0
        %v2560 = vadd.f32 0.0, %v2559
        %v2561 = vpop.f32.mrf.mxu0
        %v2562 = vpop.f32.mrf.mxu0
        %v2563 = vadd.f32 0.0, %v2562
        %v2564 = vpop.f32.mrf.mxu0
        %2565 = vdwg.mxu0
        %v2574 = vunpack.c.l.b16 %v2276
        %v2575 = vunpack.c.l.b16 %v2277
        %v2576 = vunpack.c.l.b16 %v2278
        %v2577 = vunpack.c.l.b16 %v2279
        %v2578 = vunpack.c.l.b16 %v2280
        %v2579 = vunpack.c.l.b16 %v2281
        %v2580 = vunpack.c.l.b16 %v2282
        %v2581 = vunpack.c.l.b16 %v2283
        %v2582 = vpack.c.b16 %v2575, %v2574
        %v2583 = vpack.c.b16 %v2577, %v2576
        %v2584 = vpack.c.b16 %v2579, %v2578
        %v2585 = vpack.c.b16 %v2581, %v2580
        %v2606 = vunpack.c.l.b16 %v2284
        %v2607 = vunpack.c.l.b16 %v2285
        %v2608 = vunpack.c.l.b16 %v2286
        %v2609 = vunpack.c.l.b16 %v2287
        %v2610 = vunpack.c.l.b16 %v2288
        %v2611 = vunpack.c.l.b16 %v2289
        %v2612 = vunpack.c.l.b16 %v2290
        %v2613 = vunpack.c.l.b16 %v2291
        %v2614 = vunpack.c.l.b16 %v2292
        %v2615 = vunpack.c.l.b16 %v2293
        %v2616 = vunpack.c.l.b16 %v2294
        %v2617 = vunpack.c.l.b16 %v2295
        %v2618 = vunpack.c.l.b16 %v2296
        %v2619 = vunpack.c.l.b16 %v2297
        %v2620 = vunpack.c.l.b16 %v2298
        %v2621 = vunpack.c.l.b16 %v2299
        %v2622 = vpack.c.b16 %v2607, %v2606
        %v2623 = vpack.c.b16 %v2609, %v2608
        %v2624 = vpack.c.b16 %v2611, %v2610
        %v2625 = vpack.c.b16 %v2613, %v2612
        %v2626 = vpack.c.b16 %v2615, %v2614
        %v2627 = vpack.c.b16 %v2617, %v2616
        %v2628 = vpack.c.b16 %v2619, %v2618
        %v2629 = vpack.c.b16 %v2621, %v2620
        %2638 = vmatprep.subr.bf16.mxu0 0
        %2639 = vmatpush1.bf16.msra.mxu0 %v2629
        %2640 = vmatprep.subr.bf16.mxu0 0
        %2641 = vmatpush1.bf16.msra.mxu0 %v2628
        %2642 = vmatprep.subr.bf16.mxu0 0
        %2643 = vmatpush1.bf16.msra.mxu0 %v2627
        %2644 = vmatprep.subr.bf16.mxu0 0
        %2645 = vmatpush1.bf16.msra.mxu0 %v2626
        %2646 = vmatprep.subr.bf16.mxu0 0
        %2647 = vmatpush1.bf16.msra.mxu0 %v2625
        %2648 = vmatprep.subr.bf16.mxu0 0
        %2649 = vmatpush1.bf16.msra.mxu0 %v2624
        %2650 = vmatprep.subr.bf16.mxu0 0
        %2651 = vmatpush1.bf16.msra.mxu0 %v2623
        %2652 = vmatprep.subr.bf16.mxu0 0
        %2653 = vmatpush1.bf16.msra.mxu0 %v2622
        %2654 = vmatprep.subr.bf16.mxu0 0
        %2655 = vmatpush2.bf16.msra.mxu0 0
        %2656 = vmatprep.subr.bf16.mxu0 0
        %2657 = vmatpush2.bf16.msra.mxu0 0
        %2658 = vmatprep.subr.bf16.mxu0 0
        %2659 = vmatpush2.bf16.msra.mxu0 0
        %2660 = vmatprep.subr.bf16.mxu0 0
        %2661 = vmatpush2.bf16.msra.mxu0 0
        %2662 = vmatprep.subr.bf16.mxu0 0
        %2663 = vmatpush2.bf16.msra.mxu0 0
        %2664 = vmatprep.subr.bf16.mxu0 0
        %2665 = vmatpush2.bf16.msra.mxu0 0
        %2666 = vmatprep.subr.bf16.mxu0 0
        %2667 = vmatpush2.bf16.msra.mxu0 0
        %2668 = vmatprep.subr.bf16.mxu0 0
        %2669 = vmatpush2.bf16.msra.mxu0 0
        %2670 = vmatprep.mubr.bf16.mxu0 0
        %2671 = vmatmul.mubr.bf16.gmra.mxu0 %v2582
        %v2672 = vpop.f32.mrf.mxu0
        %v2673 = vadd.f32 %v2536, %v2672
        %v2674 = vpop.f32.mrf.mxu0
        %v2675 = vpop.f32.mrf.mxu0
        %v2676 = vadd.f32 %v2539, %v2675
        %v2677 = vpop.f32.mrf.mxu0
        %2678 = vmatprep.mubr.bf16.mxu0 0
        %2679 = vmatmul.mubr.bf16.gmra.mxu0 %v2583
        %v2680 = vpop.f32.mrf.mxu0
        %v2681 = vadd.f32 %v2544, %v2680
        %v2682 = vpop.f32.mrf.mxu0
        %v2683 = vpop.f32.mrf.mxu0
        %v2684 = vadd.f32 %v2547, %v2683
        %v2685 = vpop.f32.mrf.mxu0
        %2686 = vmatprep.mubr.bf16.mxu0 0
        %2687 = vmatmul.mubr.bf16.gmra.mxu0 %v2584
        %v2688 = vpop.f32.mrf.mxu0
        %v2689 = vadd.f32 %v2552, %v2688
        %v2690 = vpop.f32.mrf.mxu0
        %v2691 = vpop.f32.mrf.mxu0
        %v2692 = vadd.f32 %v2555, %v2691
        %v2693 = vpop.f32.mrf.mxu0
        %2694 = vmatprep.mubr.bf16.mxu0 0
        %2695 = vmatmul.mubr.bf16.gmra.mxu0 %v2585
        %v2696 = vpop.f32.mrf.mxu0
        %v2697 = vadd.f32 %v2560, %v2696
        %v2698 = vpop.f32.mrf.mxu0
        %v2699 = vpop.f32.mrf.mxu0
        %v2700 = vadd.f32 %v2563, %v2699
        %v2701 = vpop.f32.mrf.mxu0
        %2702 = vdwg.mxu0
        %v2703 = vld [vmem:[#allocation3] sm:$0xe]
        %v2704 = vld [vmem:[#allocation3 + $0x8] sm:$0xe]
        %v2705 = vld [vmem:[#allocation3 + $0x10] sm:$0xe]
        %v2706 = vld [vmem:[#allocation3 + $0x18] sm:$0xe]
        %v2707 = vld [vmem:[#allocation3 + $0x20] sm:$0xe]
        %v2708 = vld [vmem:[#allocation3 + $0x28] sm:$0xe]
        %v2709 = vld [vmem:[#allocation3 + $0x30] sm:$0xe]
        %v2710 = vld [vmem:[#allocation3 + $0x38] sm:$0xe]
        %v2727 = vrot.slane %v2703, 5
        %v2728 = vrot.slane %v2727, 4
        %v2729 = vrot.slane %v2300, 5
        %v2730 = vsel %vm840, %v2728, %v2729
        %v2731 = vrot.slane %v2704, 5
        %v2732 = vrot.slane %v2731, 4
        %v2733 = vrot.slane %v2301, 5
        %v2734 = vsel %vm840, %v2732, %v2733
        %v2735 = vrot.slane %v2705, 5
        %v2736 = vrot.slane %v2735, 4
        %v2737 = vrot.slane %v2302, 5
        %v2738 = vsel %vm840, %v2736, %v2737
        %v2739 = vrot.slane %v2706, 5
        %v2740 = vrot.slane %v2739, 4
        %v2741 = vrot.slane %v2303, 5
        %v2742 = vsel %vm840, %v2740, %v2741
        %v2743 = vrot.slane %v2707, 5
        %v2744 = vrot.slane %v2743, 4
        %v2745 = vrot.slane %v2304, 5
        %v2746 = vsel %vm840, %v2744, %v2745
        %v2747 = vrot.slane %v2708, 5
        %v2748 = vrot.slane %v2747, 4
        %v2749 = vrot.slane %v2305, 5
        %v2750 = vsel %vm840, %v2748, %v2749
        %v2751 = vrot.slane %v2709, 5
        %v2752 = vrot.slane %v2751, 4
        %v2753 = vrot.slane %v2306, 5
        %v2754 = vsel %vm840, %v2752, %v2753
        %v2755 = vrot.slane %v2710, 5
        %v2756 = vrot.slane %v2755, 4
        %v2757 = vrot.slane %v2307, 5
        %v2758 = vsel %vm840, %v2756, %v2757
        %s2759 = scalar_lea.vmem [#allocation9], 128
        %v2760 = vld [vmem:[%s2759] sm:$0xf]
        %v2761 = vld [vmem:[%s2759 + $0x4] sm:$0xf]
        %v2762 = vld [vmem:[%s2759 + $0x8] sm:$0xf]
        %v2763 = vld [vmem:[%s2759 + $0xc] sm:$0xf]
        %v2764 = vld [vmem:[%s2759 + $0x10] sm:$0xf]
        %v2765 = vld [vmem:[%s2759 + $0x14] sm:$0xf]
        %v2766 = vld [vmem:[%s2759 + $0x18] sm:$0xf]
        %v2767 = vld [vmem:[%s2759 + $0x1c] sm:$0xf]
        %v2768 = vld [vmem:[%s2759 + $0x20] sm:$0xf]
        %v2769 = vld [vmem:[%s2759 + $0x24] sm:$0xf]
        %v2770 = vld [vmem:[%s2759 + $0x28] sm:$0xf]
        %v2771 = vld [vmem:[%s2759 + $0x2c] sm:$0xf]
        %v2772 = vld [vmem:[%s2759 + $0x30] sm:$0xf]
        %v2773 = vld [vmem:[%s2759 + $0x34] sm:$0xf]
        %v2774 = vld [vmem:[%s2759 + $0x38] sm:$0xf]
        %v2775 = vld [vmem:[%s2759 + $0x3c] sm:$0xf]
        %v2776 = vunpack.c.l.b16 %v2730
        %v2777 = vunpack.c.l.b16 %v2734
        %v2778 = vunpack.c.l.b16 %v2738
        %v2779 = vunpack.c.l.b16 %v2742
        %v2780 = vunpack.c.l.b16 %v2746
        %v2781 = vunpack.c.l.b16 %v2750
        %v2782 = vunpack.c.l.b16 %v2754
        %v2783 = vunpack.c.l.b16 %v2758
        %v2784 = vpack.c.b16 %v2777, %v2776
        %v2785 = vpack.c.b16 %v2779, %v2778
        %v2786 = vpack.c.b16 %v2781, %v2780
        %v2787 = vpack.c.b16 %v2783, %v2782
        %v2808 = vunpack.c.l.b16 %v2760
        %v2809 = vunpack.c.l.b16 %v2761
        %v2810 = vunpack.c.l.b16 %v2762
        %v2811 = vunpack.c.l.b16 %v2763
        %v2812 = vunpack.c.l.b16 %v2764
        %v2813 = vunpack.c.l.b16 %v2765
        %v2814 = vunpack.c.l.b16 %v2766
        %v2815 = vunpack.c.l.b16 %v2767
        %v2816 = vunpack.c.l.b16 %v2768
        %v2817 = vunpack.c.l.b16 %v2769
        %v2818 = vunpack.c.l.b16 %v2770
        %v2819 = vunpack.c.l.b16 %v2771
        %v2820 = vunpack.c.l.b16 %v2772
        %v2821 = vunpack.c.l.b16 %v2773
        %v2822 = vunpack.c.l.b16 %v2774
        %v2823 = vunpack.c.l.b16 %v2775
        %v2824 = vpack.c.b16 %v2809, %v2808
        %v2825 = vpack.c.b16 %v2811, %v2810
        %v2826 = vpack.c.b16 %v2813, %v2812
        %v2827 = vpack.c.b16 %v2815, %v2814
        %v2828 = vpack.c.b16 %v2817, %v2816
        %v2829 = vpack.c.b16 %v2819, %v2818
        %v2830 = vpack.c.b16 %v2821, %v2820
        %v2831 = vpack.c.b16 %v2823, %v2822
        %2840 = vmatprep.subr.bf16.mxu0 0
        %2841 = vmatpush1.bf16.msra.mxu0 %v2831
        %2842 = vmatprep.subr.bf16.mxu0 0
        %2843 = vmatpush1.bf16.msra.mxu0 %v2830
        %2844 = vmatprep.subr.bf16.mxu0 0
        %2845 = vmatpush1.bf16.msra.mxu0 %v2829
        %2846 = vmatprep.subr.bf16.mxu0 0
        %2847 = vmatpush1.bf16.msra.mxu0 %v2828
        %2848 = vmatprep.subr.bf16.mxu0 0
        %2849 = vmatpush1.bf16.msra.mxu0 %v2827
        %2850 = vmatprep.subr.bf16.mxu0 0
        %2851 = vmatpush1.bf16.msra.mxu0 %v2826
        %2852 = vmatprep.subr.bf16.mxu0 0
        %2853 = vmatpush1.bf16.msra.mxu0 %v2825
        %2854 = vmatprep.subr.bf16.mxu0 0
        %2855 = vmatpush1.bf16.msra.mxu0 %v2824
        %2856 = vmatprep.subr.bf16.mxu0 0
        %2857 = vmatpush2.bf16.msra.mxu0 0
        %2858 = vmatprep.subr.bf16.mxu0 0
        %2859 = vmatpush2.bf16.msra.mxu0 0
        %2860 = vmatprep.subr.bf16.mxu0 0
        %2861 = vmatpush2.bf16.msra.mxu0 0
        %2862 = vmatprep.subr.bf16.mxu0 0
        %2863 = vmatpush2.bf16.msra.mxu0 0
        %2864 = vmatprep.subr.bf16.mxu0 0
        %2865 = vmatpush2.bf16.msra.mxu0 0
        %2866 = vmatprep.subr.bf16.mxu0 0
        %2867 = vmatpush2.bf16.msra.mxu0 0
        %2868 = vmatprep.subr.bf16.mxu0 0
        %2869 = vmatpush2.bf16.msra.mxu0 0
        %2870 = vmatprep.subr.bf16.mxu0 0
        %2871 = vmatpush2.bf16.msra.mxu0 0
        %2872 = vmatprep.mubr.bf16.mxu0 0
        %2873 = vmatmul.mubr.bf16.gmra.mxu0 %v2784
        %v2874 = vpop.f32.mrf.mxu0
        %v2875 = vadd.f32 0.0, %v2874
        %v2876 = vpop.f32.mrf.mxu0
        %v2877 = vpop.f32.mrf.mxu0
        %v2878 = vadd.f32 0.0, %v2877
        %v2879 = vpop.f32.mrf.mxu0
        %2880 = vmatprep.mubr.bf16.mxu0 0
        %2881 = vmatmul.mubr.bf16.gmra.mxu0 %v2785
        %v2882 = vpop.f32.mrf.mxu0
        %v2883 = vadd.f32 0.0, %v2882
        %v2884 = vpop.f32.mrf.mxu0
        %v2885 = vpop.f32.mrf.mxu0
        %v2886 = vadd.f32 0.0, %v2885
        %v2887 = vpop.f32.mrf.mxu0
        %2888 = vmatprep.mubr.bf16.mxu0 0
        %2889 = vmatmul.mubr.bf16.gmra.mxu0 %v2786
        %v2890 = vpop.f32.mrf.mxu0
        %v2891 = vadd.f32 0.0, %v2890
        %v2892 = vpop.f32.mrf.mxu0
        %v2893 = vpop.f32.mrf.mxu0
        %v2894 = vadd.f32 0.0, %v2893
        %v2895 = vpop.f32.mrf.mxu0
        %2896 = vmatprep.mubr.bf16.mxu0 0
        %2897 = vmatmul.mubr.bf16.gmra.mxu0 %v2787
        %v2898 = vpop.f32.mrf.mxu0
        %v2899 = vadd.f32 0.0, %v2898
        %v2900 = vpop.f32.mrf.mxu0
        %v2901 = vpop.f32.mrf.mxu0
        %v2902 = vadd.f32 0.0, %v2901
        %v2903 = vpop.f32.mrf.mxu0
        %2904 = vdwg.mxu0
        %v2905 = vadd.f32 %v2673, %v2875
        %v2906 = vadd.f32 %v2676, %v2878
        %v2907 = vadd.f32 %v2681, %v2883
        %v2908 = vadd.f32 %v2684, %v2886
        %v2909 = vadd.f32 %v2689, %v2891
        %v2910 = vadd.f32 %v2692, %v2894
        %v2911 = vadd.f32 %v2697, %v2899
        %v2912 = vadd.f32 %v2700, %v2902
        %v2913 = vld [vmem:[%s2225] sm:$0xf]
        %v2914 = vld [vmem:[%s2225 + $0x8] sm:$0xf]
        %v2915 = vld [vmem:[%s2225 + $0x10] sm:$0xf]
        %v2916 = vld [vmem:[%s2225 + $0x18] sm:$0xf]
        %v2917 = vld [vmem:[%s2225 + $0x20] sm:$0xf]
        %v2918 = vld [vmem:[%s2225 + $0x28] sm:$0xf]
        %v2919 = vld [vmem:[%s2225 + $0x30] sm:$0xf]
        %v2920 = vld [vmem:[%s2225 + $0x38] sm:$0xf]
        %s2921 = scalar_lea.vmem [#allocation9], 192
        %v2922 = vld [vmem:[%s2921] sm:$0xf]
        %v2923 = vld [vmem:[%s2921 + $0x4] sm:$0xf]
        %v2924 = vld [vmem:[%s2921 + $0x8] sm:$0xf]
        %v2925 = vld [vmem:[%s2921 + $0xc] sm:$0xf]
        %v2926 = vld [vmem:[%s2921 + $0x10] sm:$0xf]
        %v2927 = vld [vmem:[%s2921 + $0x14] sm:$0xf]
        %v2928 = vld [vmem:[%s2921 + $0x18] sm:$0xf]
        %v2929 = vld [vmem:[%s2921 + $0x1c] sm:$0xf]
        %v2930 = vld [vmem:[%s2921 + $0x20] sm:$0xf]
        %v2931 = vld [vmem:[%s2921 + $0x24] sm:$0xf]
        %v2932 = vld [vmem:[%s2921 + $0x28] sm:$0xf]
        %v2933 = vld [vmem:[%s2921 + $0x2c] sm:$0xf]
        %v2934 = vld [vmem:[%s2921 + $0x30] sm:$0xf]
        %v2935 = vld [vmem:[%s2921 + $0x34] sm:$0xf]
        %v2936 = vld [vmem:[%s2921 + $0x38] sm:$0xf]
        %v2937 = vld [vmem:[%s2921 + $0x3c] sm:$0xf]
        %v2946 = vunpack.c.l.b16 %v2913
        %v2947 = vunpack.c.l.b16 %v2914
        %v2948 = vunpack.c.l.b16 %v2915
        %v2949 = vunpack.c.l.b16 %v2916
        %v2950 = vunpack.c.l.b16 %v2917
        %v2951 = vunpack.c.l.b16 %v2918
        %v2952 = vunpack.c.l.b16 %v2919
        %v2953 = vunpack.c.l.b16 %v2920
        %v2954 = vpack.c.b16 %v2947, %v2946
        %v2955 = vpack.c.b16 %v2949, %v2948
        %v2956 = vpack.c.b16 %v2951, %v2950
        %v2957 = vpack.c.b16 %v2953, %v2952
        %v2978 = vunpack.c.l.b16 %v2922
        %v2979 = vunpack.c.l.b16 %v2923
        %v2980 = vunpack.c.l.b16 %v2924
        %v2981 = vunpack.c.l.b16 %v2925
        %v2982 = vunpack.c.l.b16 %v2926
        %v2983 = vunpack.c.l.b16 %v2927
        %v2984 = vunpack.c.l.b16 %v2928
        %v2985 = vunpack.c.l.b16 %v2929
        %v2986 = vunpack.c.l.b16 %v2930
        %v2987 = vunpack.c.l.b16 %v2931
        %v2988 = vunpack.c.l.b16 %v2932
        %v2989 = vunpack.c.l.b16 %v2933
        %v2990 = vunpack.c.l.b16 %v2934
        %v2991 = vunpack.c.l.b16 %v2935
        %v2992 = vunpack.c.l.b16 %v2936
        %v2993 = vunpack.c.l.b16 %v2937
        %v2994 = vpack.c.b16 %v2979, %v2978
        %v2995 = vpack.c.b16 %v2981, %v2980
        %v2996 = vpack.c.b16 %v2983, %v2982
        %v2997 = vpack.c.b16 %v2985, %v2984
        %v2998 = vpack.c.b16 %v2987, %v2986
        %v2999 = vpack.c.b16 %v2989, %v2988
        %v3000 = vpack.c.b16 %v2991, %v2990
        %v3001 = vpack.c.b16 %v2993, %v2992
        %3010 = vmatprep.subr.bf16.mxu0 0
        %3011 = vmatpush1.bf16.msra.mxu0 %v3001
        %3012 = vmatprep.subr.bf16.mxu0 0
        %3013 = vmatpush1.bf16.msra.mxu0 %v3000
        %3014 = vmatprep.subr.bf16.mxu0 0
        %3015 = vmatpush1.bf16.msra.mxu0 %v2999
        %3016 = vmatprep.subr.bf16.mxu0 0
        %3017 = vmatpush1.bf16.msra.mxu0 %v2998
        %3018 = vmatprep.subr.bf16.mxu0 0
        %3019 = vmatpush1.bf16.msra.mxu0 %v2997
        %3020 = vmatprep.subr.bf16.mxu0 0
        %3021 = vmatpush1.bf16.msra.mxu0 %v2996
        %3022 = vmatprep.subr.bf16.mxu0 0
        %3023 = vmatpush1.bf16.msra.mxu0 %v2995
        %3024 = vmatprep.subr.bf16.mxu0 0
        %3025 = vmatpush1.bf16.msra.mxu0 %v2994
        %3026 = vmatprep.subr.bf16.mxu0 0
        %3027 = vmatpush2.bf16.msra.mxu0 0
        %3028 = vmatprep.subr.bf16.mxu0 0
        %3029 = vmatpush2.bf16.msra.mxu0 0
        %3030 = vmatprep.subr.bf16.mxu0 0
        %3031 = vmatpush2.bf16.msra.mxu0 0
        %3032 = vmatprep.subr.bf16.mxu0 0
        %3033 = vmatpush2.bf16.msra.mxu0 0
        %3034 = vmatprep.subr.bf16.mxu0 0
        %3035 = vmatpush2.bf16.msra.mxu0 0
        %3036 = vmatprep.subr.bf16.mxu0 0
        %3037 = vmatpush2.bf16.msra.mxu0 0
        %3038 = vmatprep.subr.bf16.mxu0 0
        %3039 = vmatpush2.bf16.msra.mxu0 0
        %3040 = vmatprep.subr.bf16.mxu0 0
        %3041 = vmatpush2.bf16.msra.mxu0 0
        %3042 = vmatprep.mubr.bf16.mxu0 0
        %3043 = vmatmul.mubr.bf16.gmra.mxu0 %v2954
        %v3044 = vpop.f32.mrf.mxu0
        %v3045 = vadd.f32 0.0, %v3044
        %v3046 = vpop.f32.mrf.mxu0
        %v3047 = vpop.f32.mrf.mxu0
        %v3048 = vadd.f32 0.0, %v3047
        %v3049 = vpop.f32.mrf.mxu0
        %3050 = vmatprep.mubr.bf16.mxu0 0
        %3051 = vmatmul.mubr.bf16.gmra.mxu0 %v2955
        %v3052 = vpop.f32.mrf.mxu0
        %v3053 = vadd.f32 0.0, %v3052
        %v3054 = vpop.f32.mrf.mxu0
        %v3055 = vpop.f32.mrf.mxu0
        %v3056 = vadd.f32 0.0, %v3055
        %v3057 = vpop.f32.mrf.mxu0
        %3058 = vmatprep.mubr.bf16.mxu0 0
        %3059 = vmatmul.mubr.bf16.gmra.mxu0 %v2956
        %v3060 = vpop.f32.mrf.mxu0
        %v3061 = vadd.f32 0.0, %v3060
        %v3062 = vpop.f32.mrf.mxu0
        %v3063 = vpop.f32.mrf.mxu0
        %v3064 = vadd.f32 0.0, %v3063
        %v3065 = vpop.f32.mrf.mxu0
        %3066 = vmatprep.mubr.bf16.mxu0 0
        %3067 = vmatmul.mubr.bf16.gmra.mxu0 %v2957
        %v3068 = vpop.f32.mrf.mxu0
        %v3069 = vadd.f32 0.0, %v3068
        %v3070 = vpop.f32.mrf.mxu0
        %v3071 = vpop.f32.mrf.mxu0
        %v3072 = vadd.f32 0.0, %v3071
        %v3073 = vpop.f32.mrf.mxu0
        %3074 = vdwg.mxu0
        %v3075 = vadd.f32 %v2905, %v3045
        %v3076 = vadd.f32 %v2906, %v3048
        %v3077 = vadd.f32 %v2907, %v3053
        %v3078 = vadd.f32 %v2908, %v3056
        %v3079 = vadd.f32 %v2909, %v3061
        %v3080 = vadd.f32 %v2910, %v3064
        %v3081 = vadd.f32 %v2911, %v3069
        %v3082 = vadd.f32 %v2912, %v3072
        %v3083 = vld [vmem:[%s2225] sm:$0xf]
        %v3084 = vld [vmem:[%s2225 + $0x4] sm:$0x1]
        %v3085 = vld [vmem:[%s2225 + $0x8] sm:$0xf]
        %v3086 = vld [vmem:[%s2225 + $0xc] sm:$0x1]
        %v3087 = vld [vmem:[%s2225 + $0x10] sm:$0xf]
        %v3088 = vld [vmem:[%s2225 + $0x14] sm:$0x1]
        %v3089 = vld [vmem:[%s2225 + $0x18] sm:$0xf]
        %v3090 = vld [vmem:[%s2225 + $0x1c] sm:$0x1]
        %v3091 = vld [vmem:[%s2225 + $0x20] sm:$0xf]
        %v3092 = vld [vmem:[%s2225 + $0x24] sm:$0x1]
        %v3093 = vld [vmem:[%s2225 + $0x28] sm:$0xf]
        %v3094 = vld [vmem:[%s2225 + $0x2c] sm:$0x1]
        %v3095 = vld [vmem:[%s2225 + $0x30] sm:$0xf]
        %v3096 = vld [vmem:[%s2225 + $0x34] sm:$0x1]
        %v3097 = vld [vmem:[%s2225 + $0x38] sm:$0xf]
        %v3098 = vld [vmem:[%s2225 + $0x3c] sm:$0x1]
        %v3100 = vshrl.u32 %v3083, 16
        %v3102 = vrot.slane %v3100, 4
        %v3103 = vshll.u32 %v3083, 16
        %v3105 = vrot.slane %v3103, 5
        %v3106 = vor.u32 %v3102, %v3105
        %v3107 = vrot.slane %v3106, 4
        %v3109 = vshll.u32 %v3084, 16
        %v3111 = vrot.slane %v3109, 5
        %v3112 = vsel %vm505, %v3107, %v3111
        %v3114 = vshrl.u32 %v3085, 16
        %v3116 = vrot.slane %v3114, 4
        %v3117 = vshll.u32 %v3085, 16
        %v3119 = vrot.slane %v3117, 5
        %v3120 = vor.u32 %v3116, %v3119
        %v3121 = vrot.slane %v3120, 4
        %v3123 = vshll.u32 %v3086, 16
        %v3125 = vrot.slane %v3123, 5
        %v3126 = vsel %vm505, %v3121, %v3125
        %v3128 = vshrl.u32 %v3087, 16
        %v3130 = vrot.slane %v3128, 4
        %v3131 = vshll.u32 %v3087, 16
        %v3133 = vrot.slane %v3131, 5
        %v3134 = vor.u32 %v3130, %v3133
        %v3135 = vrot.slane %v3134, 4
        %v3137 = vshll.u32 %v3088, 16
        %v3139 = vrot.slane %v3137, 5
        %v3140 = vsel %vm505, %v3135, %v3139
        %v3142 = vshrl.u32 %v3089, 16
        %v3144 = vrot.slane %v3142, 4
        %v3145 = vshll.u32 %v3089, 16
        %v3147 = vrot.slane %v3145, 5
        %v3148 = vor.u32 %v3144, %v3147
        %v3149 = vrot.slane %v3148, 4
        %v3151 = vshll.u32 %v3090, 16
        %v3153 = vrot.slane %v3151, 5
        %v3154 = vsel %vm505, %v3149, %v3153
        %v3156 = vshrl.u32 %v3091, 16
        %v3158 = vrot.slane %v3156, 4
        %v3159 = vshll.u32 %v3091, 16
        %v3161 = vrot.slane %v3159, 5
        %v3162 = vor.u32 %v3158, %v3161
        %v3163 = vrot.slane %v3162, 4
        %v3165 = vshll.u32 %v3092, 16
        %v3167 = vrot.slane %v3165, 5
        %v3168 = vsel %vm505, %v3163, %v3167
        %v3170 = vshrl.u32 %v3093, 16
        %v3172 = vrot.slane %v3170, 4
        %v3173 = vshll.u32 %v3093, 16
        %v3175 = vrot.slane %v3173, 5
        %v3176 = vor.u32 %v3172, %v3175
        %v3177 = vrot.slane %v3176, 4
        %v3179 = vshll.u32 %v3094, 16
        %v3181 = vrot.slane %v3179, 5
        %v3182 = vsel %vm505, %v3177, %v3181
        %v3184 = vshrl.u32 %v3095, 16
        %v3186 = vrot.slane %v3184, 4
        %v3187 = vshll.u32 %v3095, 16
        %v3189 = vrot.slane %v3187, 5
        %v3190 = vor.u32 %v3186, %v3189
        %v3191 = vrot.slane %v3190, 4
        %v3193 = vshll.u32 %v3096, 16
        %v3195 = vrot.slane %v3193, 5
        %v3196 = vsel %vm505, %v3191, %v3195
        %v3198 = vshrl.u32 %v3097, 16
        %v3200 = vrot.slane %v3198, 4
        %v3201 = vshll.u32 %v3097, 16
        %v3203 = vrot.slane %v3201, 5
        %v3204 = vor.u32 %v3200, %v3203
        %v3205 = vrot.slane %v3204, 4
        %v3207 = vshll.u32 %v3098, 16
        %v3209 = vrot.slane %v3207, 5
        %v3210 = vsel %vm505, %v3205, %v3209
        %s3211 = scalar_lea.vmem [#allocation9], 256
        %v3212 = vld [vmem:[%s3211] sm:$0xf]
        %v3213 = vld [vmem:[%s3211 + $0x4] sm:$0xf]
        %v3214 = vld [vmem:[%s3211 + $0x8] sm:$0xf]
        %v3215 = vld [vmem:[%s3211 + $0xc] sm:$0xf]
        %v3216 = vld [vmem:[%s3211 + $0x10] sm:$0xf]
        %v3217 = vld [vmem:[%s3211 + $0x14] sm:$0xf]
        %v3218 = vld [vmem:[%s3211 + $0x18] sm:$0xf]
        %v3219 = vld [vmem:[%s3211 + $0x1c] sm:$0xf]
        %v3220 = vld [vmem:[%s3211 + $0x20] sm:$0xf]
        %v3221 = vld [vmem:[%s3211 + $0x24] sm:$0xf]
        %v3222 = vld [vmem:[%s3211 + $0x28] sm:$0xf]
        %v3223 = vld [vmem:[%s3211 + $0x2c] sm:$0xf]
        %v3224 = vld [vmem:[%s3211 + $0x30] sm:$0xf]
        %v3225 = vld [vmem:[%s3211 + $0x34] sm:$0xf]
        %v3226 = vld [vmem:[%s3211 + $0x38] sm:$0xf]
        %v3227 = vld [vmem:[%s3211 + $0x3c] sm:$0xf]
        %v3228 = vunpack.c.l.b16 %v3112
        %v3229 = vunpack.c.l.b16 %v3126
        %v3230 = vunpack.c.l.b16 %v3140
        %v3231 = vunpack.c.l.b16 %v3154
        %v3232 = vunpack.c.l.b16 %v3168
        %v3233 = vunpack.c.l.b16 %v3182
        %v3234 = vunpack.c.l.b16 %v3196
        %v3235 = vunpack.c.l.b16 %v3210
        %v3236 = vpack.c.b16 %v3229, %v3228
        %v3237 = vpack.c.b16 %v3231, %v3230
        %v3238 = vpack.c.b16 %v3233, %v3232
        %v3239 = vpack.c.b16 %v3235, %v3234
        %v3260 = vunpack.c.l.b16 %v3212
        %v3261 = vunpack.c.l.b16 %v3213
        %v3262 = vunpack.c.l.b16 %v3214
        %v3263 = vunpack.c.l.b16 %v3215
        %v3264 = vunpack.c.l.b16 %v3216
        %v3265 = vunpack.c.l.b16 %v3217
        %v3266 = vunpack.c.l.b16 %v3218
        %v3267 = vunpack.c.l.b16 %v3219
        %v3268 = vunpack.c.l.b16 %v3220
        %v3269 = vunpack.c.l.b16 %v3221
        %v3270 = vunpack.c.l.b16 %v3222
        %v3271 = vunpack.c.l.b16 %v3223
        %v3272 = vunpack.c.l.b16 %v3224
        %v3273 = vunpack.c.l.b16 %v3225
        %v3274 = vunpack.c.l.b16 %v3226
        %v3275 = vunpack.c.l.b16 %v3227
        %v3276 = vpack.c.b16 %v3261, %v3260
        %v3277 = vpack.c.b16 %v3263, %v3262
        %v3278 = vpack.c.b16 %v3265, %v3264
        %v3279 = vpack.c.b16 %v3267, %v3266
        %v3280 = vpack.c.b16 %v3269, %v3268
        %v3281 = vpack.c.b16 %v3271, %v3270
        %v3282 = vpack.c.b16 %v3273, %v3272
        %v3283 = vpack.c.b16 %v3275, %v3274
        %3292 = vmatprep.subr.bf16.mxu0 0
        %3293 = vmatpush1.bf16.msra.mxu0 %v3283
        %3294 = vmatprep.subr.bf16.mxu0 0
        %3295 = vmatpush1.bf16.msra.mxu0 %v3282
        %3296 = vmatprep.subr.bf16.mxu0 0
        %3297 = vmatpush1.bf16.msra.mxu0 %v3281
        %3298 = vmatprep.subr.bf16.mxu0 0
        %3299 = vmatpush1.bf16.msra.mxu0 %v3280
        %3300 = vmatprep.subr.bf16.mxu0 0
        %3301 = vmatpush1.bf16.msra.mxu0 %v3279
        %3302 = vmatprep.subr.bf16.mxu0 0
        %3303 = vmatpush1.bf16.msra.mxu0 %v3278
        %3304 = vmatprep.subr.bf16.mxu0 0
        %3305 = vmatpush1.bf16.msra.mxu0 %v3277
        %3306 = vmatprep.subr.bf16.mxu0 0
        %3307 = vmatpush1.bf16.msra.mxu0 %v3276
        %3308 = vmatprep.subr.bf16.mxu0 0
        %3309 = vmatpush2.bf16.msra.mxu0 0
        %3310 = vmatprep.subr.bf16.mxu0 0
        %3311 = vmatpush2.bf16.msra.mxu0 0
        %3312 = vmatprep.subr.bf16.mxu0 0
        %3313 = vmatpush2.bf16.msra.mxu0 0
        %3314 = vmatprep.subr.bf16.mxu0 0
        %3315 = vmatpush2.bf16.msra.mxu0 0
        %3316 = vmatprep.subr.bf16.mxu0 0
        %3317 = vmatpush2.bf16.msra.mxu0 0
        %3318 = vmatprep.subr.bf16.mxu0 0
        %3319 = vmatpush2.bf16.msra.mxu0 0
        %3320 = vmatprep.subr.bf16.mxu0 0
        %3321 = vmatpush2.bf16.msra.mxu0 0
        %3322 = vmatprep.subr.bf16.mxu0 0
        %3323 = vmatpush2.bf16.msra.mxu0 0
        %3324 = vmatprep.mubr.bf16.mxu0 0
        %3325 = vmatmul.mubr.bf16.gmra.mxu0 %v3236
        %v3326 = vpop.f32.mrf.mxu0
        %v3327 = vadd.f32 0.0, %v3326
        %v3328 = vpop.f32.mrf.mxu0
        %v3329 = vpop.f32.mrf.mxu0
        %v3330 = vadd.f32 0.0, %v3329
        %v3331 = vpop.f32.mrf.mxu0
        %3332 = vmatprep.mubr.bf16.mxu0 0
        %3333 = vmatmul.mubr.bf16.gmra.mxu0 %v3237
        %v3334 = vpop.f32.mrf.mxu0
        %v3335 = vadd.f32 0.0, %v3334
        %v3336 = vpop.f32.mrf.mxu0
        %v3337 = vpop.f32.mrf.mxu0
        %v3338 = vadd.f32 0.0, %v3337
        %v3339 = vpop.f32.mrf.mxu0
        %3340 = vmatprep.mubr.bf16.mxu0 0
        %3341 = vmatmul.mubr.bf16.gmra.mxu0 %v3238
        %v3342 = vpop.f32.mrf.mxu0
        %v3343 = vadd.f32 0.0, %v3342
        %v3344 = vpop.f32.mrf.mxu0
        %v3345 = vpop.f32.mrf.mxu0
        %v3346 = vadd.f32 0.0, %v3345
        %v3347 = vpop.f32.mrf.mxu0
        %3348 = vmatprep.mubr.bf16.mxu0 0
        %3349 = vmatmul.mubr.bf16.gmra.mxu0 %v3239
        %v3350 = vpop.f32.mrf.mxu0
        %v3351 = vadd.f32 0.0, %v3350
        %v3352 = vpop.f32.mrf.mxu0
        %v3353 = vpop.f32.mrf.mxu0
        %v3354 = vadd.f32 0.0, %v3353
        %v3355 = vpop.f32.mrf.mxu0
        %3356 = vdwg.mxu0
        %v3357 = vadd.f32 %v3075, %v3327
        %v3358 = vadd.f32 %v3076, %v3330
        %v3359 = vadd.f32 %v3077, %v3335
        %v3360 = vadd.f32 %v3078, %v3338
        %v3361 = vadd.f32 %v3079, %v3343
        %v3362 = vadd.f32 %v3080, %v3346
        %v3363 = vadd.f32 %v3081, %v3351
        %v3364 = vadd.f32 %v3082, %v3354
        %v3365 = vld [vmem:[%s2225] sm:$0xe]
        %v3366 = vld [vmem:[%s2225 + $0x8] sm:$0xe]
        %v3367 = vld [vmem:[%s2225 + $0x10] sm:$0xe]
        %v3368 = vld [vmem:[%s2225 + $0x18] sm:$0xe]
        %v3369 = vld [vmem:[%s2225 + $0x20] sm:$0xe]
        %v3370 = vld [vmem:[%s2225 + $0x28] sm:$0xe]
        %v3371 = vld [vmem:[%s2225 + $0x30] sm:$0xe]
        %v3372 = vld [vmem:[%s2225 + $0x38] sm:$0xe]
        %v3389 = vrot.slane %v3365, 5
        %v3390 = vrot.slane %v3389, 4
        %v3391 = vrot.slane %v3084, 5
        %v3392 = vsel %vm840, %v3390, %v3391
        %v3393 = vrot.slane %v3366, 5
        %v3394 = vrot.slane %v3393, 4
        %v3395 = vrot.slane %v3086, 5
        %v3396 = vsel %vm840, %v3394, %v3395
        %v3397 = vrot.slane %v3367, 5
        %v3398 = vrot.slane %v3397, 4
        %v3399 = vrot.slane %v3088, 5
        %v3400 = vsel %vm840, %v3398, %v3399
        %v3401 = vrot.slane %v3368, 5
        %v3402 = vrot.slane %v3401, 4
        %v3403 = vrot.slane %v3090, 5
        %v3404 = vsel %vm840, %v3402, %v3403
        %v3405 = vrot.slane %v3369, 5
        %v3406 = vrot.slane %v3405, 4
        %v3407 = vrot.slane %v3092, 5
        %v3408 = vsel %vm840, %v3406, %v3407
        %v3409 = vrot.slane %v3370, 5
        %v3410 = vrot.slane %v3409, 4
        %v3411 = vrot.slane %v3094, 5
        %v3412 = vsel %vm840, %v3410, %v3411
        %v3413 = vrot.slane %v3371, 5
        %v3414 = vrot.slane %v3413, 4
        %v3415 = vrot.slane %v3096, 5
        %v3416 = vsel %vm840, %v3414, %v3415
        %v3417 = vrot.slane %v3372, 5
        %v3418 = vrot.slane %v3417, 4
        %v3419 = vrot.slane %v3098, 5
        %v3420 = vsel %vm840, %v3418, %v3419
        %s3421 = scalar_lea.vmem [#allocation9], 320
        %v3422 = vld [vmem:[%s3421] sm:$0xf]
        %v3423 = vld [vmem:[%s3421 + $0x4] sm:$0xf]
        %v3424 = vld [vmem:[%s3421 + $0x8] sm:$0xf]
        %v3425 = vld [vmem:[%s3421 + $0xc] sm:$0xf]
        %v3426 = vld [vmem:[%s3421 + $0x10] sm:$0xf]
        %v3427 = vld [vmem:[%s3421 + $0x14] sm:$0xf]
        %v3428 = vld [vmem:[%s3421 + $0x18] sm:$0xf]
        %v3429 = vld [vmem:[%s3421 + $0x1c] sm:$0xf]
        %v3430 = vld [vmem:[%s3421 + $0x20] sm:$0xf]
        %v3431 = vld [vmem:[%s3421 + $0x24] sm:$0xf]
        %v3432 = vld [vmem:[%s3421 + $0x28] sm:$0xf]
        %v3433 = vld [vmem:[%s3421 + $0x2c] sm:$0xf]
        %v3434 = vld [vmem:[%s3421 + $0x30] sm:$0xf]
        %v3435 = vld [vmem:[%s3421 + $0x34] sm:$0xf]
        %v3436 = vld [vmem:[%s3421 + $0x38] sm:$0xf]
        %v3437 = vld [vmem:[%s3421 + $0x3c] sm:$0xf]
        %v3438 = vunpack.c.l.b16 %v3392
        %v3439 = vunpack.c.l.b16 %v3396
        %v3440 = vunpack.c.l.b16 %v3400
        %v3441 = vunpack.c.l.b16 %v3404
        %v3442 = vunpack.c.l.b16 %v3408
        %v3443 = vunpack.c.l.b16 %v3412
        %v3444 = vunpack.c.l.b16 %v3416
        %v3445 = vunpack.c.l.b16 %v3420
        %v3446 = vpack.c.b16 %v3439, %v3438
        %v3447 = vpack.c.b16 %v3441, %v3440
        %v3448 = vpack.c.b16 %v3443, %v3442
        %v3449 = vpack.c.b16 %v3445, %v3444
        %v3470 = vunpack.c.l.b16 %v3422
        %v3471 = vunpack.c.l.b16 %v3423
        %v3472 = vunpack.c.l.b16 %v3424
        %v3473 = vunpack.c.l.b16 %v3425
        %v3474 = vunpack.c.l.b16 %v3426
        %v3475 = vunpack.c.l.b16 %v3427
        %v3476 = vunpack.c.l.b16 %v3428
        %v3477 = vunpack.c.l.b16 %v3429
        %v3478 = vunpack.c.l.b16 %v3430
        %v3479 = vunpack.c.l.b16 %v3431
        %v3480 = vunpack.c.l.b16 %v3432
        %v3481 = vunpack.c.l.b16 %v3433
        %v3482 = vunpack.c.l.b16 %v3434
        %v3483 = vunpack.c.l.b16 %v3435
        %v3484 = vunpack.c.l.b16 %v3436
        %v3485 = vunpack.c.l.b16 %v3437
        %v3486 = vpack.c.b16 %v3471, %v3470
        %v3487 = vpack.c.b16 %v3473, %v3472
        %v3488 = vpack.c.b16 %v3475, %v3474
        %v3489 = vpack.c.b16 %v3477, %v3476
        %v3490 = vpack.c.b16 %v3479, %v3478
        %v3491 = vpack.c.b16 %v3481, %v3480
        %v3492 = vpack.c.b16 %v3483, %v3482
        %v3493 = vpack.c.b16 %v3485, %v3484
        %3502 = vmatprep.subr.bf16.mxu0 0
        %3503 = vmatpush1.bf16.msra.mxu0 %v3493
        %3504 = vmatprep.subr.bf16.mxu0 0
        %3505 = vmatpush1.bf16.msra.mxu0 %v3492
        %3506 = vmatprep.subr.bf16.mxu0 0
        %3507 = vmatpush1.bf16.msra.mxu0 %v3491
        %3508 = vmatprep.subr.bf16.mxu0 0
        %3509 = vmatpush1.bf16.msra.mxu0 %v3490
        %3510 = vmatprep.subr.bf16.mxu0 0
        %3511 = vmatpush1.bf16.msra.mxu0 %v3489
        %3512 = vmatprep.subr.bf16.mxu0 0
        %3513 = vmatpush1.bf16.msra.mxu0 %v3488
        %3514 = vmatprep.subr.bf16.mxu0 0
        %3515 = vmatpush1.bf16.msra.mxu0 %v3487
        %3516 = vmatprep.subr.bf16.mxu0 0
        %3517 = vmatpush1.bf16.msra.mxu0 %v3486
        %3518 = vmatprep.subr.bf16.mxu0 0
        %3519 = vmatpush2.bf16.msra.mxu0 0
        %3520 = vmatprep.subr.bf16.mxu0 0
        %3521 = vmatpush2.bf16.msra.mxu0 0
        %3522 = vmatprep.subr.bf16.mxu0 0
        %3523 = vmatpush2.bf16.msra.mxu0 0
        %3524 = vmatprep.subr.bf16.mxu0 0
        %3525 = vmatpush2.bf16.msra.mxu0 0
        %3526 = vmatprep.subr.bf16.mxu0 0
        %3527 = vmatpush2.bf16.msra.mxu0 0
        %3528 = vmatprep.subr.bf16.mxu0 0
        %3529 = vmatpush2.bf16.msra.mxu0 0
        %3530 = vmatprep.subr.bf16.mxu0 0
        %3531 = vmatpush2.bf16.msra.mxu0 0
        %3532 = vmatprep.subr.bf16.mxu0 0
        %3533 = vmatpush2.bf16.msra.mxu0 0
        %3534 = vmatprep.mubr.bf16.mxu0 0
        %3535 = vmatmul.mubr.bf16.gmra.mxu0 %v3446
        %v3536 = vpop.f32.mrf.mxu0
        %v3537 = vadd.f32 0.0, %v3536
        %v3538 = vpop.f32.mrf.mxu0
        %v3539 = vpop.f32.mrf.mxu0
        %v3540 = vadd.f32 0.0, %v3539
        %v3541 = vpop.f32.mrf.mxu0
        %3542 = vmatprep.mubr.bf16.mxu0 0
        %3543 = vmatmul.mubr.bf16.gmra.mxu0 %v3447
        %v3544 = vpop.f32.mrf.mxu0
        %v3545 = vadd.f32 0.0, %v3544
        %v3546 = vpop.f32.mrf.mxu0
        %v3547 = vpop.f32.mrf.mxu0
        %v3548 = vadd.f32 0.0, %v3547
        %v3549 = vpop.f32.mrf.mxu0
        %3550 = vmatprep.mubr.bf16.mxu0 0
        %3551 = vmatmul.mubr.bf16.gmra.mxu0 %v3448
        %v3552 = vpop.f32.mrf.mxu0
        %v3553 = vadd.f32 0.0, %v3552
        %v3554 = vpop.f32.mrf.mxu0
        %v3555 = vpop.f32.mrf.mxu0
        %v3556 = vadd.f32 0.0, %v3555
        %v3557 = vpop.f32.mrf.mxu0
        %3558 = vmatprep.mubr.bf16.mxu0 0
        %3559 = vmatmul.mubr.bf16.gmra.mxu0 %v3449
        %v3560 = vpop.f32.mrf.mxu0
        %v3561 = vadd.f32 0.0, %v3560
        %v3562 = vpop.f32.mrf.mxu0
        %v3563 = vpop.f32.mrf.mxu0
        %v3564 = vadd.f32 0.0, %v3563
        %v3565 = vpop.f32.mrf.mxu0
        %3566 = vdwg.mxu0
        %v3567 = vadd.f32 %v3357, %v3537
        %v3568 = vadd.f32 %v3358, %v3540
        %v3569 = vadd.f32 %v3359, %v3545
        %v3570 = vadd.f32 %v3360, %v3548
        %v3571 = vadd.f32 %v3361, %v3553
        %v3572 = vadd.f32 %v3362, %v3556
        %v3573 = vadd.f32 %v3363, %v3561
        %v3574 = vadd.f32 %v3364, %v3564
        %s3575 = scalar_lea.vmem [#allocation3], 16
        %v3576 = vld [vmem:[%s3575] sm:$0xf]
        %v3577 = vld [vmem:[%s3575 + $0x8] sm:$0xf]
        %v3578 = vld [vmem:[%s3575 + $0x10] sm:$0xf]
        %v3579 = vld [vmem:[%s3575 + $0x18] sm:$0xf]
        %v3580 = vld [vmem:[%s3575 + $0x20] sm:$0xf]
        %v3581 = vld [vmem:[%s3575 + $0x28] sm:$0xf]
        %v3582 = vld [vmem:[%s3575 + $0x30] sm:$0xf]
        %v3583 = vld [vmem:[%s3575 + $0x38] sm:$0xf]
        %s3584 = scalar_lea.vmem [#allocation9], 384
        %v3585 = vld [vmem:[%s3584] sm:$0xf]
        %v3586 = vld [vmem:[%s3584 + $0x4] sm:$0xf]
        %v3587 = vld [vmem:[%s3584 + $0x8] sm:$0xf]
        %v3588 = vld [vmem:[%s3584 + $0xc] sm:$0xf]
        %v3589 = vld [vmem:[%s3584 + $0x10] sm:$0xf]
        %v3590 = vld [vmem:[%s3584 + $0x14] sm:$0xf]
        %v3591 = vld [vmem:[%s3584 + $0x18] sm:$0xf]
        %v3592 = vld [vmem:[%s3584 + $0x1c] sm:$0xf]
        %v3593 = vld [vmem:[%s3584 + $0x20] sm:$0xf]
        %v3594 = vld [vmem:[%s3584 + $0x24] sm:$0xf]
        %v3595 = vld [vmem:[%s3584 + $0x28] sm:$0xf]
        %v3596 = vld [vmem:[%s3584 + $0x2c] sm:$0xf]
        %v3597 = vld [vmem:[%s3584 + $0x30] sm:$0xf]
        %v3598 = vld [vmem:[%s3584 + $0x34] sm:$0xf]
        %v3599 = vld [vmem:[%s3584 + $0x38] sm:$0xf]
        %v3600 = vld [vmem:[%s3584 + $0x3c] sm:$0xf]
        %v3609 = vunpack.c.l.b16 %v3576
        %v3610 = vunpack.c.l.b16 %v3577
        %v3611 = vunpack.c.l.b16 %v3578
        %v3612 = vunpack.c.l.b16 %v3579
        %v3613 = vunpack.c.l.b16 %v3580
        %v3614 = vunpack.c.l.b16 %v3581
        %v3615 = vunpack.c.l.b16 %v3582
        %v3616 = vunpack.c.l.b16 %v3583
        %v3617 = vpack.c.b16 %v3610, %v3609
        %v3618 = vpack.c.b16 %v3612, %v3611
        %v3619 = vpack.c.b16 %v3614, %v3613
        %v3620 = vpack.c.b16 %v3616, %v3615
        %v3641 = vunpack.c.l.b16 %v3585
        %v3642 = vunpack.c.l.b16 %v3586
        %v3643 = vunpack.c.l.b16 %v3587
        %v3644 = vunpack.c.l.b16 %v3588
        %v3645 = vunpack.c.l.b16 %v3589
        %v3646 = vunpack.c.l.b16 %v3590
        %v3647 = vunpack.c.l.b16 %v3591
        %v3648 = vunpack.c.l.b16 %v3592
        %v3649 = vunpack.c.l.b16 %v3593
        %v3650 = vunpack.c.l.b16 %v3594
        %v3651 = vunpack.c.l.b16 %v3595
        %v3652 = vunpack.c.l.b16 %v3596
        %v3653 = vunpack.c.l.b16 %v3597
        %v3654 = vunpack.c.l.b16 %v3598
        %v3655 = vunpack.c.l.b16 %v3599
        %v3656 = vunpack.c.l.b16 %v3600
        %v3657 = vpack.c.b16 %v3642, %v3641
        %v3658 = vpack.c.b16 %v3644, %v3643
        %v3659 = vpack.c.b16 %v3646, %v3645
        %v3660 = vpack.c.b16 %v3648, %v3647
        %v3661 = vpack.c.b16 %v3650, %v3649
        %v3662 = vpack.c.b16 %v3652, %v3651
        %v3663 = vpack.c.b16 %v3654, %v3653
        %v3664 = vpack.c.b16 %v3656, %v3655
        %3673 = vmatprep.subr.bf16.mxu0 0
        %3674 = vmatpush1.bf16.msra.mxu0 %v3664
        %3675 = vmatprep.subr.bf16.mxu0 0
        %3676 = vmatpush1.bf16.msra.mxu0 %v3663
        %3677 = vmatprep.subr.bf16.mxu0 0
        %3678 = vmatpush1.bf16.msra.mxu0 %v3662
        %3679 = vmatprep.subr.bf16.mxu0 0
        %3680 = vmatpush1.bf16.msra.mxu0 %v3661
        %3681 = vmatprep.subr.bf16.mxu0 0
        %3682 = vmatpush1.bf16.msra.mxu0 %v3660
        %3683 = vmatprep.subr.bf16.mxu0 0
        %3684 = vmatpush1.bf16.msra.mxu0 %v3659
        %3685 = vmatprep.subr.bf16.mxu0 0
        %3686 = vmatpush1.bf16.msra.mxu0 %v3658
        %3687 = vmatprep.subr.bf16.mxu0 0
        %3688 = vmatpush1.bf16.msra.mxu0 %v3657
        %3689 = vmatprep.subr.bf16.mxu0 0
        %3690 = vmatpush2.bf16.msra.mxu0 0
        %3691 = vmatprep.subr.bf16.mxu0 0
        %3692 = vmatpush2.bf16.msra.mxu0 0
        %3693 = vmatprep.subr.bf16.mxu0 0
        %3694 = vmatpush2.bf16.msra.mxu0 0
        %3695 = vmatprep.subr.bf16.mxu0 0
        %3696 = vmatpush2.bf16.msra.mxu0 0
        %3697 = vmatprep.subr.bf16.mxu0 0
        %3698 = vmatpush2.bf16.msra.mxu0 0
        %3699 = vmatprep.subr.bf16.mxu0 0
        %3700 = vmatpush2.bf16.msra.mxu0 0
        %3701 = vmatprep.subr.bf16.mxu0 0
        %3702 = vmatpush2.bf16.msra.mxu0 0
        %3703 = vmatprep.subr.bf16.mxu0 0
        %3704 = vmatpush2.bf16.msra.mxu0 0
        %3705 = vmatprep.mubr.bf16.mxu0 0
        %3706 = vmatmul.mubr.bf16.gmra.mxu0 %v3617
        %v3707 = vpop.f32.mrf.mxu0
        %v3708 = vadd.f32 0.0, %v3707
        %v3709 = vpop.f32.mrf.mxu0
        %v3710 = vpop.f32.mrf.mxu0
        %v3711 = vadd.f32 0.0, %v3710
        %v3712 = vpop.f32.mrf.mxu0
        %3713 = vmatprep.mubr.bf16.mxu0 0
        %3714 = vmatmul.mubr.bf16.gmra.mxu0 %v3618
        %v3715 = vpop.f32.mrf.mxu0
        %v3716 = vadd.f32 0.0, %v3715
        %v3717 = vpop.f32.mrf.mxu0
        %v3718 = vpop.f32.mrf.mxu0
        %v3719 = vadd.f32 0.0, %v3718
        %v3720 = vpop.f32.mrf.mxu0
        %3721 = vmatprep.mubr.bf16.mxu0 0
        %3722 = vmatmul.mubr.bf16.gmra.mxu0 %v3619
        %v3723 = vpop.f32.mrf.mxu0
        %v3724 = vadd.f32 0.0, %v3723
        %v3725 = vpop.f32.mrf.mxu0
        %v3726 = vpop.f32.mrf.mxu0
        %v3727 = vadd.f32 0.0, %v3726
        %v3728 = vpop.f32.mrf.mxu0
        %3729 = vmatprep.mubr.bf16.mxu0 0
        %3730 = vmatmul.mubr.bf16.gmra.mxu0 %v3620
        %v3731 = vpop.f32.mrf.mxu0
        %v3732 = vadd.f32 0.0, %v3731
        %v3733 = vpop.f32.mrf.mxu0
        %v3734 = vpop.f32.mrf.mxu0
        %v3735 = vadd.f32 0.0, %v3734
        %v3736 = vpop.f32.mrf.mxu0
        %3737 = vdwg.mxu0
        %v3738 = vadd.f32 %v3567, %v3708
        %v3739 = vadd.f32 %v3568, %v3711
        %v3740 = vadd.f32 %v3569, %v3716
        %v3741 = vadd.f32 %v3570, %v3719
        %v3742 = vadd.f32 %v3571, %v3724
        %v3743 = vadd.f32 %v3572, %v3727
        %v3744 = vadd.f32 %v3573, %v3732
        %v3745 = vadd.f32 %v3574, %v3735
        %v3746 = vld [vmem:[%s3575] sm:$0xf]
        %v3747 = vld [vmem:[%s3575 + $0x4] sm:$0x1]
        %v3748 = vld [vmem:[%s3575 + $0x8] sm:$0xf]
        %v3749 = vld [vmem:[%s3575 + $0xc] sm:$0x1]
        %v3750 = vld [vmem:[%s3575 + $0x10] sm:$0xf]
        %v3751 = vld [vmem:[%s3575 + $0x14] sm:$0x1]
        %v3752 = vld [vmem:[%s3575 + $0x18] sm:$0xf]
        %v3753 = vld [vmem:[%s3575 + $0x1c] sm:$0x1]
        %v3754 = vld [vmem:[%s3575 + $0x20] sm:$0xf]
        %v3755 = vld [vmem:[%s3575 + $0x24] sm:$0x1]
        %v3756 = vld [vmem:[%s3575 + $0x28] sm:$0xf]
        %v3757 = vld [vmem:[%s3575 + $0x2c] sm:$0x1]
        %v3758 = vld [vmem:[%s3575 + $0x30] sm:$0xf]
        %v3759 = vld [vmem:[%s3575 + $0x34] sm:$0x1]
        %v3760 = vld [vmem:[%s3575 + $0x38] sm:$0xf]
        %v3761 = vld [vmem:[%s3575 + $0x3c] sm:$0x1]
        %v3763 = vshrl.u32 %v3746, 16
        %v3765 = vrot.slane %v3763, 4
        %v3766 = vshll.u32 %v3746, 16
        %v3768 = vrot.slane %v3766, 5
        %v3769 = vor.u32 %v3765, %v3768
        %v3770 = vrot.slane %v3769, 4
        %v3772 = vshll.u32 %v3747, 16
        %v3774 = vrot.slane %v3772, 5
        %v3775 = vsel %vm505, %v3770, %v3774
        %v3777 = vshrl.u32 %v3748, 16
        %v3779 = vrot.slane %v3777, 4
        %v3780 = vshll.u32 %v3748, 16
        %v3782 = vrot.slane %v3780, 5
        %v3783 = vor.u32 %v3779, %v3782
        %v3784 = vrot.slane %v3783, 4
        %v3786 = vshll.u32 %v3749, 16
        %v3788 = vrot.slane %v3786, 5
        %v3789 = vsel %vm505, %v3784, %v3788
        %v3791 = vshrl.u32 %v3750, 16
        %v3793 = vrot.slane %v3791, 4
        %v3794 = vshll.u32 %v3750, 16
        %v3796 = vrot.slane %v3794, 5
        %v3797 = vor.u32 %v3793, %v3796
        %v3798 = vrot.slane %v3797, 4
        %v3800 = vshll.u32 %v3751, 16
        %v3802 = vrot.slane %v3800, 5
        %v3803 = vsel %vm505, %v3798, %v3802
        %v3805 = vshrl.u32 %v3752, 16
        %v3807 = vrot.slane %v3805, 4
        %v3808 = vshll.u32 %v3752, 16
        %v3810 = vrot.slane %v3808, 5
        %v3811 = vor.u32 %v3807, %v3810
        %v3812 = vrot.slane %v3811, 4
        %v3814 = vshll.u32 %v3753, 16
        %v3816 = vrot.slane %v3814, 5
        %v3817 = vsel %vm505, %v3812, %v3816
        %v3819 = vshrl.u32 %v3754, 16
        %v3821 = vrot.slane %v3819, 4
        %v3822 = vshll.u32 %v3754, 16
        %v3824 = vrot.slane %v3822, 5
        %v3825 = vor.u32 %v3821, %v3824
        %v3826 = vrot.slane %v3825, 4
        %v3828 = vshll.u32 %v3755, 16
        %v3830 = vrot.slane %v3828, 5
        %v3831 = vsel %vm505, %v3826, %v3830
        %v3833 = vshrl.u32 %v3756, 16
        %v3835 = vrot.slane %v3833, 4
        %v3836 = vshll.u32 %v3756, 16
        %v3838 = vrot.slane %v3836, 5
        %v3839 = vor.u32 %v3835, %v3838
        %v3840 = vrot.slane %v3839, 4
        %v3842 = vshll.u32 %v3757, 16
        %v3844 = vrot.slane %v3842, 5
        %v3845 = vsel %vm505, %v3840, %v3844
        %v3847 = vshrl.u32 %v3758, 16
        %v3849 = vrot.slane %v3847, 4
        %v3850 = vshll.u32 %v3758, 16
        %v3852 = vrot.slane %v3850, 5
        %v3853 = vor.u32 %v3849, %v3852
        %v3854 = vrot.slane %v3853, 4
        %v3856 = vshll.u32 %v3759, 16
        %v3858 = vrot.slane %v3856, 5
        %v3859 = vsel %vm505, %v3854, %v3858
        %v3861 = vshrl.u32 %v3760, 16
        %v3863 = vrot.slane %v3861, 4
        %v3864 = vshll.u32 %v3760, 16
        %v3866 = vrot.slane %v3864, 5
        %v3867 = vor.u32 %v3863, %v3866
        %v3868 = vrot.slane %v3867, 4
        %v3870 = vshll.u32 %v3761, 16
        %v3872 = vrot.slane %v3870, 5
        %v3873 = vsel %vm505, %v3868, %v3872
        %s3874 = scalar_lea.vmem [#allocation9], 448
        %v3875 = vld [vmem:[%s3874] sm:$0xf]
        %v3876 = vld [vmem:[%s3874 + $0x4] sm:$0xf]
        %v3877 = vld [vmem:[%s3874 + $0x8] sm:$0xf]
        %v3878 = vld [vmem:[%s3874 + $0xc] sm:$0xf]
        %v3879 = vld [vmem:[%s3874 + $0x10] sm:$0xf]
        %v3880 = vld [vmem:[%s3874 + $0x14] sm:$0xf]
        %v3881 = vld [vmem:[%s3874 + $0x18] sm:$0xf]
        %v3882 = vld [vmem:[%s3874 + $0x1c] sm:$0xf]
        %v3883 = vld [vmem:[%s3874 + $0x20] sm:$0xf]
        %v3884 = vld [vmem:[%s3874 + $0x24] sm:$0xf]
        %v3885 = vld [vmem:[%s3874 + $0x28] sm:$0xf]
        %v3886 = vld [vmem:[%s3874 + $0x2c] sm:$0xf]
        %v3887 = vld [vmem:[%s3874 + $0x30] sm:$0xf]
        %v3888 = vld [vmem:[%s3874 + $0x34] sm:$0xf]
        %v3889 = vld [vmem:[%s3874 + $0x38] sm:$0xf]
        %v3890 = vld [vmem:[%s3874 + $0x3c] sm:$0xf]
        %v3891 = vunpack.c.l.b16 %v3775
        %v3892 = vunpack.c.l.b16 %v3789
        %v3893 = vunpack.c.l.b16 %v3803
        %v3894 = vunpack.c.l.b16 %v3817
        %v3895 = vunpack.c.l.b16 %v3831
        %v3896 = vunpack.c.l.b16 %v3845
        %v3897 = vunpack.c.l.b16 %v3859
        %v3898 = vunpack.c.l.b16 %v3873
        %v3899 = vpack.c.b16 %v3892, %v3891
        %v3900 = vpack.c.b16 %v3894, %v3893
        %v3901 = vpack.c.b16 %v3896, %v3895
        %v3902 = vpack.c.b16 %v3898, %v3897
        %v3923 = vunpack.c.l.b16 %v3875
        %v3924 = vunpack.c.l.b16 %v3876
        %v3925 = vunpack.c.l.b16 %v3877
        %v3926 = vunpack.c.l.b16 %v3878
        %v3927 = vunpack.c.l.b16 %v3879
        %v3928 = vunpack.c.l.b16 %v3880
        %v3929 = vunpack.c.l.b16 %v3881
        %v3930 = vunpack.c.l.b16 %v3882
        %v3931 = vunpack.c.l.b16 %v3883
        %v3932 = vunpack.c.l.b16 %v3884
        %v3933 = vunpack.c.l.b16 %v3885
        %v3934 = vunpack.c.l.b16 %v3886
        %v3935 = vunpack.c.l.b16 %v3887
        %v3936 = vunpack.c.l.b16 %v3888
        %v3937 = vunpack.c.l.b16 %v3889
        %v3938 = vunpack.c.l.b16 %v3890
        %v3939 = vpack.c.b16 %v3924, %v3923
        %v3940 = vpack.c.b16 %v3926, %v3925
        %v3941 = vpack.c.b16 %v3928, %v3927
        %v3942 = vpack.c.b16 %v3930, %v3929
        %v3943 = vpack.c.b16 %v3932, %v3931
        %v3944 = vpack.c.b16 %v3934, %v3933
        %v3945 = vpack.c.b16 %v3936, %v3935
        %v3946 = vpack.c.b16 %v3938, %v3937
        %3955 = vmatprep.subr.bf16.mxu0 0
        %3956 = vmatpush1.bf16.msra.mxu0 %v3946
        %3957 = vmatprep.subr.bf16.mxu0 0
        %3958 = vmatpush1.bf16.msra.mxu0 %v3945
        %3959 = vmatprep.subr.bf16.mxu0 0
        %3960 = vmatpush1.bf16.msra.mxu0 %v3944
        %3961 = vmatprep.subr.bf16.mxu0 0
        %3962 = vmatpush1.bf16.msra.mxu0 %v3943
        %3963 = vmatprep.subr.bf16.mxu0 0
        %3964 = vmatpush1.bf16.msra.mxu0 %v3942
        %3965 = vmatprep.subr.bf16.mxu0 0
        %3966 = vmatpush1.bf16.msra.mxu0 %v3941
        %3967 = vmatprep.subr.bf16.mxu0 0
        %3968 = vmatpush1.bf16.msra.mxu0 %v3940
        %3969 = vmatprep.subr.bf16.mxu0 0
        %3970 = vmatpush1.bf16.msra.mxu0 %v3939
        %3971 = vmatprep.subr.bf16.mxu0 0
        %3972 = vmatpush2.bf16.msra.mxu0 0
        %3973 = vmatprep.subr.bf16.mxu0 0
        %3974 = vmatpush2.bf16.msra.mxu0 0
        %3975 = vmatprep.subr.bf16.mxu0 0
        %3976 = vmatpush2.bf16.msra.mxu0 0
        %3977 = vmatprep.subr.bf16.mxu0 0
        %3978 = vmatpush2.bf16.msra.mxu0 0
        %3979 = vmatprep.subr.bf16.mxu0 0
        %3980 = vmatpush2.bf16.msra.mxu0 0
        %3981 = vmatprep.subr.bf16.mxu0 0
        %3982 = vmatpush2.bf16.msra.mxu0 0
        %3983 = vmatprep.subr.bf16.mxu0 0
        %3984 = vmatpush2.bf16.msra.mxu0 0
        %3985 = vmatprep.subr.bf16.mxu0 0
        %3986 = vmatpush2.bf16.msra.mxu0 0
        %3987 = vmatprep.mubr.bf16.mxu0 0
        %3988 = vmatmul.mubr.bf16.gmra.mxu0 %v3899
        %v3989 = vpop.f32.mrf.mxu0
        %v3990 = vadd.f32 0.0, %v3989
        %v3991 = vpop.f32.mrf.mxu0
        %v3992 = vpop.f32.mrf.mxu0
        %v3993 = vadd.f32 0.0, %v3992
        %v3994 = vpop.f32.mrf.mxu0
        %3995 = vmatprep.mubr.bf16.mxu0 0
        %3996 = vmatmul.mubr.bf16.gmra.mxu0 %v3900
        %v3997 = vpop.f32.mrf.mxu0
        %v3998 = vadd.f32 0.0, %v3997
        %v3999 = vpop.f32.mrf.mxu0
        %v4000 = vpop.f32.mrf.mxu0
        %v4001 = vadd.f32 0.0, %v4000
        %v4002 = vpop.f32.mrf.mxu0
        %4003 = vmatprep.mubr.bf16.mxu0 0
        %4004 = vmatmul.mubr.bf16.gmra.mxu0 %v3901
        %v4005 = vpop.f32.mrf.mxu0
        %v4006 = vadd.f32 0.0, %v4005
        %v4007 = vpop.f32.mrf.mxu0
        %v4008 = vpop.f32.mrf.mxu0
        %v4009 = vadd.f32 0.0, %v4008
        %v4010 = vpop.f32.mrf.mxu0
        %4011 = vmatprep.mubr.bf16.mxu0 0
        %4012 = vmatmul.mubr.bf16.gmra.mxu0 %v3902
        %v4013 = vpop.f32.mrf.mxu0
        %v4014 = vadd.f32 0.0, %v4013
        %v4015 = vpop.f32.mrf.mxu0
        %v4016 = vpop.f32.mrf.mxu0
        %v4017 = vadd.f32 0.0, %v4016
        %v4018 = vpop.f32.mrf.mxu0
        %4019 = vdwg.mxu0
        %v4020 = vadd.f32 %v3738, %v3990
        %v4021 = vadd.f32 %v3739, %v3993
        %v4022 = vadd.f32 %v3740, %v3998
        %v4023 = vadd.f32 %v3741, %v4001
        %v4024 = vadd.f32 %v3742, %v4006
        %v4025 = vadd.f32 %v3743, %v4009
        %v4026 = vadd.f32 %v3744, %v4014
        %v4027 = vadd.f32 %v3745, %v4017
        %v4028 = vld [vmem:[%s3575] sm:$0xe]
        %v4029 = vld [vmem:[%s3575 + $0x8] sm:$0xe]
        %v4030 = vld [vmem:[%s3575 + $0x10] sm:$0xe]
        %v4031 = vld [vmem:[%s3575 + $0x18] sm:$0xe]
        %v4032 = vld [vmem:[%s3575 + $0x20] sm:$0xe]
        %v4033 = vld [vmem:[%s3575 + $0x28] sm:$0xe]
        %v4034 = vld [vmem:[%s3575 + $0x30] sm:$0xe]
        %v4035 = vld [vmem:[%s3575 + $0x38] sm:$0xe]
        %v4052 = vrot.slane %v4028, 5
        %v4053 = vrot.slane %v4052, 4
        %v4054 = vrot.slane %v3747, 5
        %v4055 = vsel %vm840, %v4053, %v4054
        %v4056 = vrot.slane %v4029, 5
        %v4057 = vrot.slane %v4056, 4
        %v4058 = vrot.slane %v3749, 5
        %v4059 = vsel %vm840, %v4057, %v4058
        %v4060 = vrot.slane %v4030, 5
        %v4061 = vrot.slane %v4060, 4
        %v4062 = vrot.slane %v3751, 5
        %v4063 = vsel %vm840, %v4061, %v4062
        %v4064 = vrot.slane %v4031, 5
        %v4065 = vrot.slane %v4064, 4
        %v4066 = vrot.slane %v3753, 5
        %v4067 = vsel %vm840, %v4065, %v4066
        %v4068 = vrot.slane %v4032, 5
        %v4069 = vrot.slane %v4068, 4
        %v4070 = vrot.slane %v3755, 5
        %v4071 = vsel %vm840, %v4069, %v4070
        %v4072 = vrot.slane %v4033, 5
        %v4073 = vrot.slane %v4072, 4
        %v4074 = vrot.slane %v3757, 5
        %v4075 = vsel %vm840, %v4073, %v4074
        %v4076 = vrot.slane %v4034, 5
        %v4077 = vrot.slane %v4076, 4
        %v4078 = vrot.slane %v3759, 5
        %v4079 = vsel %vm840, %v4077, %v4078
        %v4080 = vrot.slane %v4035, 5
        %v4081 = vrot.slane %v4080, 4
        %v4082 = vrot.slane %v3761, 5
        %v4083 = vsel %vm840, %v4081, %v4082
        %s4084 = scalar_lea.vmem [#allocation9], 512
        %v4085 = vld [vmem:[%s4084] sm:$0xf]
        %v4086 = vld [vmem:[%s4084 + $0x4] sm:$0xf]
        %v4087 = vld [vmem:[%s4084 + $0x8] sm:$0xf]
        %v4088 = vld [vmem:[%s4084 + $0xc] sm:$0xf]
        %v4089 = vld [vmem:[%s4084 + $0x10] sm:$0xf]
        %v4090 = vld [vmem:[%s4084 + $0x14] sm:$0xf]
        %v4091 = vld [vmem:[%s4084 + $0x18] sm:$0xf]
        %v4092 = vld [vmem:[%s4084 + $0x1c] sm:$0xf]
        %v4093 = vld [vmem:[%s4084 + $0x20] sm:$0xf]
        %v4094 = vld [vmem:[%s4084 + $0x24] sm:$0xf]
        %v4095 = vld [vmem:[%s4084 + $0x28] sm:$0xf]
        %v4096 = vld [vmem:[%s4084 + $0x2c] sm:$0xf]
        %v4097 = vld [vmem:[%s4084 + $0x30] sm:$0xf]
        %v4098 = vld [vmem:[%s4084 + $0x34] sm:$0xf]
        %v4099 = vld [vmem:[%s4084 + $0x38] sm:$0xf]
        %v4100 = vld [vmem:[%s4084 + $0x3c] sm:$0xf]
        %v4101 = vunpack.c.l.b16 %v4055
        %v4102 = vunpack.c.l.b16 %v4059
        %v4103 = vunpack.c.l.b16 %v4063
        %v4104 = vunpack.c.l.b16 %v4067
        %v4105 = vunpack.c.l.b16 %v4071
        %v4106 = vunpack.c.l.b16 %v4075
        %v4107 = vunpack.c.l.b16 %v4079
        %v4108 = vunpack.c.l.b16 %v4083
        %v4109 = vpack.c.b16 %v4102, %v4101
        %v4110 = vpack.c.b16 %v4104, %v4103
        %v4111 = vpack.c.b16 %v4106, %v4105
        %v4112 = vpack.c.b16 %v4108, %v4107
        %v4133 = vunpack.c.l.b16 %v4085
        %v4134 = vunpack.c.l.b16 %v4086
        %v4135 = vunpack.c.l.b16 %v4087
        %v4136 = vunpack.c.l.b16 %v4088
        %v4137 = vunpack.c.l.b16 %v4089
        %v4138 = vunpack.c.l.b16 %v4090
        %v4139 = vunpack.c.l.b16 %v4091
        %v4140 = vunpack.c.l.b16 %v4092
        %v4141 = vunpack.c.l.b16 %v4093
        %v4142 = vunpack.c.l.b16 %v4094
        %v4143 = vunpack.c.l.b16 %v4095
        %v4144 = vunpack.c.l.b16 %v4096
        %v4145 = vunpack.c.l.b16 %v4097
        %v4146 = vunpack.c.l.b16 %v4098
        %v4147 = vunpack.c.l.b16 %v4099
        %v4148 = vunpack.c.l.b16 %v4100
        %v4149 = vpack.c.b16 %v4134, %v4133
        %v4150 = vpack.c.b16 %v4136, %v4135
        %v4151 = vpack.c.b16 %v4138, %v4137
        %v4152 = vpack.c.b16 %v4140, %v4139
        %v4153 = vpack.c.b16 %v4142, %v4141
        %v4154 = vpack.c.b16 %v4144, %v4143
        %v4155 = vpack.c.b16 %v4146, %v4145
        %v4156 = vpack.c.b16 %v4148, %v4147
        %4165 = vmatprep.subr.bf16.mxu0 0
        %4166 = vmatpush1.bf16.msra.mxu0 %v4156
        %4167 = vmatprep.subr.bf16.mxu0 0
        %4168 = vmatpush1.bf16.msra.mxu0 %v4155
        %4169 = vmatprep.subr.bf16.mxu0 0
        %4170 = vmatpush1.bf16.msra.mxu0 %v4154
        %4171 = vmatprep.subr.bf16.mxu0 0
        %4172 = vmatpush1.bf16.msra.mxu0 %v4153
        %4173 = vmatprep.subr.bf16.mxu0 0
        %4174 = vmatpush1.bf16.msra.mxu0 %v4152
        %4175 = vmatprep.subr.bf16.mxu0 0
        %4176 = vmatpush1.bf16.msra.mxu0 %v4151
        %4177 = vmatprep.subr.bf16.mxu0 0
        %4178 = vmatpush1.bf16.msra.mxu0 %v4150
        %4179 = vmatprep.subr.bf16.mxu0 0
        %4180 = vmatpush1.bf16.msra.mxu0 %v4149
        %4181 = vmatprep.subr.bf16.mxu0 0
        %4182 = vmatpush2.bf16.msra.mxu0 0
        %4183 = vmatprep.subr.bf16.mxu0 0
        %4184 = vmatpush2.bf16.msra.mxu0 0
        %4185 = vmatprep.subr.bf16.mxu0 0
        %4186 = vmatpush2.bf16.msra.mxu0 0
        %4187 = vmatprep.subr.bf16.mxu0 0
        %4188 = vmatpush2.bf16.msra.mxu0 0
        %4189 = vmatprep.subr.bf16.mxu0 0
        %4190 = vmatpush2.bf16.msra.mxu0 0
        %4191 = vmatprep.subr.bf16.mxu0 0
        %4192 = vmatpush2.bf16.msra.mxu0 0
        %4193 = vmatprep.subr.bf16.mxu0 0
        %4194 = vmatpush2.bf16.msra.mxu0 0
        %4195 = vmatprep.subr.bf16.mxu0 0
        %4196 = vmatpush2.bf16.msra.mxu0 0
        %4197 = vmatprep.mubr.bf16.mxu0 0
        %4198 = vmatmul.mubr.bf16.gmra.mxu0 %v4109
        %v4199 = vpop.f32.mrf.mxu0
        %v4200 = vadd.f32 0.0, %v4199
        %v4201 = vpop.f32.mrf.mxu0
        %v4202 = vpop.f32.mrf.mxu0
        %v4203 = vadd.f32 0.0, %v4202
        %v4204 = vpop.f32.mrf.mxu0
        %4205 = vmatprep.mubr.bf16.mxu0 0
        %4206 = vmatmul.mubr.bf16.gmra.mxu0 %v4110
        %v4207 = vpop.f32.mrf.mxu0
        %v4208 = vadd.f32 0.0, %v4207
        %v4209 = vpop.f32.mrf.mxu0
        %v4210 = vpop.f32.mrf.mxu0
        %v4211 = vadd.f32 0.0, %v4210
        %v4212 = vpop.f32.mrf.mxu0
        %4213 = vmatprep.mubr.bf16.mxu0 0
        %4214 = vmatmul.mubr.bf16.gmra.mxu0 %v4111
        %v4215 = vpop.f32.mrf.mxu0
        %v4216 = vadd.f32 0.0, %v4215
        %v4217 = vpop.f32.mrf.mxu0
        %v4218 = vpop.f32.mrf.mxu0
        %v4219 = vadd.f32 0.0, %v4218
        %v4220 = vpop.f32.mrf.mxu0
        %4221 = vmatprep.mubr.bf16.mxu0 0
        %4222 = vmatmul.mubr.bf16.gmra.mxu0 %v4112
        %v4223 = vpop.f32.mrf.mxu0
        %v4224 = vadd.f32 0.0, %v4223
        %v4225 = vpop.f32.mrf.mxu0
        %v4226 = vpop.f32.mrf.mxu0
        %v4227 = vadd.f32 0.0, %v4226
        %v4228 = vpop.f32.mrf.mxu0
        %4229 = vdwg.mxu0
        %v4230 = vadd.f32 %v4020, %v4200
        %v4231 = vadd.f32 %v4021, %v4203
        %v4232 = vadd.f32 %v4022, %v4208
        %v4233 = vadd.f32 %v4023, %v4211
        %v4234 = vadd.f32 %v4024, %v4216
        %v4235 = vadd.f32 %v4025, %v4219
        %v4236 = vadd.f32 %v4026, %v4224
        %v4237 = vadd.f32 %v4027, %v4227
        %v4238 = vadd.f32 %v4230, %v4231
        %v4239 = vadd.f32 %v4238, %v4232
        %v4240 = vadd.f32 %v4239, %v4233
        %v4241 = vadd.f32 %v4240, %v4234
        %v4242 = vadd.f32 %v4241, %v4235
        %v4243 = vadd.f32 %v4242, %v4236
        %v4244 = vadd.f32 %v4243, %v4237
        %v4245 = vrot.slane %v4244, 4
        %v4246 = vadd.f32 %v4244, %v4245
        %v4247 = vrot.slane %v4246, 2
        %v4248 = vadd.f32 %v4246, %v4247
        %v4249 = vrot.slane %v4248, 1
        %v4250 = vadd.f32 %v4248, %v4249
        %v4251 = vmul.f32 %v4230, %v4230
        %v4252 = vmul.f32 %v4231, %v4231
        %v4253 = vmul.f32 %v4232, %v4232
        %v4254 = vmul.f32 %v4233, %v4233
        %v4255 = vmul.f32 %v4234, %v4234
        %v4256 = vmul.f32 %v4235, %v4235
        %v4257 = vmul.f32 %v4236, %v4236
        %v4258 = vmul.f32 %v4237, %v4237
        %v4259 = vadd.f32 %v4251, %v4252
        %v4260 = vadd.f32 %v4259, %v4253
        %v4261 = vadd.f32 %v4260, %v4254
        %v4262 = vadd.f32 %v4261, %v4255
        %v4263 = vadd.f32 %v4262, %v4256
        %v4264 = vadd.f32 %v4263, %v4257
        %v4265 = vadd.f32 %v4264, %v4258
        %v4266 = vrot.slane %v4265, 4
        %v4267 = vadd.f32 %v4265, %v4266
        %v4268 = vrot.slane %v4267, 2
        %v4269 = vadd.f32 %v4267, %v4268
        %v4270 = vrot.slane %v4269, 1
        %v4271 = vadd.f32 %v4269, %v4270
        %v4272 = vmul.f32 %v4250, 0.015625
        %v4273 = vmul.f32 %v4271, 0.015625
        %v4274 = vmul.f32 %v4272, %v4272
        %v4275 = vsub.f32 %v4273, %v4274
        %v4276 = vmax.f32 %v4275, 0.0
        %v4277 = vadd.f32 %v4276, 1e-05
        %v4278 = vrsqrt.pop %v4277
        %v4279 = vsub.f32 %v4230, %v4272
        %v4280 = vsub.f32 %v4231, %v4272
        %v4281 = vsub.f32 %v4232, %v4272
        %v4282 = vsub.f32 %v4233, %v4272
        %v4283 = vsub.f32 %v4234, %v4272
        %v4284 = vsub.f32 %v4235, %v4272
        %v4285 = vsub.f32 %v4236, %v4272
        %v4286 = vsub.f32 %v4237, %v4272
        %v4287 = vmul.f32 %v4279, %v4278
        %v4288 = vmul.f32 %v4280, %v4278
        %v4289 = vmul.f32 %v4281, %v4278
        %v4290 = vmul.f32 %v4282, %v4278
        %v4291 = vmul.f32 %v4283, %v4278
        %v4292 = vmul.f32 %v4284, %v4278
        %v4293 = vmul.f32 %v4285, %v4278
        %v4294 = vmul.f32 %v4286, %v4278
        %v4295 = vmax.f32 %v4287, 0.0
        %v4296 = vmax.f32 %v4288, 0.0
        %v4297 = vmax.f32 %v4289, 0.0
        %v4298 = vmax.f32 %v4290, 0.0
        %v4299 = vmax.f32 %v4291, 0.0
        %v4300 = vmax.f32 %v4292, 0.0
        %v4301 = vmax.f32 %v4293, 0.0
        %v4302 = vmax.f32 %v4294, 0.0
        %4303 = vst [vmem:[%s217] sm:$0xff] %v4295
        %4304 = vst [vmem:[%s217 + $0x8] sm:$0xff] %v4296
        %4305 = vst [vmem:[%s217 + $0x10] sm:$0xff] %v4297
        %4306 = vst [vmem:[%s217 + $0x18] sm:$0xff] %v4298
        %4307 = vst [vmem:[%s217 + $0x20] sm:$0xff] %v4299
        %4308 = vst [vmem:[%s217 + $0x28] sm:$0xff] %v4300
        %4309 = vst [vmem:[%s217 + $0x30] sm:$0xff] %v4301
        %4310 = vst [vmem:[%s217 + $0x38] sm:$0xff] %v4302
        %s4311 = sand.u32 %s97, 1
        %s4312 = scalar_lea.sflag [#allocation6], %s4311
        %s4313 = sand.u32 %s97, 1
        %s4314 = smul.addr %s4313, 64
        %s4315 = scalar_lea.vmem [#allocation10], %s4314
        // Predicated region
        $region45: #{tpu_custom_call.1} parent=31 // pred_check
          %p4316 = pneg %p107
        $region46: #{tpu_custom_call.1} parent=31 // pred_check_branch
          %4318 = sbr.rel (%p4316) target = $region48
        $region47: #{tpu_custom_call.1} parent=31 // pred_region
          %s4320 = ssub.s32 1024, 1024
          %4321 = vsyncadd %s4312, %s4320
          %s4322 = smul.addr %s21, 8
          %s4323 = smul.addr %s4322, 128
          %s4324 = scalar_lea.hbm %s3, %s4323
          %s4325 = sshll.u32 %s4315, 4
          %s4326 = int_to_ptr.vmem [resolvable:$true] %s4325
          %4331 = dma.vmem_to_hbm [thread:$0]  %s4326, 1024, %s4324, %s4312, 128, 128, 8
        $region48: #{tpu_custom_call.1} parent=31 // pred_fallthru
          _
      $region32: #{tpu_custom_call.1} parent=5 // pred_fallthru
        _
      %p4332 = scmp.le.s32.totalorder 2, %s16
      // Predicated region
      $region49: #{tpu_custom_call.1} parent=5 // pred_check
        %p4333 = pneg %p4332
      $region50: #{tpu_custom_call.1} parent=5 // pred_check_branch
        %4335 = sbr.rel (%p4333) target = $region52
      $region51: #{tpu_custom_call.1} parent=5 // pred_region
        %s4336 = ssub.s32 %s16, 2
        // Predicated region
        $region53: #{tpu_custom_call.1} parent=51 // pred_check
          %p4337 = pneg %p113
        $region54: #{tpu_custom_call.1} parent=51 // pred_check_branch
          %4339 = sbr.rel (%p4337) target = $region56
        $region55: #{tpu_custom_call.1} parent=51 // pred_region
          %s4340 = sand.u32 %s98, 1
          %s4341 = scalar_lea.sflag [#allocation6], %s4340
          %s4342 = sand.u32 %s98, 1
          %s4343 = smul.addr %s4342, 64
          %s4344 = scalar_lea.vmem [#allocation10], %s4343
          %4345 = dma.done %s4341, 1024
        $region56: #{tpu_custom_call.1} parent=51 // pred_fallthru
          _
      $region52: #{tpu_custom_call.1} parent=5 // pred_fallthru
        _
    $region6: #{tpu_custom_call.1} parent=1 // loop_footer
      %s20 = sadd.s32 1, %s16
    $region7: #{tpu_custom_call.1} parent=1 // loop_footer_branch
      %15 = sbr.rel target = $region3
    $region8: #{tpu_custom_call.1} parent=1 // loop_exit
      _
    %4346 = vsyncpa [#allocation5], 1
    %s4347 = scalar_lea.sflag [#allocation5], 1
    %4348 = vsyncpa %s4347, 1
    %4349 = vsyncpa [#allocation8], 1
    %4350 = vsyncpa [#allocation6], 1
    %s4351 = scalar_lea.sflag [#allocation6], 1
    %4352 = vsyncpa %s4351, 1

</llo_original>
